<compile_context>
chip_gen: v6e
topology: v6e:2x2x1
jax: 0.10.0
libtpu: 0.0.40
codegen_flags: <defaults>
</compile_context>

<pallas_src>
import functools

import jax
import jax.numpy as jnp
from jax.experimental import pallas as pl
from jax.experimental.pallas import tpu as pltpu

_EPS = 1e-5
_INV_SQRT2 = 0.7071067811865476
_SQRT_2_OVER_PI = 0.7978845608028654


def _pick_bblk(bs, c, hw, itemsize=4):
    """Batch elements per grid step: keep block lane width a multiple of 128,
    grow toward ~512 KiB blocks, but keep >= 2 grid steps when possible (v7x)."""
    divs = [d for d in range(1, bs + 1) if bs % d == 0]
    valid = [d for d in divs if (d * c) % 128 == 0] or [bs]
    target = 512 * 1024
    pick = valid[0]
    for d in valid:
        if d > valid[0] and bs // d < 2:
            break  # keep both v7x TensorCores fed
        pick = d
        if hw * d * c * itemsize >= target:
            break
    return pick


def _make_kernel(H, W, BC, inv_n, approximate_gelu=False):
    def kernel(x_ref, gamma_ref, beta_ref, w_ref, member_ref, member_t_ref,
               o_ref, pad_ref, shift_ref, acc_ref):
        x = x_ref[...].astype(jnp.float32)                       # (H*W, BC)

        # ---- GroupNorm statistics (single f32 pass) ----
        # NOTE: E[x^2]-mean^2 variance; fine for activation-scale inputs.
        ch_sum = jnp.sum(x, axis=0, keepdims=True)               # (1, BC)
        ch_sq = jnp.sum(x * x, axis=0, keepdims=True)            # (1, BC)
        member = member_ref[...]                                 # (BC, BG)
        member_t = member_t_ref[...]                             # (BG, BC)
        g_sum = jnp.dot(ch_sum, member, preferred_element_type=jnp.float32)
        g_sq = jnp.dot(ch_sq, member, preferred_element_type=jnp.float32)
        mean = g_sum * inv_n                                     # (1, BG)
        var = g_sq * inv_n - mean * mean
        inv = jax.lax.rsqrt(var + _EPS)
        mean_c = jnp.dot(mean, member_t, preferred_element_type=jnp.float32)
        inv_c = jnp.dot(inv, member_t, preferred_element_type=jnp.float32)

        # ---- folded affine: y = x*scale + shift (2 VALU ops / element) ----
        scale = inv_c * gamma_ref[...]
        shift = beta_ref[...] - mean_c * scale
        y = x * scale + shift

        # ---- GELU ----
        if approximate_gelu:
            # tanh approximation routes the transcendental to the EUP (v6e/v7x).
            y = 0.5 * y * (1.0 + jnp.tanh(_SQRT_2_OVER_PI * (y + 0.044715 * y * y * y)))
        else:
            # exact erf GELU (matches torch.nn.functional.gelu default)
            y = 0.5 * y * (1.0 + jax.lax.erf(y * _INV_SQRT2))

        # ---- depthwise 5x5 conv, padding=2, no bias ----
        # Re-zero only the 4 halo columns each step (every scratch region is
        # fully rewritten per step -> megacore-safe, no cross-step state).
        pad_ref[:, 0:2, :] = jnp.zeros((H, 2, BC), jnp.float32)
        pad_ref[:, W + 2:W + 4, :] = jnp.zeros((H, 2, BC), jnp.float32)
        pad_ref[:, 2:2 + W, :] = y.reshape(H, W, BC)   # free reshape when W % 8 == 0

        # 5 column-shifted copies: sublane-unaligned reads happen 5x here; all
        # 25 taps below slice only untiled leading axes (free addressing).
        for kw in range(5):
            shift_ref[kw] = pad_ref[:, kw:kw + W, :]

        def row_sum(kh, lo, hi):
            base = 5 * kh
            s = shift_ref[0, lo:hi, :, :] * w_ref[base:base + 1, :]
            for kw in range(1, 5):
                s = s + shift_ref[kw, lo:hi, :, :] * w_ref[base + kw:base + kw + 1, :]
            return s

        # centre row (kh=2) covers all H output rows -> seeds acc (no zero-init
        # store); other kh rows update partial row ranges of the accumulator.
        acc_ref[...] = row_sum(2, 0, H)
        for kh in (0, 1, 3, 4):
            dh = kh - 2
            src_lo, src_hi = max(0, dh), H + min(0, dh)
            dst_lo, dst_hi = max(0, -dh), H + min(0, -dh)
            if src_hi > src_lo:
                acc_ref[dst_lo:dst_hi, :, :] = (
                    acc_ref[dst_lo:dst_hi, :, :] + row_sum(kh, src_lo, src_hi))

        # lane-dense full-tile output store
        o_ref[...] = acc_ref[...].reshape(H * W, BC).astype(o_ref.dtype)

    return kernel


@functools.partial(jax.jit, static_argnames=("size_2d", "gn_groups", "approximate_gelu"))
def gn_act_dwconv2d(x_seq, gamma, beta, w_dw, *, size_2d, gn_groups=32,
                    approximate_gelu=False):
    """x_seq: (h*w, bs, c); w_dw: (c, 1, 5, 5) depthwise conv weight (PyTorch layout)."""
    H, W = size_2d
    HW, BS, C = x_seq.shape
    assert HW == H * W, "size_2d inconsistent with x_seq"
    assert C % gn_groups == 0, "channels must be divisible by gn_groups"
    G = gn_groups
    Cg = C // G

    bblk = _pick_bblk(BS, C, HW)
    BC = bblk * C
    BG = bblk * G
    grid = (BS // bblk,)

    # Free view (no HBM transpose): merge (bs, c) into one trailing axis.
    x2 = x_seq.reshape(HW, BS * C)

    # Per-lane constants, tiled across the bblk batch elements of a block.
    gamma_t = jnp.tile(gamma.reshape(1, C).astype(jnp.float32), (1, bblk))
    beta_t = jnp.tile(beta.reshape(1, C).astype(jnp.float32), (1, bblk))
    # (c, 1, 5, 5) -> (25, c): w_k[kh*5+kw, ch] = w_dw[ch, 0, kh, kw]
    w_k = w_dw[:, 0].transpose(1, 2, 0).reshape(25, C).astype(jnp.float32)
    w_t = jnp.tile(w_k, (1, bblk))

    # One-hot channel->group membership, hoisted out of the kernel body.
    col_grp = jnp.arange(BC, dtype=jnp.int32) // Cg
    member = (col_grp[:, None] == jnp.arange(BG, dtype=jnp.int32)[None, :]
              ).astype(jnp.float32)                              # (BC, BG)
    member_t = member.T                                          # (BG, BC)

    inv_n = 1.0 / float(H * W * Cg)
    kernel = _make_kernel(H, W, BC, inv_n, approximate_gelu)

    out2 = pl.pallas_call(
        kernel,
        out_shape=jax.ShapeDtypeStruct((HW, BS * C), x_seq.dtype),
        grid_spec=pltpu.PrefetchScalarGridSpec(
            num_scalar_prefetch=0,
            grid=grid,
            in_specs=[
                pl.BlockSpec((HW, BC), lambda i: (0, i)),        # x column block
                pl.BlockSpec((1, BC), lambda i: (0, 0)),         # gamma (resident)
                pl.BlockSpec((1, BC), lambda i: (0, 0)),         # beta
                pl.BlockSpec((25, BC), lambda i: (0, 0)),        # conv taps
                pl.BlockSpec((BC, BG), lambda i: (0, 0)),        # group one-hot
                pl.BlockSpec((BG, BC), lambda i: (0, 0)),        # its transpose
            ],
            out_specs=pl.BlockSpec((HW, BC), lambda i: (0, i)),
            scratch_shapes=[
                pltpu.VMEM((H, W + 4, BC), jnp.float32),         # W-padded line buffer
                pltpu.VMEM((5, H, W, BC), jnp.float32),          # 5 column-shifted copies
                pltpu.VMEM((H, W, BC), jnp.float32),             # conv accumulator
            ],
        ),
        compiler_params=pltpu.CompilerParams(
            dimension_semantics=("parallel",),
            vmem_limit_bytes=32 * 1024 * 1024,
        ),
    )(x2, gamma_t, beta_t, w_t, member, member_t)

    # Free view back to (h*w, bs, c).
    return out2.reshape(HW, BS, C)


def _reference(x_seq, gamma, beta, w_dw, size_2d, gn_groups):
    """Pure-JAX replica of the PyTorch module (for correctness check)."""
    h, w = size_2d
    hw, bs, c = x_seq.shape
    xn = x_seq.reshape(h, w, bs, c).transpose(2, 3, 0, 1)          # (bs, c, h, w)
    xg = xn.reshape(bs, gn_groups, c // gn_groups, h, w)
    mean = xg.mean(axis=(2, 3, 4), keepdims=True)
    var = xg.var(axis=(2, 3, 4), keepdims=True)
    xg = (xg - mean) / jnp.sqrt(var + 1e-5)
    xn = xg.reshape(bs, c, h, w) * gamma[None, :, None, None] + beta[None, :, None, None]
    xn = jax.nn.gelu(xn, approximate=False)
    out = jax.lax.conv_general_dilated(
        xn, w_dw, window_strides=(1, 1), padding=[(2, 2), (2, 2)],
        dimension_numbers=("NCHW", "OIHW", "NCHW"), feature_group_count=c)
    return out.reshape(bs, c, h * w).transpose(2, 0, 1)


if __name__ == "__main__":
    # small shapes consistent with the module (indim divisible by gn_groups=32);
    # C=128 keeps every block lane-dense (multiple of 128 lanes).
    BS, C, H, W = 2, 128, 16, 16
    GN_GROUPS = 32

    key = jax.random.PRNGKey(0)
    kx, kdw, kg, kb = jax.random.split(key, 4)
    x_seq = jax.random.normal(kx, (H * W, BS, C), jnp.float32)      # (h*w, bs, c)
    w_dw = 0.1 * jax.random.normal(kdw, (C, 1, 5, 5), jnp.float32)  # depthwise weight
    gamma = 1.0 + 0.1 * jax.random.normal(kg, (C,), jnp.float32)
    beta = 0.1 * jax.random.normal(kb, (C,), jnp.float32)

    out = gn_act_dwconv2d(x_seq, gamma, beta, w_dw,
                          size_2d=(H, W), gn_groups=GN_GROUPS)
    out = jax.block_until_ready(out)

    ref = _reference(x_seq, gamma, beta, w_dw, (H, W), GN_GROUPS)
    assert out.shape == (H * W, BS, C)
    max_err = float(jnp.max(jnp.abs(out - ref)))
    assert jnp.allclose(out, ref, atol=1e-4, rtol=1e-4), max_err

    print("KERNEL_OK")
</pallas_src>

<mosaic_0001>
module attributes {stable_mosaic.version = 11 : i64} {
  func.func @kernel(%arg0: i32, %arg1: memref<256x128xf32, #tpu.memory_space<vmem>>, %arg2: memref<1x128xf32, #tpu.memory_space<vmem>>, %arg3: memref<1x128xf32, #tpu.memory_space<vmem>>, %arg4: memref<25x128xf32, #tpu.memory_space<vmem>>, %arg5: memref<128x32xf32, #tpu.memory_space<vmem>>, %arg6: memref<32x128xf32, #tpu.memory_space<vmem>>, %arg7: memref<256x128xf32, #tpu.memory_space<vmem>>, %arg8: memref<16x20x128xf32, #tpu.memory_space<vmem>>, %arg9: memref<5x16x16x128xf32, #tpu.memory_space<vmem>>, %arg10: memref<16x16x128xf32, #tpu.memory_space<vmem>>) attributes {dimension_semantics = [#tpu.dimension_semantics<parallel>], iteration_bounds = array<i64: 2>, scalar_prefetch = 0 : i64, scratch_operands = 3 : i64, tpu.core_type = #tpu.core_type<tc>, window_params = [{transform_indices = @transform_0, window_bounds = array<i64: 256, 128>}, {pipeline_mode = #tpu.pipeline_mode<synchronous>, transform_indices = @transform_1, window_bounds = array<i64: 1, 128>}, {pipeline_mode = #tpu.pipeline_mode<synchronous>, transform_indices = @transform_2, window_bounds = array<i64: 1, 128>}, {pipeline_mode = #tpu.pipeline_mode<synchronous>, transform_indices = @transform_3, window_bounds = array<i64: 25, 128>}, {pipeline_mode = #tpu.pipeline_mode<synchronous>, transform_indices = @transform_4, window_bounds = array<i64: 128, 32>}, {pipeline_mode = #tpu.pipeline_mode<synchronous>, transform_indices = @transform_5, window_bounds = array<i64: 32, 128>}, {transform_indices = @transform_6, window_bounds = array<i64: 256, 128>}]} {
    %c0 = arith.constant 0 : index
    %c0_0 = arith.constant 0 : index
    %0 = vector.load %arg1[%c0, %c0_0] : memref<256x128xf32, #tpu.memory_space<vmem>>, vector<256x128xf32>
    %cst = arith.constant dense<0.000000e+00> : vector<128xf32>
    %1 = vector.multi_reduction <add>, %0, %cst [0] : vector<256x128xf32> to vector<128xf32>
    %2 = vector.shape_cast %1 : vector<128xf32> to vector<1x128xf32>
    %3 = arith.mulf %0, %0 : vector<256x128xf32>
    %cst_1 = arith.constant dense<0.000000e+00> : vector<128xf32>
    %4 = vector.multi_reduction <add>, %3, %cst_1 [0] : vector<256x128xf32> to vector<128xf32>
    %5 = vector.shape_cast %4 : vector<128xf32> to vector<1x128xf32>
    %c0_2 = arith.constant 0 : index
    %c0_3 = arith.constant 0 : index
    %6 = vector.load %arg5[%c0_2, %c0_3] : memref<128x32xf32, #tpu.memory_space<vmem>>, vector<128x32xf32>
    %c0_4 = arith.constant 0 : index
    %c0_5 = arith.constant 0 : index
    %7 = vector.load %arg6[%c0_4, %c0_5] : memref<32x128xf32, #tpu.memory_space<vmem>>, vector<32x128xf32>
    %cst_6 = arith.constant dense<0.000000e+00> : vector<1x32xf32>
    %8 = tpu.matmul %2, %6, %cst_6 {dimension_numbers = #tpu.dot_dimension_numbers<[1], [0], [0], [1], [0, 0, 1, 1], [], []>} : vector<1x128xf32>, vector<128x32xf32>, vector<1x32xf32> -> vector<1x32xf32>
    %cst_7 = arith.constant dense<0.000000e+00> : vector<1x32xf32>
    %9 = tpu.matmul %5, %6, %cst_7 {dimension_numbers = #tpu.dot_dimension_numbers<[1], [0], [0], [1], [0, 0, 1, 1], [], []>} : vector<1x128xf32>, vector<128x32xf32>, vector<1x32xf32> -> vector<1x32xf32>
    %cst_8 = arith.constant 9.765625E-4 : f32
    %10 = vector.broadcast %cst_8 : f32 to vector<1x32xf32>
    %11 = arith.mulf %8, %10 : vector<1x32xf32>
    %cst_9 = arith.constant 9.765625E-4 : f32
    %12 = vector.broadcast %cst_9 : f32 to vector<1x32xf32>
    %13 = arith.mulf %9, %12 : vector<1x32xf32>
    %14 = arith.mulf %11, %11 : vector<1x32xf32>
    %15 = arith.subf %13, %14 : vector<1x32xf32>
    %cst_10 = arith.constant 9.99999974E-6 : f32
    %16 = vector.broadcast %cst_10 : f32 to vector<1x32xf32>
    %17 = arith.addf %15, %16 : vector<1x32xf32>
    %18 = math.rsqrt %17 : vector<1x32xf32>
    %cst_11 = arith.constant dense<0.000000e+00> : vector<1x128xf32>
    %19 = tpu.matmul %11, %7, %cst_11 {dimension_numbers = #tpu.dot_dimension_numbers<[1], [0], [0], [1], [0, 0, 1, 1], [], []>} : vector<1x32xf32>, vector<32x128xf32>, vector<1x128xf32> -> vector<1x128xf32>
    %cst_12 = arith.constant dense<0.000000e+00> : vector<1x128xf32>
    %20 = tpu.matmul %18, %7, %cst_12 {dimension_numbers = #tpu.dot_dimension_numbers<[1], [0], [0], [1], [0, 0, 1, 1], [], []>} : vector<1x32xf32>, vector<32x128xf32>, vector<1x128xf32> -> vector<1x128xf32>
    %c0_13 = arith.constant 0 : index
    %c0_14 = arith.constant 0 : index
    %21 = vector.load %arg2[%c0_13, %c0_14] : memref<1x128xf32, #tpu.memory_space<vmem>>, vector<1x128xf32>
    %22 = arith.mulf %20, %21 : vector<1x128xf32>
    %c0_15 = arith.constant 0 : index
    %c0_16 = arith.constant 0 : index
    %23 = vector.load %arg3[%c0_15, %c0_16] : memref<1x128xf32, #tpu.memory_space<vmem>>, vector<1x128xf32>
    %24 = arith.mulf %19, %22 : vector<1x128xf32>
    %25 = arith.subf %23, %24 : vector<1x128xf32>
    %26 = vector.broadcast %22 : vector<1x128xf32> to vector<256x128xf32>
    %27 = arith.mulf %0, %26 : vector<256x128xf32>
    %28 = vector.broadcast %25 : vector<1x128xf32> to vector<256x128xf32>
    %29 = arith.addf %27, %28 : vector<256x128xf32>
    %cst_17 = arith.constant 5.000000e-01 : f32
    %30 = vector.broadcast %cst_17 : f32 to vector<256x128xf32>
    %31 = arith.mulf %30, %29 : vector<256x128xf32>
    %cst_18 = arith.constant 0.707106769 : f32
    %32 = vector.broadcast %cst_18 : f32 to vector<256x128xf32>
    %33 = arith.mulf %29, %32 : vector<256x128xf32>
    %34 = math.erf %33 : vector<256x128xf32>
    %cst_19 = arith.constant 1.000000e+00 : f32
    %35 = vector.broadcast %cst_19 : f32 to vector<256x128xf32>
    %36 = arith.addf %35, %34 : vector<256x128xf32>
    %37 = arith.mulf %31, %36 : vector<256x128xf32>
    %cst_20 = arith.constant 0.000000e+00 : f32
    %38 = vector.broadcast %cst_20 : f32 to vector<16x2x128xf32>
    %c0_21 = arith.constant 0 : index
    %c0_22 = arith.constant 0 : index
    %c0_23 = arith.constant 0 : index
    %39 = vector.load %arg8[%c0_21, %c0_22, %c0_23] : memref<16x20x128xf32, #tpu.memory_space<vmem>>, vector<16x2x128xf32>
    tpu.vector_store %arg8[%c0_21, %c0_22, %c0_23], %38 {strides = array<i32>} : memref<16x20x128xf32, #tpu.memory_space<vmem>>, vector<16x2x128xf32>,
    %cst_24 = arith.constant 0.000000e+00 : f32
    %40 = vector.broadcast %cst_24 : f32 to vector<16x2x128xf32>
    %c0_25 = arith.constant 0 : index
    %c18 = arith.constant 18 : index
    %c0_26 = arith.constant 0 : index
    %41 = vector.load %arg8[%c0_25, %c18, %c0_26] : memref<16x20x128xf32, #tpu.memory_space<vmem>>, vector<16x2x128xf32>
    tpu.vector_store %arg8[%c0_25, %c18, %c0_26], %40 {strides = array<i32>} : memref<16x20x128xf32, #tpu.memory_space<vmem>>, vector<16x2x128xf32>,
    %42 = vector.shape_cast %37 : vector<256x128xf32> to vector<16x16x128xf32>
    %c0_27 = arith.constant 0 : index
    %c2 = arith.constant 2 : index
    %c0_28 = arith.constant 0 : index
    %43 = vector.load %arg8[%c0_27, %c2, %c0_28] : memref<16x20x128xf32, #tpu.memory_space<vmem>>, vector<16x16x128xf32>
    tpu.vector_store %arg8[%c0_27, %c2, %c0_28], %42 {strides = array<i32>} : memref<16x20x128xf32, #tpu.memory_space<vmem>>, vector<16x16x128xf32>,
    %c0_29 = arith.constant 0 : index
    %c0_30 = arith.constant 0 : index
    %c0_31 = arith.constant 0 : index
    %44 = vector.load %arg8[%c0_29, %c0_30, %c0_31] : memref<16x20x128xf32, #tpu.memory_space<vmem>>, vector<16x16x128xf32>
    %c0_32 = arith.constant 0 : index
    %c0_33 = arith.constant 0 : index
    %c0_34 = arith.constant 0 : index
    %c0_35 = arith.constant 0 : index
    %45 = vector.load %arg9[%c0_32, %c0_33, %c0_34, %c0_35] : memref<5x16x16x128xf32, #tpu.memory_space<vmem>>, vector<1x16x16x128xf32>
    %46 = vector.shape_cast %45 : vector<1x16x16x128xf32> to vector<16x16x128xf32>
    %47 = vector.shape_cast %44 : vector<16x16x128xf32> to vector<1x16x16x128xf32>
    tpu.vector_store %arg9[%c0_32, %c0_33, %c0_34, %c0_35], %47 {strides = array<i32>} : memref<5x16x16x128xf32, #tpu.memory_space<vmem>>, vector<1x16x16x128xf32>,
    %c0_36 = arith.constant 0 : index
    %c1 = arith.constant 1 : index
    %c0_37 = arith.constant 0 : index
    %48 = vector.load %arg8[%c0_36, %c1, %c0_37] : memref<16x20x128xf32, #tpu.memory_space<vmem>>, vector<16x16x128xf32>
    %c1_38 = arith.constant 1 : index
    %c0_39 = arith.constant 0 : index
    %c0_40 = arith.constant 0 : index
    %c0_41 = arith.constant 0 : index
    %49 = vector.load %arg9[%c1_38, %c0_39, %c0_40, %c0_41] : memref<5x16x16x128xf32, #tpu.memory_space<vmem>>, vector<1x16x16x128xf32>
    %50 = vector.shape_cast %49 : vector<1x16x16x128xf32> to vector<16x16x128xf32>
    %51 = vector.shape_cast %48 : vector<16x16x128xf32> to vector<1x16x16x128xf32>
    tpu.vector_store %arg9[%c1_38, %c0_39, %c0_40, %c0_41], %51 {strides = array<i32>} : memref<5x16x16x128xf32, #tpu.memory_space<vmem>>, vector<1x16x16x128xf32>,
    %c0_42 = arith.constant 0 : index
    %c2_43 = arith.constant 2 : index
    %c0_44 = arith.constant 0 : index
    %52 = vector.load %arg8[%c0_42, %c2_43, %c0_44] : memref<16x20x128xf32, #tpu.memory_space<vmem>>, vector<16x16x128xf32>
    %c2_45 = arith.constant 2 : index
    %c0_46 = arith.constant 0 : index
    %c0_47 = arith.constant 0 : index
    %c0_48 = arith.constant 0 : index
    %53 = vector.load %arg9[%c2_45, %c0_46, %c0_47, %c0_48] : memref<5x16x16x128xf32, #tpu.memory_space<vmem>>, vector<1x16x16x128xf32>
    %54 = vector.shape_cast %53 : vector<1x16x16x128xf32> to vector<16x16x128xf32>
    %55 = vector.shape_cast %52 : vector<16x16x128xf32> to vector<1x16x16x128xf32>
    tpu.vector_store %arg9[%c2_45, %c0_46, %c0_47, %c0_48], %55 {strides = array<i32>} : memref<5x16x16x128xf32, #tpu.memory_space<vmem>>, vector<1x16x16x128xf32>,
    %c0_49 = arith.constant 0 : index
    %c3 = arith.constant 3 : index
    %c0_50 = arith.constant 0 : index
    %56 = vector.load %arg8[%c0_49, %c3, %c0_50] : memref<16x20x128xf32, #tpu.memory_space<vmem>>, vector<16x16x128xf32>
    %c3_51 = arith.constant 3 : index
    %c0_52 = arith.constant 0 : index
    %c0_53 = arith.constant 0 : index
    %c0_54 = arith.constant 0 : index
    %57 = vector.load %arg9[%c3_51, %c0_52, %c0_53, %c0_54] : memref<5x16x16x128xf32, #tpu.memory_space<vmem>>, vector<1x16x16x128xf32>
    %58 = vector.shape_cast %57 : vector<1x16x16x128xf32> to vector<16x16x128xf32>
    %59 = vector.shape_cast %56 : vector<16x16x128xf32> to vector<1x16x16x128xf32>
    tpu.vector_store %arg9[%c3_51, %c0_52, %c0_53, %c0_54], %59 {strides = array<i32>} : memref<5x16x16x128xf32, #tpu.memory_space<vmem>>, vector<1x16x16x128xf32>,
    %c0_55 = arith.constant 0 : index
    %c4 = arith.constant 4 : index
    %c0_56 = arith.constant 0 : index
    %60 = vector.load %arg8[%c0_55, %c4, %c0_56] : memref<16x20x128xf32, #tpu.memory_space<vmem>>, vector<16x16x128xf32>
    %c4_57 = arith.constant 4 : index
    %c0_58 = arith.constant 0 : index
    %c0_59 = arith.constant 0 : index
    %c0_60 = arith.constant 0 : index
    %61 = vector.load %arg9[%c4_57, %c0_58, %c0_59, %c0_60] : memref<5x16x16x128xf32, #tpu.memory_space<vmem>>, vector<1x16x16x128xf32>
    %62 = vector.shape_cast %61 : vector<1x16x16x128xf32> to vector<16x16x128xf32>
    %63 = vector.shape_cast %60 : vector<16x16x128xf32> to vector<1x16x16x128xf32>
    tpu.vector_store %arg9[%c4_57, %c0_58, %c0_59, %c0_60], %63 {strides = array<i32>} : memref<5x16x16x128xf32, #tpu.memory_space<vmem>>, vector<1x16x16x128xf32>,
    %c0_61 = arith.constant 0 : index
    %c0_62 = arith.constant 0 : index
    %c0_63 = arith.constant 0 : index
    %c0_64 = arith.constant 0 : index
    %64 = vector.load %arg9[%c0_61, %c0_62, %c0_63, %c0_64] : memref<5x16x16x128xf32, #tpu.memory_space<vmem>>, vector<1x16x16x128xf32>
    %65 = vector.shape_cast %64 : vector<1x16x16x128xf32> to vector<16x16x128xf32>
    %c10 = arith.constant 10 : index
    %c0_65 = arith.constant 0 : index
    %66 = vector.load %arg4[%c10, %c0_65] : memref<25x128xf32, #tpu.memory_space<vmem>>, vector<1x128xf32>
    %67 = vector.shape_cast %66 : vector<1x128xf32> to vector<1x1x128xf32>
    %68 = vector.broadcast %67 : vector<1x1x128xf32> to vector<16x16x128xf32>
    %69 = arith.mulf %65, %68 : vector<16x16x128xf32>
    %c1_66 = arith.constant 1 : index
    %c0_67 = arith.constant 0 : index
    %c0_68 = arith.constant 0 : index
    %c0_69 = arith.constant 0 : index
    %70 = vector.load %arg9[%c1_66, %c0_67, %c0_68, %c0_69] : memref<5x16x16x128xf32, #tpu.memory_space<vmem>>, vector<1x16x16x128xf32>
    %71 = vector.shape_cast %70 : vector<1x16x16x128xf32> to vector<16x16x128xf32>
    %c11 = arith.constant 11 : index
    %c0_70 = arith.constant 0 : index
    %72 = vector.load %arg4[%c11, %c0_70] : memref<25x128xf32, #tpu.memory_space<vmem>>, vector<1x128xf32>
    %73 = vector.shape_cast %72 : vector<1x128xf32> to vector<1x1x128xf32>
    %74 = vector.broadcast %73 : vector<1x1x128xf32> to vector<16x16x128xf32>
    %75 = arith.mulf %71, %74 : vector<16x16x128xf32>
    %76 = arith.addf %69, %75 : vector<16x16x128xf32>
    %c2_71 = arith.constant 2 : index
    %c0_72 = arith.constant 0 : index
    %c0_73 = arith.constant 0 : index
    %c0_74 = arith.constant 0 : index
    %77 = vector.load %arg9[%c2_71, %c0_72, %c0_73, %c0_74] : memref<5x16x16x128xf32, #tpu.memory_space<vmem>>, vector<1x16x16x128xf32>
    %78 = vector.shape_cast %77 : vector<1x16x16x128xf32> to vector<16x16x128xf32>
    %c12 = arith.constant 12 : index
    %c0_75 = arith.constant 0 : index
    %79 = vector.load %arg4[%c12, %c0_75] : memref<25x128xf32, #tpu.memory_space<vmem>>, vector<1x128xf32>
    %80 = vector.shape_cast %79 : vector<1x128xf32> to vector<1x1x128xf32>
    %81 = vector.broadcast %80 : vector<1x1x128xf32> to vector<16x16x128xf32>
    %82 = arith.mulf %78, %81 : vector<16x16x128xf32>
    %83 = arith.addf %76, %82 : vector<16x16x128xf32>
    %c3_76 = arith.constant 3 : index
    %c0_77 = arith.constant 0 : index
    %c0_78 = arith.constant 0 : index
    %c0_79 = arith.constant 0 : index
    %84 = vector.load %arg9[%c3_76, %c0_77, %c0_78, %c0_79] : memref<5x16x16x128xf32, #tpu.memory_space<vmem>>, vector<1x16x16x128xf32>
    %85 = vector.shape_cast %84 : vector<1x16x16x128xf32> to vector<16x16x128xf32>
    %c13 = arith.constant 13 : index
    %c0_80 = arith.constant 0 : index
    %86 = vector.load %arg4[%c13, %c0_80] : memref<25x128xf32, #tpu.memory_space<vmem>>, vector<1x128xf32>
    %87 = vector.shape_cast %86 : vector<1x128xf32> to vector<1x1x128xf32>
    %88 = vector.broadcast %87 : vector<1x1x128xf32> to vector<16x16x128xf32>
    %89 = arith.mulf %85, %88 : vector<16x16x128xf32>
    %90 = arith.addf %83, %89 : vector<16x16x128xf32>
    %c4_81 = arith.constant 4 : index
    %c0_82 = arith.constant 0 : index
    %c0_83 = arith.constant 0 : index
    %c0_84 = arith.constant 0 : index
    %91 = vector.load %arg9[%c4_81, %c0_82, %c0_83, %c0_84] : memref<5x16x16x128xf32, #tpu.memory_space<vmem>>, vector<1x16x16x128xf32>
    %92 = vector.shape_cast %91 : vector<1x16x16x128xf32> to vector<16x16x128xf32>
    %c14 = arith.constant 14 : index
    %c0_85 = arith.constant 0 : index
    %93 = vector.load %arg4[%c14, %c0_85] : memref<25x128xf32, #tpu.memory_space<vmem>>, vector<1x128xf32>
    %94 = vector.shape_cast %93 : vector<1x128xf32> to vector<1x1x128xf32>
    %95 = vector.broadcast %94 : vector<1x1x128xf32> to vector<16x16x128xf32>
    %96 = arith.mulf %92, %95 : vector<16x16x128xf32>
    %97 = arith.addf %90, %96 : vector<16x16x128xf32>
    %c0_86 = arith.constant 0 : index
    %c0_87 = arith.constant 0 : index
    %c0_88 = arith.constant 0 : index
    %98 = vector.load %arg10[%c0_86, %c0_87, %c0_88] : memref<16x16x128xf32, #tpu.memory_space<vmem>>, vector<16x16x128xf32>
    tpu.vector_store %arg10[%c0_86, %c0_87, %c0_88], %97 {strides = array<i32>} : memref<16x16x128xf32, #tpu.memory_space<vmem>>, vector<16x16x128xf32>,
    %c2_89 = arith.constant 2 : index
    %c0_90 = arith.constant 0 : index
    %c0_91 = arith.constant 0 : index
    %99 = vector.load %arg10[%c2_89, %c0_90, %c0_91] : memref<16x16x128xf32, #tpu.memory_space<vmem>>, vector<14x16x128xf32>
    %c0_92 = arith.constant 0 : index
    %c0_93 = arith.constant 0 : index
    %c0_94 = arith.constant 0 : index
    %c0_95 = arith.constant 0 : index
    %100 = vector.load %arg9[%c0_92, %c0_93, %c0_94, %c0_95] : memref<5x16x16x128xf32, #tpu.memory_space<vmem>>, vector<1x14x16x128xf32>
    %101 = vector.shape_cast %100 : vector<1x14x16x128xf32> to vector<14x16x128xf32>
    %c0_96 = arith.constant 0 : index
    %c0_97 = arith.constant 0 : index
    %102 = vector.load %arg4[%c0_96, %c0_97] : memref<25x128xf32, #tpu.memory_space<vmem>>, vector<1x128xf32>
    %103 = vector.shape_cast %102 : vector<1x128xf32> to vector<1x1x128xf32>
    %104 = vector.broadcast %103 : vector<1x1x128xf32> to vector<14x16x128xf32>
    %105 = arith.mulf %101, %104 : vector<14x16x128xf32>
    %c1_98 = arith.constant 1 : index
    %c0_99 = arith.constant 0 : index
    %c0_100 = arith.constant 0 : index
    %c0_101 = arith.constant 0 : index
    %106 = vector.load %arg9[%c1_98, %c0_99, %c0_100, %c0_101] : memref<5x16x16x128xf32, #tpu.memory_space<vmem>>, vector<1x14x16x128xf32>
    %107 = vector.shape_cast %106 : vector<1x14x16x128xf32> to vector<14x16x128xf32>
    %c1_102 = arith.constant 1 : index
    %c0_103 = arith.constant 0 : index
    %108 = vector.load %arg4[%c1_102, %c0_103] : memref<25x128xf32, #tpu.memory_space<vmem>>, vector<1x128xf32>
    %109 = vector.shape_cast %108 : vector<1x128xf32> to vector<1x1x128xf32>
    %110 = vector.broadcast %109 : vector<1x1x128xf32> to vector<14x16x128xf32>
    %111 = arith.mulf %107, %110 : vector<14x16x128xf32>
    %112 = arith.addf %105, %111 : vector<14x16x128xf32>
    %c2_104 = arith.constant 2 : index
    %c0_105 = arith.constant 0 : index
    %c0_106 = arith.constant 0 : index
    %c0_107 = arith.constant 0 : index
    %113 = vector.load %arg9[%c2_104, %c0_105, %c0_106, %c0_107] : memref<5x16x16x128xf32, #tpu.memory_space<vmem>>, vector<1x14x16x128xf32>
    %114 = vector.shape_cast %113 : vector<1x14x16x128xf32> to vector<14x16x128xf32>
    %c2_108 = arith.constant 2 : index
    %c0_109 = arith.constant 0 : index
    %115 = vector.load %arg4[%c2_108, %c0_109] : memref<25x128xf32, #tpu.memory_space<vmem>>, vector<1x128xf32>
    %116 = vector.shape_cast %115 : vector<1x128xf32> to vector<1x1x128xf32>
    %117 = vector.broadcast %116 : vector<1x1x128xf32> to vector<14x16x128xf32>
    %118 = arith.mulf %114, %117 : vector<14x16x128xf32>
    %119 = arith.addf %112, %118 : vector<14x16x128xf32>
    %c3_110 = arith.constant 3 : index
    %c0_111 = arith.constant 0 : index
    %c0_112 = arith.constant 0 : index
    %c0_113 = arith.constant 0 : index
    %120 = vector.load %arg9[%c3_110, %c0_111, %c0_112, %c0_113] : memref<5x16x16x128xf32, #tpu.memory_space<vmem>>, vector<1x14x16x128xf32>
    %121 = vector.shape_cast %120 : vector<1x14x16x128xf32> to vector<14x16x128xf32>
    %c3_114 = arith.constant 3 : index
    %c0_115 = arith.constant 0 : index
    %122 = vector.load %arg4[%c3_114, %c0_115] : memref<25x128xf32, #tpu.memory_space<vmem>>, vector<1x128xf32>
    %123 = vector.shape_cast %122 : vector<1x128xf32> to vector<1x1x128xf32>
    %124 = vector.broadcast %123 : vector<1x1x128xf32> to vector<14x16x128xf32>
    %125 = arith.mulf %121, %124 : vector<14x16x128xf32>
    %126 = arith.addf %119, %125 : vector<14x16x128xf32>
    %c4_116 = arith.constant 4 : index
    %c0_117 = arith.constant 0 : index
    %c0_118 = arith.constant 0 : index
    %c0_119 = arith.constant 0 : index
    %127 = vector.load %arg9[%c4_116, %c0_117, %c0_118, %c0_119] : memref<5x16x16x128xf32, #tpu.memory_space<vmem>>, vector<1x14x16x128xf32>
    %128 = vector.shape_cast %127 : vector<1x14x16x128xf32> to vector<14x16x128xf32>
    %c4_120 = arith.constant 4 : index
    %c0_121 = arith.constant 0 : index
    %129 = vector.load %arg4[%c4_120, %c0_121] : memref<25x128xf32, #tpu.memory_space<vmem>>, vector<1x128xf32>
    %130 = vector.shape_cast %129 : vector<1x128xf32> to vector<1x1x128xf32>
    %131 = vector.broadcast %130 : vector<1x1x128xf32> to vector<14x16x128xf32>
    %132 = arith.mulf %128, %131 : vector<14x16x128xf32>
    %133 = arith.addf %126, %132 : vector<14x16x128xf32>
    %134 = arith.addf %99, %133 : vector<14x16x128xf32>
    %c2_122 = arith.constant 2 : index
    %c0_123 = arith.constant 0 : index
    %c0_124 = arith.constant 0 : index
    %135 = vector.load %arg10[%c2_122, %c0_123, %c0_124] : memref<16x16x128xf32, #tpu.memory_space<vmem>>, vector<14x16x128xf32>
    tpu.vector_store %arg10[%c2_122, %c0_123, %c0_124], %134 {strides = array<i32>} : memref<16x16x128xf32, #tpu.memory_space<vmem>>, vector<14x16x128xf32>,
    %c1_125 = arith.constant 1 : index
    %c0_126 = arith.constant 0 : index
    %c0_127 = arith.constant 0 : index
    %136 = vector.load %arg10[%c1_125, %c0_126, %c0_127] : memref<16x16x128xf32, #tpu.memory_space<vmem>>, vector<15x16x128xf32>
    %c0_128 = arith.constant 0 : index
    %c0_129 = arith.constant 0 : index
    %c0_130 = arith.constant 0 : index
    %c0_131 = arith.constant 0 : index
    %137 = vector.load %arg9[%c0_128, %c0_129, %c0_130, %c0_131] : memref<5x16x16x128xf32, #tpu.memory_space<vmem>>, vector<1x15x16x128xf32>
    %138 = vector.shape_cast %137 : vector<1x15x16x128xf32> to vector<15x16x128xf32>
    %c5 = arith.constant 5 : index
    %c0_132 = arith.constant 0 : index
    %139 = vector.load %arg4[%c5, %c0_132] : memref<25x128xf32, #tpu.memory_space<vmem>>, vector<1x128xf32>
    %140 = vector.shape_cast %139 : vector<1x128xf32> to vector<1x1x128xf32>
    %141 = vector.broadcast %140 : vector<1x1x128xf32> to vector<15x16x128xf32>
    %142 = arith.mulf %138, %141 : vector<15x16x128xf32>
    %c1_133 = arith.constant 1 : index
    %c0_134 = arith.constant 0 : index
    %c0_135 = arith.constant 0 : index
    %c0_136 = arith.constant 0 : index
    %143 = vector.load %arg9[%c1_133, %c0_134, %c0_135, %c0_136] : memref<5x16x16x128xf32, #tpu.memory_space<vmem>>, vector<1x15x16x128xf32>
    %144 = vector.shape_cast %143 : vector<1x15x16x128xf32> to vector<15x16x128xf32>
    %c6 = arith.constant 6 : index
    %c0_137 = arith.constant 0 : index
    %145 = vector.load %arg4[%c6, %c0_137] : memref<25x128xf32, #tpu.memory_space<vmem>>, vector<1x128xf32>
    %146 = vector.shape_cast %145 : vector<1x128xf32> to vector<1x1x128xf32>
    %147 = vector.broadcast %146 : vector<1x1x128xf32> to vector<15x16x128xf32>
    %148 = arith.mulf %144, %147 : vector<15x16x128xf32>
    %149 = arith.addf %142, %148 : vector<15x16x128xf32>
    %c2_138 = arith.constant 2 : index
    %c0_139 = arith.constant 0 : index
    %c0_140 = arith.constant 0 : index
    %c0_141 = arith.constant 0 : index
    %150 = vector.load %arg9[%c2_138, %c0_139, %c0_140, %c0_141] : memref<5x16x16x128xf32, #tpu.memory_space<vmem>>, vector<1x15x16x128xf32>
    %151 = vector.shape_cast %150 : vector<1x15x16x128xf32> to vector<15x16x128xf32>
    %c7 = arith.constant 7 : index
    %c0_142 = arith.constant 0 : index
    %152 = vector.load %arg4[%c7, %c0_142] : memref<25x128xf32, #tpu.memory_space<vmem>>, vector<1x128xf32>
    %153 = vector.shape_cast %152 : vector<1x128xf32> to vector<1x1x128xf32>
    %154 = vector.broadcast %153 : vector<1x1x128xf32> to vector<15x16x128xf32>
    %155 = arith.mulf %151, %154 : vector<15x16x128xf32>
    %156 = arith.addf %149, %155 : vector<15x16x128xf32>
    %c3_143 = arith.constant 3 : index
    %c0_144 = arith.constant 0 : index
    %c0_145 = arith.constant 0 : index
    %c0_146 = arith.constant 0 : index
    %157 = vector.load %arg9[%c3_143, %c0_144, %c0_145, %c0_146] : memref<5x16x16x128xf32, #tpu.memory_space<vmem>>, vector<1x15x16x128xf32>
    %158 = vector.shape_cast %157 : vector<1x15x16x128xf32> to vector<15x16x128xf32>
    %c8 = arith.constant 8 : index
    %c0_147 = arith.constant 0 : index
    %159 = vector.load %arg4[%c8, %c0_147] : memref<25x128xf32, #tpu.memory_space<vmem>>, vector<1x128xf32>
    %160 = vector.shape_cast %159 : vector<1x128xf32> to vector<1x1x128xf32>
    %161 = vector.broadcast %160 : vector<1x1x128xf32> to vector<15x16x128xf32>
    %162 = arith.mulf %158, %161 : vector<15x16x128xf32>
    %163 = arith.addf %156, %162 : vector<15x16x128xf32>
    %c4_148 = arith.constant 4 : index
    %c0_149 = arith.constant 0 : index
    %c0_150 = arith.constant 0 : index
    %c0_151 = arith.constant 0 : index
    %164 = vector.load %arg9[%c4_148, %c0_149, %c0_150, %c0_151] : memref<5x16x16x128xf32, #tpu.memory_space<vmem>>, vector<1x15x16x128xf32>
    %165 = vector.shape_cast %164 : vector<1x15x16x128xf32> to vector<15x16x128xf32>
    %c9 = arith.constant 9 : index
    %c0_152 = arith.constant 0 : index
    %166 = vector.load %arg4[%c9, %c0_152] : memref<25x128xf32, #tpu.memory_space<vmem>>, vector<1x128xf32>
    %167 = vector.shape_cast %166 : vector<1x128xf32> to vector<1x1x128xf32>
    %168 = vector.broadcast %167 : vector<1x1x128xf32> to vector<15x16x128xf32>
    %169 = arith.mulf %165, %168 : vector<15x16x128xf32>
    %170 = arith.addf %163, %169 : vector<15x16x128xf32>
    %171 = arith.addf %136, %170 : vector<15x16x128xf32>
    %c1_153 = arith.constant 1 : index
    %c0_154 = arith.constant 0 : index
    %c0_155 = arith.constant 0 : index
    %172 = vector.load %arg10[%c1_153, %c0_154, %c0_155] : memref<16x16x128xf32, #tpu.memory_space<vmem>>, vector<15x16x128xf32>
    tpu.vector_store %arg10[%c1_153, %c0_154, %c0_155], %171 {strides = array<i32>} : memref<16x16x128xf32, #tpu.memory_space<vmem>>, vector<15x16x128xf32>,
    %c0_156 = arith.constant 0 : index
    %c0_157 = arith.constant 0 : index
    %c0_158 = arith.constant 0 : index
    %173 = vector.load %arg10[%c0_156, %c0_157, %c0_158] : memref<16x16x128xf32, #tpu.memory_space<vmem>>, vector<15x16x128xf32>
    %c0_159 = arith.constant 0 : index
    %c1_160 = arith.constant 1 : index
    %c0_161 = arith.constant 0 : index
    %c0_162 = arith.constant 0 : index
    %174 = vector.load %arg9[%c0_159, %c1_160, %c0_161, %c0_162] : memref<5x16x16x128xf32, #tpu.memory_space<vmem>>, vector<1x15x16x128xf32>
    %175 = vector.shape_cast %174 : vector<1x15x16x128xf32> to vector<15x16x128xf32>
    %c15 = arith.constant 15 : index
    %c0_163 = arith.constant 0 : index
    %176 = vector.load %arg4[%c15, %c0_163] : memref<25x128xf32, #tpu.memory_space<vmem>>, vector<1x128xf32>
    %177 = vector.shape_cast %176 : vector<1x128xf32> to vector<1x1x128xf32>
    %178 = vector.broadcast %177 : vector<1x1x128xf32> to vector<15x16x128xf32>
    %179 = arith.mulf %175, %178 : vector<15x16x128xf32>
    %c1_164 = arith.constant 1 : index
    %c1_165 = arith.constant 1 : index
    %c0_166 = arith.constant 0 : index
    %c0_167 = arith.constant 0 : index
    %180 = vector.load %arg9[%c1_164, %c1_165, %c0_166, %c0_167] : memref<5x16x16x128xf32, #tpu.memory_space<vmem>>, vector<1x15x16x128xf32>
    %181 = vector.shape_cast %180 : vector<1x15x16x128xf32> to vector<15x16x128xf32>
    %c16 = arith.constant 16 : index
    %c0_168 = arith.constant 0 : index
    %182 = vector.load %arg4[%c16, %c0_168] : memref<25x128xf32, #tpu.memory_space<vmem>>, vector<1x128xf32>
    %183 = vector.shape_cast %182 : vector<1x128xf32> to vector<1x1x128xf32>
    %184 = vector.broadcast %183 : vector<1x1x128xf32> to vector<15x16x128xf32>
    %185 = arith.mulf %181, %184 : vector<15x16x128xf32>
    %186 = arith.addf %179, %185 : vector<15x16x128xf32>
    %c2_169 = arith.constant 2 : index
    %c1_170 = arith.constant 1 : index
    %c0_171 = arith.constant 0 : index
    %c0_172 = arith.constant 0 : index
    %187 = vector.load %arg9[%c2_169, %c1_170, %c0_171, %c0_172] : memref<5x16x16x128xf32, #tpu.memory_space<vmem>>, vector<1x15x16x128xf32>
    %188 = vector.shape_cast %187 : vector<1x15x16x128xf32> to vector<15x16x128xf32>
    %c17 = arith.constant 17 : index
    %c0_173 = arith.constant 0 : index
    %189 = vector.load %arg4[%c17, %c0_173] : memref<25x128xf32, #tpu.memory_space<vmem>>, vector<1x128xf32>
    %190 = vector.shape_cast %189 : vector<1x128xf32> to vector<1x1x128xf32>
    %191 = vector.broadcast %190 : vector<1x1x128xf32> to vector<15x16x128xf32>
    %192 = arith.mulf %188, %191 : vector<15x16x128xf32>
    %193 = arith.addf %186, %192 : vector<15x16x128xf32>
    %c3_174 = arith.constant 3 : index
    %c1_175 = arith.constant 1 : index
    %c0_176 = arith.constant 0 : index
    %c0_177 = arith.constant 0 : index
    %194 = vector.load %arg9[%c3_174, %c1_175, %c0_176, %c0_177] : memref<5x16x16x128xf32, #tpu.memory_space<vmem>>, vector<1x15x16x128xf32>
    %195 = vector.shape_cast %194 : vector<1x15x16x128xf32> to vector<15x16x128xf32>
    %c18_178 = arith.constant 18 : index
    %c0_179 = arith.constant 0 : index
    %196 = vector.load %arg4[%c18_178, %c0_179] : memref<25x128xf32, #tpu.memory_space<vmem>>, vector<1x128xf32>
    %197 = vector.shape_cast %196 : vector<1x128xf32> to vector<1x1x128xf32>
    %198 = vector.broadcast %197 : vector<1x1x128xf32> to vector<15x16x128xf32>
    %199 = arith.mulf %195, %198 : vector<15x16x128xf32>
    %200 = arith.addf %193, %199 : vector<15x16x128xf32>
    %c4_180 = arith.constant 4 : index
    %c1_181 = arith.constant 1 : index
    %c0_182 = arith.constant 0 : index
    %c0_183 = arith.constant 0 : index
    %201 = vector.load %arg9[%c4_180, %c1_181, %c0_182, %c0_183] : memref<5x16x16x128xf32, #tpu.memory_space<vmem>>, vector<1x15x16x128xf32>
    %202 = vector.shape_cast %201 : vector<1x15x16x128xf32> to vector<15x16x128xf32>
    %c19 = arith.constant 19 : index
    %c0_184 = arith.constant 0 : index
    %203 = vector.load %arg4[%c19, %c0_184] : memref<25x128xf32, #tpu.memory_space<vmem>>, vector<1x128xf32>
    %204 = vector.shape_cast %203 : vector<1x128xf32> to vector<1x1x128xf32>
    %205 = vector.broadcast %204 : vector<1x1x128xf32> to vector<15x16x128xf32>
    %206 = arith.mulf %202, %205 : vector<15x16x128xf32>
    %207 = arith.addf %200, %206 : vector<15x16x128xf32>
    %208 = arith.addf %173, %207 : vector<15x16x128xf32>
    %c0_185 = arith.constant 0 : index
    %c0_186 = arith.constant 0 : index
    %c0_187 = arith.constant 0 : index
    %209 = vector.load %arg10[%c0_185, %c0_186, %c0_187] : memref<16x16x128xf32, #tpu.memory_space<vmem>>, vector<15x16x128xf32>
    tpu.vector_store %arg10[%c0_185, %c0_186, %c0_187], %208 {strides = array<i32>} : memref<16x16x128xf32, #tpu.memory_space<vmem>>, vector<15x16x128xf32>,
    %c0_188 = arith.constant 0 : index
    %c0_189 = arith.constant 0 : index
    %c0_190 = arith.constant 0 : index
    %210 = vector.load %arg10[%c0_188, %c0_189, %c0_190] : memref<16x16x128xf32, #tpu.memory_space<vmem>>, vector<14x16x128xf32>
    %c0_191 = arith.constant 0 : index
    %c2_192 = arith.constant 2 : index
    %c0_193 = arith.constant 0 : index
    %c0_194 = arith.constant 0 : index
    %211 = vector.load %arg9[%c0_191, %c2_192, %c0_193, %c0_194] : memref<5x16x16x128xf32, #tpu.memory_space<vmem>>, vector<1x14x16x128xf32>
    %212 = vector.shape_cast %211 : vector<1x14x16x128xf32> to vector<14x16x128xf32>
    %c20 = arith.constant 20 : index
    %c0_195 = arith.constant 0 : index
    %213 = vector.load %arg4[%c20, %c0_195] : memref<25x128xf32, #tpu.memory_space<vmem>>, vector<1x128xf32>
    %214 = vector.shape_cast %213 : vector<1x128xf32> to vector<1x1x128xf32>
    %215 = vector.broadcast %214 : vector<1x1x128xf32> to vector<14x16x128xf32>
    %216 = arith.mulf %212, %215 : vector<14x16x128xf32>
    %c1_196 = arith.constant 1 : index
    %c2_197 = arith.constant 2 : index
    %c0_198 = arith.constant 0 : index
    %c0_199 = arith.constant 0 : index
    %217 = vector.load %arg9[%c1_196, %c2_197, %c0_198, %c0_199] : memref<5x16x16x128xf32, #tpu.memory_space<vmem>>, vector<1x14x16x128xf32>
    %218 = vector.shape_cast %217 : vector<1x14x16x128xf32> to vector<14x16x128xf32>
    %c21 = arith.constant 21 : index
    %c0_200 = arith.constant 0 : index
    %219 = vector.load %arg4[%c21, %c0_200] : memref<25x128xf32, #tpu.memory_space<vmem>>, vector<1x128xf32>
    %220 = vector.shape_cast %219 : vector<1x128xf32> to vector<1x1x128xf32>
    %221 = vector.broadcast %220 : vector<1x1x128xf32> to vector<14x16x128xf32>
    %222 = arith.mulf %218, %221 : vector<14x16x128xf32>
    %223 = arith.addf %216, %222 : vector<14x16x128xf32>
    %c2_201 = arith.constant 2 : index
    %c2_202 = arith.constant 2 : index
    %c0_203 = arith.constant 0 : index
    %c0_204 = arith.constant 0 : index
    %224 = vector.load %arg9[%c2_201, %c2_202, %c0_203, %c0_204] : memref<5x16x16x128xf32, #tpu.memory_space<vmem>>, vector<1x14x16x128xf32>
    %225 = vector.shape_cast %224 : vector<1x14x16x128xf32> to vector<14x16x128xf32>
    %c22 = arith.constant 22 : index
    %c0_205 = arith.constant 0 : index
    %226 = vector.load %arg4[%c22, %c0_205] : memref<25x128xf32, #tpu.memory_space<vmem>>, vector<1x128xf32>
    %227 = vector.shape_cast %226 : vector<1x128xf32> to vector<1x1x128xf32>
    %228 = vector.broadcast %227 : vector<1x1x128xf32> to vector<14x16x128xf32>
    %229 = arith.mulf %225, %228 : vector<14x16x128xf32>
    %230 = arith.addf %223, %229 : vector<14x16x128xf32>
    %c3_206 = arith.constant 3 : index
    %c2_207 = arith.constant 2 : index
    %c0_208 = arith.constant 0 : index
    %c0_209 = arith.constant 0 : index
    %231 = vector.load %arg9[%c3_206, %c2_207, %c0_208, %c0_209] : memref<5x16x16x128xf32, #tpu.memory_space<vmem>>, vector<1x14x16x128xf32>
    %232 = vector.shape_cast %231 : vector<1x14x16x128xf32> to vector<14x16x128xf32>
    %c23 = arith.constant 23 : index
    %c0_210 = arith.constant 0 : index
    %233 = vector.load %arg4[%c23, %c0_210] : memref<25x128xf32, #tpu.memory_space<vmem>>, vector<1x128xf32>
    %234 = vector.shape_cast %233 : vector<1x128xf32> to vector<1x1x128xf32>
    %235 = vector.broadcast %234 : vector<1x1x128xf32> to vector<14x16x128xf32>
    %236 = arith.mulf %232, %235 : vector<14x16x128xf32>
    %237 = arith.addf %230, %236 : vector<14x16x128xf32>
    %c4_211 = arith.constant 4 : index
    %c2_212 = arith.constant 2 : index
    %c0_213 = arith.constant 0 : index
    %c0_214 = arith.constant 0 : index
    %238 = vector.load %arg9[%c4_211, %c2_212, %c0_213, %c0_214] : memref<5x16x16x128xf32, #tpu.memory_space<vmem>>, vector<1x14x16x128xf32>
    %239 = vector.shape_cast %238 : vector<1x14x16x128xf32> to vector<14x16x128xf32>
    %c24 = arith.constant 24 : index
    %c0_215 = arith.constant 0 : index
    %240 = vector.load %arg4[%c24, %c0_215] : memref<25x128xf32, #tpu.memory_space<vmem>>, vector<1x128xf32>
    %241 = vector.shape_cast %240 : vector<1x128xf32> to vector<1x1x128xf32>
    %242 = vector.broadcast %241 : vector<1x1x128xf32> to vector<14x16x128xf32>
    %243 = arith.mulf %239, %242 : vector<14x16x128xf32>
    %244 = arith.addf %237, %243 : vector<14x16x128xf32>
    %245 = arith.addf %210, %244 : vector<14x16x128xf32>
    %c0_216 = arith.constant 0 : index
    %c0_217 = arith.constant 0 : index
    %c0_218 = arith.constant 0 : index
    %246 = vector.load %arg10[%c0_216, %c0_217, %c0_218] : memref<16x16x128xf32, #tpu.memory_space<vmem>>, vector<14x16x128xf32>
    tpu.vector_store %arg10[%c0_216, %c0_217, %c0_218], %245 {strides = array<i32>} : memref<16x16x128xf32, #tpu.memory_space<vmem>>, vector<14x16x128xf32>,
    %c0_219 = arith.constant 0 : index
    %c0_220 = arith.constant 0 : index
    %c0_221 = arith.constant 0 : index
    %247 = vector.load %arg10[%c0_219, %c0_220, %c0_221] : memref<16x16x128xf32, #tpu.memory_space<vmem>>, vector<16x16x128xf32>
    %248 = vector.shape_cast %247 : vector<16x16x128xf32> to vector<256x128xf32>
    %c0_222 = arith.constant 0 : index
    %c0_223 = arith.constant 0 : index
    %249 = vector.load %arg7[%c0_222, %c0_223] : memref<256x128xf32, #tpu.memory_space<vmem>>, vector<256x128xf32>
    tpu.vector_store %arg7[%c0_222, %c0_223], %248 {strides = array<i32>} : memref<256x128xf32, #tpu.memory_space<vmem>>, vector<256x128xf32>,
    return
  }
  func.func @transform_0(%arg0: i32) -> (i32, i32) {
    %c0_i32 = arith.constant 0 : i32
    %c0_i32_0 = arith.constant 0 : i32
    return %c0_i32, %arg0 : i32, i32
  }
  func.func @transform_1(%arg0: i32) -> (i32, i32) {
    %c0_i32 = arith.constant 0 : i32
    %c0_i32_0 = arith.constant 0 : i32
    %c0_i32_1 = arith.constant 0 : i32
    return %c0_i32, %c0_i32_0 : i32, i32
  }
  func.func @transform_2(%arg0: i32) -> (i32, i32) {
    %c0_i32 = arith.constant 0 : i32
    %c0_i32_0 = arith.constant 0 : i32
    %c0_i32_1 = arith.constant 0 : i32
    return %c0_i32, %c0_i32_0 : i32, i32
  }
  func.func @transform_3(%arg0: i32) -> (i32, i32) {
    %c0_i32 = arith.constant 0 : i32
    %c0_i32_0 = arith.constant 0 : i32
    %c0_i32_1 = arith.constant 0 : i32
    return %c0_i32, %c0_i32_0 : i32, i32
  }
  func.func @transform_4(%arg0: i32) -> (i32, i32) {
    %c0_i32 = arith.constant 0 : i32
    %c0_i32_0 = arith.constant 0 : i32
    %c0_i32_1 = arith.constant 0 : i32
    return %c0_i32, %c0_i32_0 : i32, i32
  }
  func.func @transform_5(%arg0: i32) -> (i32, i32) {
    %c0_i32 = arith.constant 0 : i32
    %c0_i32_0 = arith.constant 0 : i32
    %c0_i32_1 = arith.constant 0 : i32
    return %c0_i32, %c0_i32_0 : i32, i32
  }
  func.func @transform_6(%arg0: i32) -> (i32, i32) {
    %c0_i32 = arith.constant 0 : i32
    %c0_i32_0 = arith.constant 0 : i32
    return %c0_i32, %arg0 : i32, i32
  }
}

</mosaic_0001>

<llo_original>
// kernel: gn_act_dwconv2d.1
$region0: #{gn_act_dwconv2d.1}
  #allocation0 [shape = 'u32[]', space=smem, size = 0x4, offset = 0x4, fixed_abs, tag = 'smem constant byte address 0x4 - core index']
  #allocation1 [shape = 'u32[144,128]{1,0:T(1,128)}', space=vmem, size = 0x12000, scoped, tag = 'internal scratch']
  #allocation2 [shape = 'f32[16,20,128]{2,1,0:T(8,128)}', space=vmem, size = 0x30000, scoped, tag = 'scratch operand']
  #allocation3 [shape = 'f32[5,16,16,128]{3,2,1,0:T(8,128)}', space=vmem, size = 0xa0000, scoped, tag = 'scratch operand']
  #allocation4 [shape = 'f32[16,16,128]{2,1,0:T(8,128)}', space=vmem, size = 0x20000, scoped, tag = 'scratch operand']
  %s0 = inlined_call_operand.vmem [shape: f32[256,256], index: 0, kind: input, shape index: {}]
  %s1 = inlined_call_operand.vmem [shape: f32[1,128], index: 1, kind: input, shape index: {}]
  %s2 = inlined_call_operand.vmem [shape: f32[1,128], index: 2, kind: input, shape index: {}]
  %s3 = inlined_call_operand.vmem [shape: f32[25,128], index: 3, kind: input, shape index: {}]
  %s4 = inlined_call_operand.vmem [shape: f32[128,32], index: 4, kind: input, shape index: {}]
  %s5 = inlined_call_operand.vmem [shape: f32[32,128], index: 5, kind: input, shape index: {}]
  %s6 = inlined_call_operand.vmem [shape: f32[256,256], index: 6, kind: output, shape index: {}]
  %s7 = sld [smem:[#allocation0]]
  $region129: #{gn_act_dwconv2d.1} parent=0
    _
  %s9 = ssub.s32 1, %s7
  %s10 = scalar_select 0, %s9, %s7
  $region1: #{gn_act_dwconv2d.1} parent=0
    #allocation5 [shape = 'u8[262144]{0}', space=vmem, size = 0x40000, scoped, tag = 'input window, operand 0']
    #allocation6 [shape = 'u8[262144]{0}', space=vmem, size = 0x40000, scoped, tag = 'output window, operand 0']
    loop: start=0, step=1, limit=4
    $region2: #{gn_act_dwconv2d.1} parent=1 // loop_pre_header
      _
    $region3: #{gn_act_dwconv2d.1} parent=1 // loop_header
      %s12 = sphi 0, %s16
      %p13 = scmp.ge.s32.totalorder %s12, 4
      %s22 = sphi 0, %s24
      %s25 = sphi 0, %s22
      %s26 = sphi 0, %s25
      %s42 = sphi 0, %s26
      %s46 = sphi 0, %s46
      %s48 = sphi 0, %s46
      %s49 = sphi 0, %s48
      %s63 = sphi 0, %s49
      %s67 = sphi 0, %s67
      %s69 = sphi 0, %s67
      %s70 = sphi 0, %s69
      %s84 = sphi 0, %s70
      %s88 = sphi 0, %s88
      %s90 = sphi 0, %s88
      %s91 = sphi 0, %s90
      %s105 = sphi 0, %s91
      %s109 = sphi 0, %s109
      %s111 = sphi 0, %s109
      %s112 = sphi 0, %s111
      %s126 = sphi 0, %s112
      %s130 = sphi 0, %s130
      %s132 = sphi 0, %s130
      %s133 = sphi 0, %s132
      %s147 = sphi 0, %s133
      %s153 = sphi 0, %s155
      %s156 = sphi 0, %s153
      %s157 = sphi 0, %s156
      %s173 = sphi 0, %s157
    $region4: #{gn_act_dwconv2d.1} parent=1 // loop_header_branch
      %15 = sbr.rel (%p13) target = $region8
    $region5: #{gn_act_dwconv2d.1} parent=1 // loop_body
      %s17 = ssub.s32 %s12, 1
      %s18 = ssub.s32 %s12, 2
      %s19 = sadd.s32 %s12, 1
      %s20 = ssub.s32 %s12, %s19
      %p21 = scmp.eq.s32.totalorder %s20, 0
      %s23 = sadd.s32 %s22, 1
      %s24 = scalar_select %p21, %s22, %s23
      %p27 = pneg %p21
      %p28 = scmp.eq.s32.totalorder %s12, 1
      %p29 = por %p27, %p28
      %p30 = scmp.ne.s32.totalorder %s22, %s25
      %p31 = scmp.eq.s32.totalorder %s12, 0
      %p32 = por %p30, %p31
      %p33 = scmp.ne.s32.totalorder %s22, %s25
      %p34 = scmp.eq.s32.totalorder %s17, 1
      %p35 = por %p33, %p34
      %p36 = scmp.ne.s32.totalorder %s25, %s26
      %p37 = scmp.eq.s32.totalorder %s17, 0
      %p38 = por %p36, %p37
      %p39 = scmp.ne.s32.totalorder %s25, %s26
      %p40 = scmp.eq.s32.totalorder %s18, 1
      %p41 = por %p39, %p40
      %p43 = scmp.ne.s32.totalorder %s26, %s42
      %p44 = scmp.eq.s32.totalorder %s18, 0
      %p45 = por %p43, %p44
      %s47 = sadd.s32 %s46, 1
      %p50 = scmp.eq.s32.totalorder %s12, 1
      %p51 = scmp.ne.s32.totalorder %s46, %s48
      %p52 = scmp.eq.s32.totalorder %s12, 0
      %p53 = por %p51, %p52
      %p54 = scmp.ne.s32.totalorder %s46, %s48
      %p55 = scmp.eq.s32.totalorder %s17, 1
      %p56 = por %p54, %p55
      %p57 = scmp.ne.s32.totalorder %s48, %s49
      %p58 = scmp.eq.s32.totalorder %s17, 0
      %p59 = por %p57, %p58
      %p60 = scmp.ne.s32.totalorder %s48, %s49
      %p61 = scmp.eq.s32.totalorder %s18, 1
      %p62 = por %p60, %p61
      %p64 = scmp.ne.s32.totalorder %s49, %s63
      %p65 = scmp.eq.s32.totalorder %s18, 0
      %p66 = por %p64, %p65
      %s68 = sadd.s32 %s67, 1
      %p71 = scmp.eq.s32.totalorder %s12, 1
      %p72 = scmp.ne.s32.totalorder %s67, %s69
      %p73 = scmp.eq.s32.totalorder %s12, 0
      %p74 = por %p72, %p73
      %p75 = scmp.ne.s32.totalorder %s67, %s69
      %p76 = scmp.eq.s32.totalorder %s17, 1
      %p77 = por %p75, %p76
      %p78 = scmp.ne.s32.totalorder %s69, %s70
      %p79 = scmp.eq.s32.totalorder %s17, 0
      %p80 = por %p78, %p79
      %p81 = scmp.ne.s32.totalorder %s69, %s70
      %p82 = scmp.eq.s32.totalorder %s18, 1
      %p83 = por %p81, %p82
      %p85 = scmp.ne.s32.totalorder %s70, %s84
      %p86 = scmp.eq.s32.totalorder %s18, 0
      %p87 = por %p85, %p86
      %s89 = sadd.s32 %s88, 1
      %p92 = scmp.eq.s32.totalorder %s12, 1
      %p93 = scmp.ne.s32.totalorder %s88, %s90
      %p94 = scmp.eq.s32.totalorder %s12, 0
      %p95 = por %p93, %p94
      %p96 = scmp.ne.s32.totalorder %s88, %s90
      %p97 = scmp.eq.s32.totalorder %s17, 1
      %p98 = por %p96, %p97
      %p99 = scmp.ne.s32.totalorder %s90, %s91
      %p100 = scmp.eq.s32.totalorder %s17, 0
      %p101 = por %p99, %p100
      %p102 = scmp.ne.s32.totalorder %s90, %s91
      %p103 = scmp.eq.s32.totalorder %s18, 1
      %p104 = por %p102, %p103
      %p106 = scmp.ne.s32.totalorder %s91, %s105
      %p107 = scmp.eq.s32.totalorder %s18, 0
      %p108 = por %p106, %p107
      %s110 = sadd.s32 %s109, 1
      %p113 = scmp.eq.s32.totalorder %s12, 1
      %p114 = scmp.ne.s32.totalorder %s109, %s111
      %p115 = scmp.eq.s32.totalorder %s12, 0
      %p116 = por %p114, %p115
      %p117 = scmp.ne.s32.totalorder %s109, %s111
      %p118 = scmp.eq.s32.totalorder %s17, 1
      %p119 = por %p117, %p118
      %p120 = scmp.ne.s32.totalorder %s111, %s112
      %p121 = scmp.eq.s32.totalorder %s17, 0
      %p122 = por %p120, %p121
      %p123 = scmp.ne.s32.totalorder %s111, %s112
      %p124 = scmp.eq.s32.totalorder %s18, 1
      %p125 = por %p123, %p124
      %p127 = scmp.ne.s32.totalorder %s112, %s126
      %p128 = scmp.eq.s32.totalorder %s18, 0
      %p129 = por %p127, %p128
      %s131 = sadd.s32 %s130, 1
      %p134 = scmp.eq.s32.totalorder %s12, 1
      %p135 = scmp.ne.s32.totalorder %s130, %s132
      %p136 = scmp.eq.s32.totalorder %s12, 0
      %p137 = por %p135, %p136
      %p138 = scmp.ne.s32.totalorder %s130, %s132
      %p139 = scmp.eq.s32.totalorder %s17, 1
      %p140 = por %p138, %p139
      %p141 = scmp.ne.s32.totalorder %s132, %s133
      %p142 = scmp.eq.s32.totalorder %s17, 0
      %p143 = por %p141, %p142
      %p144 = scmp.ne.s32.totalorder %s132, %s133
      %p145 = scmp.eq.s32.totalorder %s18, 1
      %p146 = por %p144, %p145
      %p148 = scmp.ne.s32.totalorder %s133, %s147
      %p149 = scmp.eq.s32.totalorder %s18, 0
      %p150 = por %p148, %p149
      %s151 = ssub.s32 %s12, %s19
      %p152 = scmp.eq.s32.totalorder %s151, 0
      %s154 = sadd.s32 %s153, 1
      %s155 = scalar_select %p152, %s153, %s154
      %p158 = pneg %p152
      %p159 = scmp.eq.s32.totalorder %s12, 1
      %p160 = por %p158, %p159
      %p161 = scmp.ne.s32.totalorder %s153, %s156
      %p162 = scmp.eq.s32.totalorder %s12, 0
      %p163 = por %p161, %p162
      %p164 = scmp.ne.s32.totalorder %s153, %s156
      %p165 = scmp.eq.s32.totalorder %s17, 1
      %p166 = por %p164, %p165
      %p167 = scmp.ne.s32.totalorder %s156, %s157
      %p168 = scmp.eq.s32.totalorder %s17, 0
      %p169 = por %p167, %p168
      %p170 = scmp.ne.s32.totalorder %s156, %s157
      %p171 = scmp.eq.s32.totalorder %s18, 1
      %p172 = por %p170, %p171
      %p174 = scmp.ne.s32.totalorder %s157, %s173
      %p175 = scmp.eq.s32.totalorder %s18, 0
      %p176 = por %p174, %p175
      %p177 = scmp.le.s32.totalorder 1, %s12
      %p178 = scmp.lt.s32.totalorder %s12, 3
      %p179 = pnand %p177, %p178
      %p180 = pneg %p179
      // Predicated region
      $region9: #{gn_act_dwconv2d.1} parent=5 // pred_check
        _
      $region10: #{gn_act_dwconv2d.1} parent=5 // pred_check_branch
        %182 = sbr.rel (%p179) target = $region12
      $region11: #{gn_act_dwconv2d.1} parent=5 // pred_region
        %s183 = ssub.s32 %s12, 1
        // Predicated region
        $region13: #{gn_act_dwconv2d.1} parent=11 // pred_check
          %p184 = pneg %p59
        $region14: #{gn_act_dwconv2d.1} parent=11 // pred_check_branch
          %186 = sbr.rel (%p184) target = $region16
        $region15: #{gn_act_dwconv2d.1} parent=11 // pred_region
          _
        $region16: #{gn_act_dwconv2d.1} parent=11 // pred_fallthru
          _
        // Predicated region
        $region17: #{gn_act_dwconv2d.1} parent=11 // pred_check
          %p187 = pneg %p80
        $region18: #{gn_act_dwconv2d.1} parent=11 // pred_check_branch
          %189 = sbr.rel (%p187) target = $region20
        $region19: #{gn_act_dwconv2d.1} parent=11 // pred_region
          _
        $region20: #{gn_act_dwconv2d.1} parent=11 // pred_fallthru
          _
        // Predicated region
        $region21: #{gn_act_dwconv2d.1} parent=11 // pred_check
          %p190 = pneg %p101
        $region22: #{gn_act_dwconv2d.1} parent=11 // pred_check_branch
          %192 = sbr.rel (%p190) target = $region24
        $region23: #{gn_act_dwconv2d.1} parent=11 // pred_region
          _
        $region24: #{gn_act_dwconv2d.1} parent=11 // pred_fallthru
          _
        // Predicated region
        $region25: #{gn_act_dwconv2d.1} parent=11 // pred_check
          %p193 = pneg %p122
        $region26: #{gn_act_dwconv2d.1} parent=11 // pred_check_branch
          %195 = sbr.rel (%p193) target = $region28
        $region27: #{gn_act_dwconv2d.1} parent=11 // pred_region
          _
        $region28: #{gn_act_dwconv2d.1} parent=11 // pred_fallthru
          _
        // Predicated region
        $region29: #{gn_act_dwconv2d.1} parent=11 // pred_check
          %p196 = pneg %p143
        $region30: #{gn_act_dwconv2d.1} parent=11 // pred_check_branch
          %198 = sbr.rel (%p196) target = $region32
        $region31: #{gn_act_dwconv2d.1} parent=11 // pred_region
          _
        $region32: #{gn_act_dwconv2d.1} parent=11 // pred_fallthru
          _
      $region12: #{gn_act_dwconv2d.1} parent=5 // pred_fallthru
        _
      %p199 = scmp.lt.s32.totalorder %s12, 2
      // Predicated region
      $region33: #{gn_act_dwconv2d.1} parent=5 // pred_check
        %p200 = pneg %p199
      $region34: #{gn_act_dwconv2d.1} parent=5 // pred_check_branch
        %202 = sbr.rel (%p200) target = $region36
      $region35: #{gn_act_dwconv2d.1} parent=5 // pred_region
        // Predicated region
        $region37: #{gn_act_dwconv2d.1} parent=35 // pred_check
          %p203 = pneg %p32
        $region38: #{gn_act_dwconv2d.1} parent=35 // pred_check_branch
          %205 = sbr.rel (%p203) target = $region40
        $region39: #{gn_act_dwconv2d.1} parent=35 // pred_region
          %s206 = sand.u32 %s22, 1
          %s207 = sand.u32 %s22, 1
          %s208 = smul.addr %s207, 256
          %s209 = scalar_lea.vmem [#allocation5], %s208
          %s210 = smul.addr %s12, 8
          %s211 = scalar_lea.vmem %s0, %s210
          // Predicated region
          $region41: #{gn_act_dwconv2d.1} parent=39 // pred_check
            _
          $region42: #{gn_act_dwconv2d.1} parent=39 // pred_check_branch
            %213 = sbr.rel (0) target = $region44
          $region43: #{gn_act_dwconv2d.1} parent=39 // pred_region
            // Predicated region
            $region45: #{gn_act_dwconv2d.1} parent=43 // pred_check
              _
            $region46: #{gn_act_dwconv2d.1} parent=43 // pred_check_branch
              %215 = sbr.rel (0) target = $region48
            $region47: #{gn_act_dwconv2d.1} parent=43 // pred_region
              // Predicated region
              $region60: #{gn_act_dwconv2d.1} parent=47 // pred_check
                _
              $region61: #{gn_act_dwconv2d.1} parent=47 // pred_check_branch
                %293 = sbr.rel (0) target = $region63
              $region62: #{gn_act_dwconv2d.1} parent=47 // pred_region
                loop: start=0, step=1, limit=1
                $region64: #{gn_act_dwconv2d.1} parent=62 // loop_pre_header
                  _
                $region65: #{gn_act_dwconv2d.1} parent=62 // loop_header
                  %s295 = sphi 0, %s299
                  %p296 = scmp.ge.s32.totalorder %s295, 1
                  %s300 = sphi %s211, %s211
                  %s301 = sphi %s209, %s209
                $region66: #{gn_act_dwconv2d.1} parent=62 // loop_header_branch
                  %298 = sbr.rel (%p296) target = $region70
                $region67: #{gn_act_dwconv2d.1} parent=62 // loop_body
                  %v302 = vld [vmem:[%s300] sm:$0xff]
                  %303 = vst [vmem:[%s301] sm:$0xff] %v302
                  %v304 = vld [vmem:[%s300 + $0x10] sm:$0xff]
                  %305 = vst [vmem:[%s301 + $0x8] sm:$0xff] %v304
                  %v306 = vld [vmem:[%s300 + $0x20] sm:$0xff]
                  %307 = vst [vmem:[%s301 + $0x10] sm:$0xff] %v306
                  %v308 = vld [vmem:[%s300 + $0x30] sm:$0xff]
                  %309 = vst [vmem:[%s301 + $0x18] sm:$0xff] %v308
                  %v310 = vld [vmem:[%s300 + $0x40] sm:$0xff]
                  %311 = vst [vmem:[%s301 + $0x20] sm:$0xff] %v310
                  %v312 = vld [vmem:[%s300 + $0x50] sm:$0xff]
                  %313 = vst [vmem:[%s301 + $0x28] sm:$0xff] %v312
                  %v314 = vld [vmem:[%s300 + $0x60] sm:$0xff]
                  %315 = vst [vmem:[%s301 + $0x30] sm:$0xff] %v314
                  %v316 = vld [vmem:[%s300 + $0x70] sm:$0xff]
                  %317 = vst [vmem:[%s301 + $0x38] sm:$0xff] %v316
                  %v318 = vld [vmem:[%s300 + $0x80] sm:$0xff]
                  %319 = vst [vmem:[%s301 + $0x40] sm:$0xff] %v318
                  %v320 = vld [vmem:[%s300 + $0x90] sm:$0xff]
                  %321 = vst [vmem:[%s301 + $0x48] sm:$0xff] %v320
                  %v322 = vld [vmem:[%s300 + $0xa0] sm:$0xff]
                  %323 = vst [vmem:[%s301 + $0x50] sm:$0xff] %v322
                  %v324 = vld [vmem:[%s300 + $0xb0] sm:$0xff]
                  %325 = vst [vmem:[%s301 + $0x58] sm:$0xff] %v324
                  %v326 = vld [vmem:[%s300 + $0xc0] sm:$0xff]
                  %327 = vst [vmem:[%s301 + $0x60] sm:$0xff] %v326
                  %v328 = vld [vmem:[%s300 + $0xd0] sm:$0xff]
                  %329 = vst [vmem:[%s301 + $0x68] sm:$0xff] %v328
                  %v330 = vld [vmem:[%s300 + $0xe0] sm:$0xff]
                  %331 = vst [vmem:[%s301 + $0x70] sm:$0xff] %v330
                  %v332 = vld [vmem:[%s300 + $0xf0] sm:$0xff]
                  %333 = vst [vmem:[%s301 + $0x78] sm:$0xff] %v332
                  %v334 = vld [vmem:[%s300 + $0x100] sm:$0xff]
                  %335 = vst [vmem:[%s301 + $0x80] sm:$0xff] %v334
                  %v336 = vld [vmem:[%s300 + $0x110] sm:$0xff]
                  %337 = vst [vmem:[%s301 + $0x88] sm:$0xff] %v336
                  %v338 = vld [vmem:[%s300 + $0x120] sm:$0xff]
                  %339 = vst [vmem:[%s301 + $0x90] sm:$0xff] %v338
                  %v340 = vld [vmem:[%s300 + $0x130] sm:$0xff]
                  %341 = vst [vmem:[%s301 + $0x98] sm:$0xff] %v340
                  %v342 = vld [vmem:[%s300 + $0x140] sm:$0xff]
                  %343 = vst [vmem:[%s301 + $0xa0] sm:$0xff] %v342
                  %v344 = vld [vmem:[%s300 + $0x150] sm:$0xff]
                  %345 = vst [vmem:[%s301 + $0xa8] sm:$0xff] %v344
                  %v346 = vld [vmem:[%s300 + $0x160] sm:$0xff]
                  %347 = vst [vmem:[%s301 + $0xb0] sm:$0xff] %v346
                  %v348 = vld [vmem:[%s300 + $0x170] sm:$0xff]
                  %349 = vst [vmem:[%s301 + $0xb8] sm:$0xff] %v348
                  %v350 = vld [vmem:[%s300 + $0x180] sm:$0xff]
                  %351 = vst [vmem:[%s301 + $0xc0] sm:$0xff] %v350
                  %v352 = vld [vmem:[%s300 + $0x190] sm:$0xff]
                  %353 = vst [vmem:[%s301 + $0xc8] sm:$0xff] %v352
                  %v354 = vld [vmem:[%s300 + $0x1a0] sm:$0xff]
                  %355 = vst [vmem:[%s301 + $0xd0] sm:$0xff] %v354
                  %v356 = vld [vmem:[%s300 + $0x1b0] sm:$0xff]
                  %357 = vst [vmem:[%s301 + $0xd8] sm:$0xff] %v356
                  %v358 = vld [vmem:[%s300 + $0x1c0] sm:$0xff]
                  %359 = vst [vmem:[%s301 + $0xe0] sm:$0xff] %v358
                  %v360 = vld [vmem:[%s300 + $0x1d0] sm:$0xff]
                  %361 = vst [vmem:[%s301 + $0xe8] sm:$0xff] %v360
                  %v362 = vld [vmem:[%s300 + $0x1e0] sm:$0xff]
                  %363 = vst [vmem:[%s301 + $0xf0] sm:$0xff] %v362
                  %v364 = vld [vmem:[%s300 + $0x1f0] sm:$0xff]
                  %365 = vst [vmem:[%s301 + $0xf8] sm:$0xff] %v364
                $region68: #{gn_act_dwconv2d.1} parent=62 // loop_footer
                  %s299 = sadd.s32 1, %s295
                $region69: #{gn_act_dwconv2d.1} parent=62 // loop_footer_branch
                  %294 = sbr.rel target = $region65
                $region70: #{gn_act_dwconv2d.1} parent=62 // loop_exit
                  _
              $region63: #{gn_act_dwconv2d.1} parent=47 // pred_fallthru
                _
              // Predicated region
              $region71: #{gn_act_dwconv2d.1} parent=47 // pred_check
                _
              $region72: #{gn_act_dwconv2d.1} parent=47 // pred_check_branch
                %367 = sbr.rel target = $region74
              $region73: #{gn_act_dwconv2d.1} parent=47 // pred_region
                _
              $region74: #{gn_act_dwconv2d.1} parent=47 // pred_fallthru
                _
            $region48: #{gn_act_dwconv2d.1} parent=43 // pred_fallthru
              _
            // Predicated region
            $region49: #{gn_act_dwconv2d.1} parent=43 // pred_check
              _
            $region50: #{gn_act_dwconv2d.1} parent=43 // pred_check_branch
              %217 = sbr.rel target = $region52
            $region51: #{gn_act_dwconv2d.1} parent=43 // pred_region
              %s219 = ssub.s32 256, 1
              loop: start=0, step=1, limit=1
              $region53: #{gn_act_dwconv2d.1} parent=51 // loop_pre_header
                _
              $region54: #{gn_act_dwconv2d.1} parent=51 // loop_header
                %s221 = sphi 0, %s225
                %p222 = scmp.ge.s32.totalorder %s221, 1
                %s226 = sphi %s211, %s211
                %s227 = sphi %s209, %s209
              $region55: #{gn_act_dwconv2d.1} parent=51 // loop_header_branch
                %224 = sbr.rel (%p222) target = $region59
              $region56: #{gn_act_dwconv2d.1} parent=51 // loop_body
                %v228 = vld [vmem:[%s226] sm:%s219]
                %229 = vst [vmem:[%s227] sm:%s219] %v228
                %v230 = vld [vmem:[%s226 + $0x10] sm:%s219]
                %231 = vst [vmem:[%s227 + $0x8] sm:%s219] %v230
                %v232 = vld [vmem:[%s226 + $0x20] sm:%s219]
                %233 = vst [vmem:[%s227 + $0x10] sm:%s219] %v232
                %v234 = vld [vmem:[%s226 + $0x30] sm:%s219]
                %235 = vst [vmem:[%s227 + $0x18] sm:%s219] %v234
                %v236 = vld [vmem:[%s226 + $0x40] sm:%s219]
                %237 = vst [vmem:[%s227 + $0x20] sm:%s219] %v236
                %v238 = vld [vmem:[%s226 + $0x50] sm:%s219]
                %239 = vst [vmem:[%s227 + $0x28] sm:%s219] %v238
                %v240 = vld [vmem:[%s226 + $0x60] sm:%s219]
                %241 = vst [vmem:[%s227 + $0x30] sm:%s219] %v240
                %v242 = vld [vmem:[%s226 + $0x70] sm:%s219]
                %243 = vst [vmem:[%s227 + $0x38] sm:%s219] %v242
                %v244 = vld [vmem:[%s226 + $0x80] sm:%s219]
                %245 = vst [vmem:[%s227 + $0x40] sm:%s219] %v244
                %v246 = vld [vmem:[%s226 + $0x90] sm:%s219]
                %247 = vst [vmem:[%s227 + $0x48] sm:%s219] %v246
                %v248 = vld [vmem:[%s226 + $0xa0] sm:%s219]
                %249 = vst [vmem:[%s227 + $0x50] sm:%s219] %v248
                %v250 = vld [vmem:[%s226 + $0xb0] sm:%s219]
                %251 = vst [vmem:[%s227 + $0x58] sm:%s219] %v250
                %v252 = vld [vmem:[%s226 + $0xc0] sm:%s219]
                %253 = vst [vmem:[%s227 + $0x60] sm:%s219] %v252
                %v254 = vld [vmem:[%s226 + $0xd0] sm:%s219]
                %255 = vst [vmem:[%s227 + $0x68] sm:%s219] %v254
                %v256 = vld [vmem:[%s226 + $0xe0] sm:%s219]
                %257 = vst [vmem:[%s227 + $0x70] sm:%s219] %v256
                %v258 = vld [vmem:[%s226 + $0xf0] sm:%s219]
                %259 = vst [vmem:[%s227 + $0x78] sm:%s219] %v258
                %v260 = vld [vmem:[%s226 + $0x100] sm:%s219]
                %261 = vst [vmem:[%s227 + $0x80] sm:%s219] %v260
                %v262 = vld [vmem:[%s226 + $0x110] sm:%s219]
                %263 = vst [vmem:[%s227 + $0x88] sm:%s219] %v262
                %v264 = vld [vmem:[%s226 + $0x120] sm:%s219]
                %265 = vst [vmem:[%s227 + $0x90] sm:%s219] %v264
                %v266 = vld [vmem:[%s226 + $0x130] sm:%s219]
                %267 = vst [vmem:[%s227 + $0x98] sm:%s219] %v266
                %v268 = vld [vmem:[%s226 + $0x140] sm:%s219]
                %269 = vst [vmem:[%s227 + $0xa0] sm:%s219] %v268
                %v270 = vld [vmem:[%s226 + $0x150] sm:%s219]
                %271 = vst [vmem:[%s227 + $0xa8] sm:%s219] %v270
                %v272 = vld [vmem:[%s226 + $0x160] sm:%s219]
                %273 = vst [vmem:[%s227 + $0xb0] sm:%s219] %v272
                %v274 = vld [vmem:[%s226 + $0x170] sm:%s219]
                %275 = vst [vmem:[%s227 + $0xb8] sm:%s219] %v274
                %v276 = vld [vmem:[%s226 + $0x180] sm:%s219]
                %277 = vst [vmem:[%s227 + $0xc0] sm:%s219] %v276
                %v278 = vld [vmem:[%s226 + $0x190] sm:%s219]
                %279 = vst [vmem:[%s227 + $0xc8] sm:%s219] %v278
                %v280 = vld [vmem:[%s226 + $0x1a0] sm:%s219]
                %281 = vst [vmem:[%s227 + $0xd0] sm:%s219] %v280
                %v282 = vld [vmem:[%s226 + $0x1b0] sm:%s219]
                %283 = vst [vmem:[%s227 + $0xd8] sm:%s219] %v282
                %v284 = vld [vmem:[%s226 + $0x1c0] sm:%s219]
                %285 = vst [vmem:[%s227 + $0xe0] sm:%s219] %v284
                %v286 = vld [vmem:[%s226 + $0x1d0] sm:%s219]
                %287 = vst [vmem:[%s227 + $0xe8] sm:%s219] %v286
                %v288 = vld [vmem:[%s226 + $0x1e0] sm:%s219]
                %289 = vst [vmem:[%s227 + $0xf0] sm:%s219] %v288
                %v290 = vld [vmem:[%s226 + $0x1f0] sm:%s219]
                %291 = vst [vmem:[%s227 + $0xf8] sm:%s219] %v290
              $region57: #{gn_act_dwconv2d.1} parent=51 // loop_footer
                %s225 = sadd.s32 1, %s221
              $region58: #{gn_act_dwconv2d.1} parent=51 // loop_footer_branch
                %220 = sbr.rel target = $region54
              $region59: #{gn_act_dwconv2d.1} parent=51 // loop_exit
                _
            $region52: #{gn_act_dwconv2d.1} parent=43 // pred_fallthru
              _
          $region44: #{gn_act_dwconv2d.1} parent=39 // pred_fallthru
            _
          %368 = vnop
        $region40: #{gn_act_dwconv2d.1} parent=35 // pred_fallthru
          _
      $region36: #{gn_act_dwconv2d.1} parent=5 // pred_fallthru
        _
      %p369 = scmp.le.s32.totalorder 1, %s12
      %p370 = scmp.lt.s32.totalorder %s12, 3
      %p371 = pnand %p369, %p370
      %p372 = pneg %p371
      // Predicated region
      $region75: #{gn_act_dwconv2d.1} parent=5 // pred_check
        _
      $region76: #{gn_act_dwconv2d.1} parent=5 // pred_check_branch
        %374 = sbr.rel (%p371) target = $region78
      $region77: #{gn_act_dwconv2d.1} parent=5 // pred_region
        %s375 = ssub.s32 %s12, 1
        %s376 = sand.u32 %s25, 1
        %s377 = sand.u32 %s25, 1
        %s378 = smul.addr %s377, 256
        %s379 = scalar_lea.vmem [#allocation5], %s378
        // Predicated region
        $region79: #{gn_act_dwconv2d.1} parent=77 // pred_check
          %p380 = pneg %p38
        $region80: #{gn_act_dwconv2d.1} parent=77 // pred_check_branch
          %382 = sbr.rel (%p380) target = $region82
        $region81: #{gn_act_dwconv2d.1} parent=77 // pred_region
          _
        $region82: #{gn_act_dwconv2d.1} parent=77 // pred_fallthru
          _
        %s383 = sand.u32 %s25, 1
        %s384 = sand.u32 %s25, 1
        %s385 = smul.addr %s384, 256
        %s386 = scalar_lea.vmem [#allocation5], %s385
        %p387 = pneg %p38
        %p388 = pneg %p35
        %p389 = pneg %p59
        %p390 = pneg %p56
        %p391 = pneg %p80
        %p392 = pneg %p77
        %p393 = pneg %p101
        %p394 = pneg %p98
        %p395 = pneg %p122
        %p396 = pneg %p119
        %p397 = pneg %p143
        %p398 = pneg %p140
        %p399 = pneg %p169
        %p400 = pneg %p166
        %s401 = sand.u32 %s156, 1
        %s402 = sand.u32 %s156, 1
        %s403 = smul.addr %s402, 256
        %s404 = scalar_lea.vmem [#allocation6], %s403
        %v405 = vld [vmem:[%s379] sm:$0xff]
        %v406 = vld [vmem:[%s379 + $0x8] sm:$0xff]
        %v407 = vld [vmem:[%s379 + $0x10] sm:$0xff]
        %v408 = vld [vmem:[%s379 + $0x18] sm:$0xff]
        %v409 = vld [vmem:[%s379 + $0x20] sm:$0xff]
        %v410 = vld [vmem:[%s379 + $0x28] sm:$0xff]
        %v411 = vld [vmem:[%s379 + $0x30] sm:$0xff]
        %v412 = vld [vmem:[%s379 + $0x38] sm:$0xff]
        %v413 = vld [vmem:[%s379 + $0x40] sm:$0xff]
        %v414 = vld [vmem:[%s379 + $0x48] sm:$0xff]
        %v415 = vld [vmem:[%s379 + $0x50] sm:$0xff]
        %v416 = vld [vmem:[%s379 + $0x58] sm:$0xff]
        %v417 = vld [vmem:[%s379 + $0x60] sm:$0xff]
        %v418 = vld [vmem:[%s379 + $0x68] sm:$0xff]
        %v419 = vld [vmem:[%s379 + $0x70] sm:$0xff]
        %v420 = vld [vmem:[%s379 + $0x78] sm:$0xff]
        %v421 = vld [vmem:[%s379 + $0x80] sm:$0xff]
        %v422 = vld [vmem:[%s379 + $0x88] sm:$0xff]
        %v423 = vld [vmem:[%s379 + $0x90] sm:$0xff]
        %v424 = vld [vmem:[%s379 + $0x98] sm:$0xff]
        %v425 = vld [vmem:[%s379 + $0xa0] sm:$0xff]
        %v426 = vld [vmem:[%s379 + $0xa8] sm:$0xff]
        %v427 = vld [vmem:[%s379 + $0xb0] sm:$0xff]
        %v428 = vld [vmem:[%s379 + $0xb8] sm:$0xff]
        %v429 = vld [vmem:[%s379 + $0xc0] sm:$0xff]
        %v430 = vld [vmem:[%s379 + $0xc8] sm:$0xff]
        %v431 = vld [vmem:[%s379 + $0xd0] sm:$0xff]
        %v432 = vld [vmem:[%s379 + $0xd8] sm:$0xff]
        %v433 = vld [vmem:[%s379 + $0xe0] sm:$0xff]
        %v434 = vld [vmem:[%s379 + $0xe8] sm:$0xff]
        %v435 = vld [vmem:[%s379 + $0xf0] sm:$0xff]
        %v436 = vld [vmem:[%s379 + $0xf8] sm:$0xff]
        %v437 = vadd.f32 %v405, %v406
        %v438 = vadd.f32 %v437, %v407
        %v439 = vadd.f32 %v438, %v408
        %v440 = vadd.f32 %v439, %v409
        %v441 = vadd.f32 %v440, %v410
        %v442 = vadd.f32 %v441, %v411
        %v443 = vadd.f32 %v442, %v412
        %v444 = vadd.f32 %v443, %v413
        %v445 = vadd.f32 %v444, %v414
        %v446 = vadd.f32 %v445, %v415
        %v447 = vadd.f32 %v446, %v416
        %v448 = vadd.f32 %v447, %v417
        %v449 = vadd.f32 %v448, %v418
        %v450 = vadd.f32 %v449, %v419
        %v451 = vadd.f32 %v450, %v420
        %v452 = vadd.f32 %v451, %v421
        %v453 = vadd.f32 %v452, %v422
        %v454 = vadd.f32 %v453, %v423
        %v455 = vadd.f32 %v454, %v424
        %v456 = vadd.f32 %v455, %v425
        %v457 = vadd.f32 %v456, %v426
        %v458 = vadd.f32 %v457, %v427
        %v459 = vadd.f32 %v458, %v428
        %v460 = vadd.f32 %v459, %v429
        %v461 = vadd.f32 %v460, %v430
        %v462 = vadd.f32 %v461, %v431
        %v463 = vadd.f32 %v462, %v432
        %v464 = vadd.f32 %v463, %v433
        %v465 = vadd.f32 %v464, %v434
        %v466 = vadd.f32 %v465, %v435
        %v467 = vadd.f32 %v466, %v436
        %v468 = vrot.slane %v467, 4
        %v469 = vadd.f32 %v467, %v468
        %v470 = vrot.slane %v469, 2
        %v471 = vadd.f32 %v469, %v470
        %v472 = vrot.slane %v471, 1
        %v473 = vadd.f32 %v471, %v472
        %v474 = vmul.f32 %v405, %v405
        %v475 = vmul.f32 %v406, %v406
        %v476 = vmul.f32 %v407, %v407
        %v477 = vmul.f32 %v408, %v408
        %v478 = vmul.f32 %v409, %v409
        %v479 = vmul.f32 %v410, %v410
        %v480 = vmul.f32 %v411, %v411
        %v481 = vmul.f32 %v412, %v412
        %v482 = vmul.f32 %v413, %v413
        %v483 = vmul.f32 %v414, %v414
        %v484 = vmul.f32 %v415, %v415
        %v485 = vmul.f32 %v416, %v416
        %v486 = vmul.f32 %v417, %v417
        %v487 = vmul.f32 %v418, %v418
        %v488 = vmul.f32 %v419, %v419
        %v489 = vmul.f32 %v420, %v420
        %v490 = vmul.f32 %v421, %v421
        %v491 = vmul.f32 %v422, %v422
        %v492 = vmul.f32 %v423, %v423
        %v493 = vmul.f32 %v424, %v424
        %v494 = vmul.f32 %v425, %v425
        %v495 = vmul.f32 %v426, %v426
        %v496 = vmul.f32 %v427, %v427
        %v497 = vmul.f32 %v428, %v428
        %v498 = vmul.f32 %v429, %v429
        %v499 = vmul.f32 %v430, %v430
        %v500 = vmul.f32 %v431, %v431
        %v501 = vmul.f32 %v432, %v432
        %v502 = vmul.f32 %v433, %v433
        %v503 = vmul.f32 %v434, %v434
        %v504 = vmul.f32 %v435, %v435
        %v505 = vmul.f32 %v436, %v436
        %v506 = vadd.f32 %v474, %v475
        %v507 = vadd.f32 %v506, %v476
        %v508 = vadd.f32 %v507, %v477
        %v509 = vadd.f32 %v508, %v478
        %v510 = vadd.f32 %v509, %v479
        %v511 = vadd.f32 %v510, %v480
        %v512 = vadd.f32 %v511, %v481
        %v513 = vadd.f32 %v512, %v482
        %v514 = vadd.f32 %v513, %v483
        %v515 = vadd.f32 %v514, %v484
        %v516 = vadd.f32 %v515, %v485
        %v517 = vadd.f32 %v516, %v486
        %v518 = vadd.f32 %v517, %v487
        %v519 = vadd.f32 %v518, %v488
        %v520 = vadd.f32 %v519, %v489
        %v521 = vadd.f32 %v520, %v490
        %v522 = vadd.f32 %v521, %v491
        %v523 = vadd.f32 %v522, %v492
        %v524 = vadd.f32 %v523, %v493
        %v525 = vadd.f32 %v524, %v494
        %v526 = vadd.f32 %v525, %v495
        %v527 = vadd.f32 %v526, %v496
        %v528 = vadd.f32 %v527, %v497
        %v529 = vadd.f32 %v528, %v498
        %v530 = vadd.f32 %v529, %v499
        %v531 = vadd.f32 %v530, %v500
        %v532 = vadd.f32 %v531, %v501
        %v533 = vadd.f32 %v532, %v502
        %v534 = vadd.f32 %v533, %v503
        %v535 = vadd.f32 %v534, %v504
        %v536 = vadd.f32 %v535, %v505
        %v537 = vrot.slane %v536, 4
        %v538 = vadd.f32 %v536, %v537
        %v539 = vrot.slane %v538, 2
        %v540 = vadd.f32 %v538, %v539
        %v541 = vrot.slane %v540, 1
        %v542 = vadd.f32 %v540, %v541
        %v543 = vld [vmem:[%s4] sm:$0xff]
        %v544 = vld [vmem:[%s4 + $0x8] sm:$0xff]
        %v545 = vld [vmem:[%s4 + $0x10] sm:$0xff]
        %v546 = vld [vmem:[%s4 + $0x18] sm:$0xff]
        %v547 = vld [vmem:[%s4 + $0x20] sm:$0xff]
        %v548 = vld [vmem:[%s4 + $0x28] sm:$0xff]
        %v549 = vld [vmem:[%s4 + $0x30] sm:$0xff]
        %v550 = vld [vmem:[%s4 + $0x38] sm:$0xff]
        %v551 = vld [vmem:[%s4 + $0x40] sm:$0xff]
        %v552 = vld [vmem:[%s4 + $0x48] sm:$0xff]
        %v553 = vld [vmem:[%s4 + $0x50] sm:$0xff]
        %v554 = vld [vmem:[%s4 + $0x58] sm:$0xff]
        %v555 = vld [vmem:[%s4 + $0x60] sm:$0xff]
        %v556 = vld [vmem:[%s4 + $0x68] sm:$0xff]
        %v557 = vld [vmem:[%s4 + $0x70] sm:$0xff]
        %v558 = vld [vmem:[%s4 + $0x78] sm:$0xff]
        %v559 = vld [vmem:[%s5] sm:$0xff]
        %v560 = vld [vmem:[%s5 + $0x8] sm:$0xff]
        %v561 = vld [vmem:[%s5 + $0x10] sm:$0xff]
        %v562 = vld [vmem:[%s5 + $0x18] sm:$0xff]
        %563 = vmatprep.subr.mxu0 0.0
        %564 = vmatpush1.msra.mxu0 %v558
        %565 = vmatprep.subr.mxu0 0.0
        %566 = vmatpush1.msra.mxu0 %v557
        %567 = vmatprep.subr.mxu0 0.0
        %568 = vmatpush1.msra.mxu0 %v556
        %569 = vmatprep.subr.mxu0 0.0
        %570 = vmatpush1.msra.mxu0 %v555
        %571 = vmatprep.subr.mxu0 0.0
        %572 = vmatpush1.msra.mxu0 %v554
        %573 = vmatprep.subr.mxu0 0.0
        %574 = vmatpush1.msra.mxu0 %v553
        %575 = vmatprep.subr.mxu0 0.0
        %576 = vmatpush1.msra.mxu0 %v552
        %577 = vmatprep.subr.mxu0 0.0
        %578 = vmatpush1.msra.mxu0 %v551
        %579 = vmatprep.subr.mxu0 0.0
        %580 = vmatpush1.msra.mxu0 %v550
        %581 = vmatprep.subr.mxu0 0.0
        %582 = vmatpush1.msra.mxu0 %v549
        %583 = vmatprep.subr.mxu0 0.0
        %584 = vmatpush1.msra.mxu0 %v548
        %585 = vmatprep.subr.mxu0 0.0
        %586 = vmatpush1.msra.mxu0 %v547
        %587 = vmatprep.subr.mxu0 0.0
        %588 = vmatpush1.msra.mxu0 %v546
        %589 = vmatprep.subr.mxu0 0.0
        %590 = vmatpush1.msra.mxu0 %v545
        %591 = vmatprep.subr.mxu0 0.0
        %592 = vmatpush1.msra.mxu0 %v544
        %593 = vmatprep.subr.mxu0 0.0
        %594 = vmatpush1.msra.mxu0 %v543
        %595 = vmatprep.subr.mxu0 0.0
        %596 = vmatpush2.msra.mxu0 0.0
        %597 = vmatprep.subr.mxu0 0.0
        %598 = vmatpush2.msra.mxu0 0.0
        %599 = vmatprep.subr.mxu0 0.0
        %600 = vmatpush2.msra.mxu0 0.0
        %601 = vmatprep.subr.mxu0 0.0
        %602 = vmatpush2.msra.mxu0 0.0
        %603 = vmatprep.subr.mxu0 0.0
        %604 = vmatpush2.msra.mxu0 0.0
        %605 = vmatprep.subr.mxu0 0.0
        %606 = vmatpush2.msra.mxu0 0.0
        %607 = vmatprep.subr.mxu0 0.0
        %608 = vmatpush2.msra.mxu0 0.0
        %609 = vmatprep.subr.mxu0 0.0
        %610 = vmatpush2.msra.mxu0 0.0
        %611 = vmatprep.subr.mxu0 0.0
        %612 = vmatpush2.msra.mxu0 0.0
        %613 = vmatprep.subr.mxu0 0.0
        %614 = vmatpush2.msra.mxu0 0.0
        %615 = vmatprep.subr.mxu0 0.0
        %616 = vmatpush2.msra.mxu0 0.0
        %617 = vmatprep.subr.mxu0 0.0
        %618 = vmatpush2.msra.mxu0 0.0
        %619 = vmatprep.subr.mxu0 0.0
        %620 = vmatpush2.msra.mxu0 0.0
        %621 = vmatprep.subr.mxu0 0.0
        %622 = vmatpush2.msra.mxu0 0.0
        %623 = vmatprep.subr.mxu0 0.0
        %624 = vmatpush2.msra.mxu0 0.0
        %625 = vmatprep.subr.mxu0 0.0
        %626 = vmatpush2.msra.mxu0 0.0
        %627 = vmatprep.mubr.f32.mxu0 0.0
        %628 = vmatmul.mubr.f32.gmra.mxu0 %v473
        %v629 = vpop.f32.mrf.mxu0
        %v630 = vadd.f32 0.0, %v629
        %v631 = vpop.f32.mrf.mxu0
        %632 = vdwg.mxu0
        %633 = vmatprep.subr.mxu0 0.0
        %634 = vmatpush1.msra.mxu0 %v558
        %635 = vmatprep.subr.mxu0 0.0
        %636 = vmatpush1.msra.mxu0 %v557
        %637 = vmatprep.subr.mxu0 0.0
        %638 = vmatpush1.msra.mxu0 %v556
        %639 = vmatprep.subr.mxu0 0.0
        %640 = vmatpush1.msra.mxu0 %v555
        %641 = vmatprep.subr.mxu0 0.0
        %642 = vmatpush1.msra.mxu0 %v554
        %643 = vmatprep.subr.mxu0 0.0
        %644 = vmatpush1.msra.mxu0 %v553
        %645 = vmatprep.subr.mxu0 0.0
        %646 = vmatpush1.msra.mxu0 %v552
        %647 = vmatprep.subr.mxu0 0.0
        %648 = vmatpush1.msra.mxu0 %v551
        %649 = vmatprep.subr.mxu0 0.0
        %650 = vmatpush1.msra.mxu0 %v550
        %651 = vmatprep.subr.mxu0 0.0
        %652 = vmatpush1.msra.mxu0 %v549
        %653 = vmatprep.subr.mxu0 0.0
        %654 = vmatpush1.msra.mxu0 %v548
        %655 = vmatprep.subr.mxu0 0.0
        %656 = vmatpush1.msra.mxu0 %v547
        %657 = vmatprep.subr.mxu0 0.0
        %658 = vmatpush1.msra.mxu0 %v546
        %659 = vmatprep.subr.mxu0 0.0
        %660 = vmatpush1.msra.mxu0 %v545
        %661 = vmatprep.subr.mxu0 0.0
        %662 = vmatpush1.msra.mxu0 %v544
        %663 = vmatprep.subr.mxu0 0.0
        %664 = vmatpush1.msra.mxu0 %v543
        %665 = vmatprep.subr.mxu0 0.0
        %666 = vmatpush2.msra.mxu0 0.0
        %667 = vmatprep.subr.mxu0 0.0
        %668 = vmatpush2.msra.mxu0 0.0
        %669 = vmatprep.subr.mxu0 0.0
        %670 = vmatpush2.msra.mxu0 0.0
        %671 = vmatprep.subr.mxu0 0.0
        %672 = vmatpush2.msra.mxu0 0.0
        %673 = vmatprep.subr.mxu0 0.0
        %674 = vmatpush2.msra.mxu0 0.0
        %675 = vmatprep.subr.mxu0 0.0
        %676 = vmatpush2.msra.mxu0 0.0
        %677 = vmatprep.subr.mxu0 0.0
        %678 = vmatpush2.msra.mxu0 0.0
        %679 = vmatprep.subr.mxu0 0.0
        %680 = vmatpush2.msra.mxu0 0.0
        %681 = vmatprep.subr.mxu0 0.0
        %682 = vmatpush2.msra.mxu0 0.0
        %683 = vmatprep.subr.mxu0 0.0
        %684 = vmatpush2.msra.mxu0 0.0
        %685 = vmatprep.subr.mxu0 0.0
        %686 = vmatpush2.msra.mxu0 0.0
        %687 = vmatprep.subr.mxu0 0.0
        %688 = vmatpush2.msra.mxu0 0.0
        %689 = vmatprep.subr.mxu0 0.0
        %690 = vmatpush2.msra.mxu0 0.0
        %691 = vmatprep.subr.mxu0 0.0
        %692 = vmatpush2.msra.mxu0 0.0
        %693 = vmatprep.subr.mxu0 0.0
        %694 = vmatpush2.msra.mxu0 0.0
        %695 = vmatprep.subr.mxu0 0.0
        %696 = vmatpush2.msra.mxu0 0.0
        %697 = vmatprep.mubr.f32.mxu0 0.0
        %698 = vmatmul.mubr.f32.gmra.mxu0 %v542
        %v699 = vpop.f32.mrf.mxu0
        %v700 = vadd.f32 0.0, %v699
        %v701 = vpop.f32.mrf.mxu0
        %702 = vdwg.mxu0
        %v703 = vmul.f32 %v630, 0.0009765625
        %v704 = vmul.f32 %v700, 0.0009765625
        %v705 = vmul.f32 %v703, %v703
        %v706 = vsub.f32 %v704, %v705
        %v707 = vadd.f32 %v706, 1e-05
        %v708 = vrsqrt.pop %v707
        %vm709 = vcmask 261120
        %v711 = vsel %vm709, %v703, 0
        %713 = vmatprep.subr.mxu0 0.0
        %714 = vmatpush1.msra.mxu0 0.0
        %715 = vmatprep.subr.mxu0 0.0
        %716 = vmatpush1.msra.mxu0 0.0
        %717 = vmatprep.subr.mxu0 0.0
        %718 = vmatpush1.msra.mxu0 0.0
        %719 = vmatprep.subr.mxu0 0.0
        %720 = vmatpush1.msra.mxu0 0.0
        %721 = vmatprep.subr.mxu0 0.0
        %722 = vmatpush1.msra.mxu0 0.0
        %723 = vmatprep.subr.mxu0 0.0
        %724 = vmatpush1.msra.mxu0 0.0
        %725 = vmatprep.subr.mxu0 0.0
        %726 = vmatpush1.msra.mxu0 0.0
        %727 = vmatprep.subr.mxu0 0.0
        %728 = vmatpush1.msra.mxu0 0.0
        %729 = vmatprep.subr.mxu0 0.0
        %730 = vmatpush1.msra.mxu0 0.0
        %731 = vmatprep.subr.mxu0 0.0
        %732 = vmatpush1.msra.mxu0 0.0
        %733 = vmatprep.subr.mxu0 0.0
        %734 = vmatpush1.msra.mxu0 0.0
        %735 = vmatprep.subr.mxu0 0.0
        %736 = vmatpush1.msra.mxu0 0.0
        %737 = vmatprep.subr.mxu0 0.0
        %738 = vmatpush1.msra.mxu0 %v562
        %739 = vmatprep.subr.mxu0 0.0
        %740 = vmatpush1.msra.mxu0 %v561
        %741 = vmatprep.subr.mxu0 0.0
        %742 = vmatpush1.msra.mxu0 %v560
        %743 = vmatprep.subr.mxu0 0.0
        %744 = vmatpush1.msra.mxu0 %v559
        %745 = vmatprep.subr.mxu0 0.0
        %746 = vmatpush2.msra.mxu0 0.0
        %747 = vmatprep.subr.mxu0 0.0
        %748 = vmatpush2.msra.mxu0 0.0
        %749 = vmatprep.subr.mxu0 0.0
        %750 = vmatpush2.msra.mxu0 0.0
        %751 = vmatprep.subr.mxu0 0.0
        %752 = vmatpush2.msra.mxu0 0.0
        %753 = vmatprep.subr.mxu0 0.0
        %754 = vmatpush2.msra.mxu0 0.0
        %755 = vmatprep.subr.mxu0 0.0
        %756 = vmatpush2.msra.mxu0 0.0
        %757 = vmatprep.subr.mxu0 0.0
        %758 = vmatpush2.msra.mxu0 0.0
        %759 = vmatprep.subr.mxu0 0.0
        %760 = vmatpush2.msra.mxu0 0.0
        %761 = vmatprep.subr.mxu0 0.0
        %762 = vmatpush2.msra.mxu0 0.0
        %763 = vmatprep.subr.mxu0 0.0
        %764 = vmatpush2.msra.mxu0 0.0
        %765 = vmatprep.subr.mxu0 0.0
        %766 = vmatpush2.msra.mxu0 0.0
        %767 = vmatprep.subr.mxu0 0.0
        %768 = vmatpush2.msra.mxu0 0.0
        %769 = vmatprep.subr.mxu0 0.0
        %770 = vmatpush2.msra.mxu0 0.0
        %771 = vmatprep.subr.mxu0 0.0
        %772 = vmatpush2.msra.mxu0 0.0
        %773 = vmatprep.subr.mxu0 0.0
        %774 = vmatpush2.msra.mxu0 0.0
        %775 = vmatprep.subr.mxu0 0.0
        %776 = vmatpush2.msra.mxu0 0.0
        %777 = vmatprep.mubr.f32.mxu0 0.0
        %778 = vmatmul.mubr.f32.gmra.mxu0 %v711
        %v779 = vpop.f32.mrf.mxu0
        %v780 = vadd.f32 0.0, %v779
        %v781 = vpop.f32.mrf.mxu0
        %782 = vdwg.mxu0
        %v784 = vsel %vm709, %v708, 0
        %786 = vmatprep.subr.mxu0 0.0
        %787 = vmatpush1.msra.mxu0 0.0
        %788 = vmatprep.subr.mxu0 0.0
        %789 = vmatpush1.msra.mxu0 0.0
        %790 = vmatprep.subr.mxu0 0.0
        %791 = vmatpush1.msra.mxu0 0.0
        %792 = vmatprep.subr.mxu0 0.0
        %793 = vmatpush1.msra.mxu0 0.0
        %794 = vmatprep.subr.mxu0 0.0
        %795 = vmatpush1.msra.mxu0 0.0
        %796 = vmatprep.subr.mxu0 0.0
        %797 = vmatpush1.msra.mxu0 0.0
        %798 = vmatprep.subr.mxu0 0.0
        %799 = vmatpush1.msra.mxu0 0.0
        %800 = vmatprep.subr.mxu0 0.0
        %801 = vmatpush1.msra.mxu0 0.0
        %802 = vmatprep.subr.mxu0 0.0
        %803 = vmatpush1.msra.mxu0 0.0
        %804 = vmatprep.subr.mxu0 0.0
        %805 = vmatpush1.msra.mxu0 0.0
        %806 = vmatprep.subr.mxu0 0.0
        %807 = vmatpush1.msra.mxu0 0.0
        %808 = vmatprep.subr.mxu0 0.0
        %809 = vmatpush1.msra.mxu0 0.0
        %810 = vmatprep.subr.mxu0 0.0
        %811 = vmatpush1.msra.mxu0 %v562
        %812 = vmatprep.subr.mxu0 0.0
        %813 = vmatpush1.msra.mxu0 %v561
        %814 = vmatprep.subr.mxu0 0.0
        %815 = vmatpush1.msra.mxu0 %v560
        %816 = vmatprep.subr.mxu0 0.0
        %817 = vmatpush1.msra.mxu0 %v559
        %818 = vmatprep.subr.mxu0 0.0
        %819 = vmatpush2.msra.mxu0 0.0
        %820 = vmatprep.subr.mxu0 0.0
        %821 = vmatpush2.msra.mxu0 0.0
        %822 = vmatprep.subr.mxu0 0.0
        %823 = vmatpush2.msra.mxu0 0.0
        %824 = vmatprep.subr.mxu0 0.0
        %825 = vmatpush2.msra.mxu0 0.0
        %826 = vmatprep.subr.mxu0 0.0
        %827 = vmatpush2.msra.mxu0 0.0
        %828 = vmatprep.subr.mxu0 0.0
        %829 = vmatpush2.msra.mxu0 0.0
        %830 = vmatprep.subr.mxu0 0.0
        %831 = vmatpush2.msra.mxu0 0.0
        %832 = vmatprep.subr.mxu0 0.0
        %833 = vmatpush2.msra.mxu0 0.0
        %834 = vmatprep.subr.mxu0 0.0
        %835 = vmatpush2.msra.mxu0 0.0
        %836 = vmatprep.subr.mxu0 0.0
        %837 = vmatpush2.msra.mxu0 0.0
        %838 = vmatprep.subr.mxu0 0.0
        %839 = vmatpush2.msra.mxu0 0.0
        %840 = vmatprep.subr.mxu0 0.0
        %841 = vmatpush2.msra.mxu0 0.0
        %842 = vmatprep.subr.mxu0 0.0
        %843 = vmatpush2.msra.mxu0 0.0
        %844 = vmatprep.subr.mxu0 0.0
        %845 = vmatpush2.msra.mxu0 0.0
        %846 = vmatprep.subr.mxu0 0.0
        %847 = vmatpush2.msra.mxu0 0.0
        %848 = vmatprep.subr.mxu0 0.0
        %849 = vmatpush2.msra.mxu0 0.0
        %850 = vmatprep.mubr.f32.mxu0 0.0
        %851 = vmatmul.mubr.f32.gmra.mxu0 %v784
        %v852 = vpop.f32.mrf.mxu0
        %v853 = vadd.f32 0.0, %v852
        %v854 = vpop.f32.mrf.mxu0
        %855 = vdwg.mxu0
        %v856 = vld [vmem:[%s1] sm:$0x1]
        %v857 = vmul.f32 %v853, %v856
        %v858 = vld [vmem:[%s2] sm:$0x1]
        %v859 = vmul.f32 %v780, %v857
        %v860 = vsub.f32 %v858, %v859
        %v861 = vlaneseq
        %v862 = vshrl.u32 %v861, 7
        %v863 = vsub.s32 0, %v862
        %v864 = vrot.slane %v857, %v863
        %v865 = vmul.f32 %v405, %v864
        %v866 = vmul.f32 %v406, %v864
        %v867 = vmul.f32 %v407, %v864
        %v868 = vmul.f32 %v408, %v864
        %v869 = vmul.f32 %v409, %v864
        %v870 = vmul.f32 %v410, %v864
        %v871 = vmul.f32 %v411, %v864
        %v872 = vmul.f32 %v412, %v864
        %v873 = vmul.f32 %v413, %v864
        %v874 = vmul.f32 %v414, %v864
        %v875 = vmul.f32 %v415, %v864
        %v876 = vmul.f32 %v416, %v864
        %v877 = vmul.f32 %v417, %v864
        %v878 = vmul.f32 %v418, %v864
        %v879 = vmul.f32 %v419, %v864
        %v880 = vmul.f32 %v420, %v864
        %v881 = vmul.f32 %v421, %v864
        %v882 = vmul.f32 %v422, %v864
        %v883 = vmul.f32 %v423, %v864
        %v884 = vmul.f32 %v424, %v864
        %v885 = vmul.f32 %v425, %v864
        %v886 = vmul.f32 %v426, %v864
        %v887 = vmul.f32 %v427, %v864
        %v888 = vmul.f32 %v428, %v864
        %v889 = vmul.f32 %v429, %v864
        %v890 = vmul.f32 %v430, %v864
        %v891 = vmul.f32 %v431, %v864
        %v892 = vmul.f32 %v432, %v864
        %v893 = vmul.f32 %v433, %v864
        %v894 = vmul.f32 %v434, %v864
        %v895 = vmul.f32 %v435, %v864
        %v896 = vmul.f32 %v436, %v864
        %v898 = vlaneseq
        %v899 = vshrl.u32 %v898, 7
        %v900 = vsub.s32 0, %v899
        %v901 = vrot.slane %v860, %v900
        %v903 = vadd.f32 %v865, %v901
        %v904 = vadd.f32 %v866, %v901
        %v905 = vadd.f32 %v867, %v901
        %v906 = vadd.f32 %v868, %v901
        %v907 = vadd.f32 %v869, %v901
        %v908 = vadd.f32 %v870, %v901
        %v909 = vadd.f32 %v871, %v901
        %v910 = vadd.f32 %v872, %v901
        %v911 = vadd.f32 %v873, %v901
        %v912 = vadd.f32 %v874, %v901
        %v913 = vadd.f32 %v875, %v901
        %v914 = vadd.f32 %v876, %v901
        %v915 = vadd.f32 %v877, %v901
        %v916 = vadd.f32 %v878, %v901
        %v917 = vadd.f32 %v879, %v901
        %v918 = vadd.f32 %v880, %v901
        %v919 = vadd.f32 %v881, %v901
        %v920 = vadd.f32 %v882, %v901
        %v921 = vadd.f32 %v883, %v901
        %v922 = vadd.f32 %v884, %v901
        %v923 = vadd.f32 %v885, %v901
        %v924 = vadd.f32 %v886, %v901
        %v925 = vadd.f32 %v887, %v901
        %v926 = vadd.f32 %v888, %v901
        %v927 = vadd.f32 %v889, %v901
        %v928 = vadd.f32 %v890, %v901
        %v929 = vadd.f32 %v891, %v901
        %v930 = vadd.f32 %v892, %v901
        %v931 = vadd.f32 %v893, %v901
        %v932 = vadd.f32 %v894, %v901
        %v933 = vadd.f32 %v895, %v901
        %v934 = vadd.f32 %v896, %v901
        %v935 = vmul.f32 %v903, 0.5
        %v936 = vmul.f32 %v904, 0.5
        %v937 = vmul.f32 %v905, 0.5
        %v938 = vmul.f32 %v906, 0.5
        %v939 = vmul.f32 %v907, 0.5
        %v940 = vmul.f32 %v908, 0.5
        %v941 = vmul.f32 %v909, 0.5
        %v942 = vmul.f32 %v910, 0.5
        %v943 = vmul.f32 %v911, 0.5
        %v944 = vmul.f32 %v912, 0.5
        %v945 = vmul.f32 %v913, 0.5
        %v946 = vmul.f32 %v914, 0.5
        %v947 = vmul.f32 %v915, 0.5
        %v948 = vmul.f32 %v916, 0.5
        %v949 = vmul.f32 %v917, 0.5
        %v950 = vmul.f32 %v918, 0.5
        %v951 = vmul.f32 %v919, 0.5
        %v952 = vmul.f32 %v920, 0.5
        %v953 = vmul.f32 %v921, 0.5
        %v954 = vmul.f32 %v922, 0.5
        %v955 = vmul.f32 %v923, 0.5
        %v956 = vmul.f32 %v924, 0.5
        %v957 = vmul.f32 %v925, 0.5
        %v958 = vmul.f32 %v926, 0.5
        %v959 = vmul.f32 %v927, 0.5
        %v960 = vmul.f32 %v928, 0.5
        %v961 = vmul.f32 %v929, 0.5
        %v962 = vmul.f32 %v930, 0.5
        %v963 = vmul.f32 %v931, 0.5
        %v964 = vmul.f32 %v932, 0.5
        %v965 = vmul.f32 %v933, 0.5
        %v966 = vmul.f32 %v934, 0.5
        %v967 = vmul.f32 %v903, 0.70710677
        %v968 = vmul.f32 %v904, 0.70710677
        %v969 = vmul.f32 %v905, 0.70710677
        %v970 = vmul.f32 %v906, 0.70710677
        %v971 = vmul.f32 %v907, 0.70710677
        %v972 = vmul.f32 %v908, 0.70710677
        %v973 = vmul.f32 %v909, 0.70710677
        %v974 = vmul.f32 %v910, 0.70710677
        %v975 = vmul.f32 %v911, 0.70710677
        %v976 = vmul.f32 %v912, 0.70710677
        %v977 = vmul.f32 %v913, 0.70710677
        %v978 = vmul.f32 %v914, 0.70710677
        %v979 = vmul.f32 %v915, 0.70710677
        %v980 = vmul.f32 %v916, 0.70710677
        %v981 = vmul.f32 %v917, 0.70710677
        %v982 = vmul.f32 %v918, 0.70710677
        %v983 = vmul.f32 %v919, 0.70710677
        %v984 = vmul.f32 %v920, 0.70710677
        %v985 = vmul.f32 %v921, 0.70710677
        %v986 = vmul.f32 %v922, 0.70710677
        %v987 = vmul.f32 %v923, 0.70710677
        %v988 = vmul.f32 %v924, 0.70710677
        %v989 = vmul.f32 %v925, 0.70710677
        %v990 = vmul.f32 %v926, 0.70710677
        %v991 = vmul.f32 %v927, 0.70710677
        %v992 = vmul.f32 %v928, 0.70710677
        %v993 = vmul.f32 %v929, 0.70710677
        %v994 = vmul.f32 %v930, 0.70710677
        %v995 = vmul.f32 %v931, 0.70710677
        %v996 = vmul.f32 %v932, 0.70710677
        %v997 = vmul.f32 %v933, 0.70710677
        %v998 = vmul.f32 %v934, 0.70710677
        %v999 = verf.f32.pop %v967
        %v1000 = verf.f32.pop %v968
        %v1001 = verf.f32.pop %v969
        %v1002 = verf.f32.pop %v970
        %v1003 = verf.f32.pop %v971
        %v1004 = verf.f32.pop %v972
        %v1005 = verf.f32.pop %v973
        %v1006 = verf.f32.pop %v974
        %v1007 = verf.f32.pop %v975
        %v1008 = verf.f32.pop %v976
        %v1009 = verf.f32.pop %v977
        %v1010 = verf.f32.pop %v978
        %v1011 = verf.f32.pop %v979
        %v1012 = verf.f32.pop %v980
        %v1013 = verf.f32.pop %v981
        %v1014 = verf.f32.pop %v982
        %v1015 = verf.f32.pop %v983
        %v1016 = verf.f32.pop %v984
        %v1017 = verf.f32.pop %v985
        %v1018 = verf.f32.pop %v986
        %v1019 = verf.f32.pop %v987
        %v1020 = verf.f32.pop %v988
        %v1021 = verf.f32.pop %v989
        %v1022 = verf.f32.pop %v990
        %v1023 = verf.f32.pop %v991
        %v1024 = verf.f32.pop %v992
        %v1025 = verf.f32.pop %v993
        %v1026 = verf.f32.pop %v994
        %v1027 = verf.f32.pop %v995
        %v1028 = verf.f32.pop %v996
        %v1029 = verf.f32.pop %v997
        %v1030 = verf.f32.pop %v998
        %v1031 = vadd.f32 %v999, 1.0
        %v1032 = vadd.f32 %v1000, 1.0
        %v1033 = vadd.f32 %v1001, 1.0
        %v1034 = vadd.f32 %v1002, 1.0
        %v1035 = vadd.f32 %v1003, 1.0
        %v1036 = vadd.f32 %v1004, 1.0
        %v1037 = vadd.f32 %v1005, 1.0
        %v1038 = vadd.f32 %v1006, 1.0
        %v1039 = vadd.f32 %v1007, 1.0
        %v1040 = vadd.f32 %v1008, 1.0
        %v1041 = vadd.f32 %v1009, 1.0
        %v1042 = vadd.f32 %v1010, 1.0
        %v1043 = vadd.f32 %v1011, 1.0
        %v1044 = vadd.f32 %v1012, 1.0
        %v1045 = vadd.f32 %v1013, 1.0
        %v1046 = vadd.f32 %v1014, 1.0
        %v1047 = vadd.f32 %v1015, 1.0
        %v1048 = vadd.f32 %v1016, 1.0
        %v1049 = vadd.f32 %v1017, 1.0
        %v1050 = vadd.f32 %v1018, 1.0
        %v1051 = vadd.f32 %v1019, 1.0
        %v1052 = vadd.f32 %v1020, 1.0
        %v1053 = vadd.f32 %v1021, 1.0
        %v1054 = vadd.f32 %v1022, 1.0
        %v1055 = vadd.f32 %v1023, 1.0
        %v1056 = vadd.f32 %v1024, 1.0
        %v1057 = vadd.f32 %v1025, 1.0
        %v1058 = vadd.f32 %v1026, 1.0
        %v1059 = vadd.f32 %v1027, 1.0
        %v1060 = vadd.f32 %v1028, 1.0
        %v1061 = vadd.f32 %v1029, 1.0
        %v1062 = vadd.f32 %v1030, 1.0
        %v1063 = vmul.f32 %v935, %v1031
        %v1064 = vmul.f32 %v936, %v1032
        %v1065 = vmul.f32 %v937, %v1033
        %v1066 = vmul.f32 %v938, %v1034
        %v1067 = vmul.f32 %v939, %v1035
        %v1068 = vmul.f32 %v940, %v1036
        %v1069 = vmul.f32 %v941, %v1037
        %v1070 = vmul.f32 %v942, %v1038
        %v1071 = vmul.f32 %v943, %v1039
        %v1072 = vmul.f32 %v944, %v1040
        %v1073 = vmul.f32 %v945, %v1041
        %v1074 = vmul.f32 %v946, %v1042
        %v1075 = vmul.f32 %v947, %v1043
        %v1076 = vmul.f32 %v948, %v1044
        %v1077 = vmul.f32 %v949, %v1045
        %v1078 = vmul.f32 %v950, %v1046
        %v1079 = vmul.f32 %v951, %v1047
        %v1080 = vmul.f32 %v952, %v1048
        %v1081 = vmul.f32 %v953, %v1049
        %v1082 = vmul.f32 %v954, %v1050
        %v1083 = vmul.f32 %v955, %v1051
        %v1084 = vmul.f32 %v956, %v1052
        %v1085 = vmul.f32 %v957, %v1053
        %v1086 = vmul.f32 %v958, %v1054
        %v1087 = vmul.f32 %v959, %v1055
        %v1088 = vmul.f32 %v960, %v1056
        %v1089 = vmul.f32 %v961, %v1057
        %v1090 = vmul.f32 %v962, %v1058
        %v1091 = vmul.f32 %v963, %v1059
        %v1092 = vmul.f32 %v964, %v1060
        %v1093 = vmul.f32 %v965, %v1061
        %v1094 = vmul.f32 %v966, %v1062
        %1095 = vst [vmem:[#allocation2] sm:$0x3] 0.0
        %1096 = vst [vmem:[#allocation2 + $0x18] sm:$0x3] 0.0
        %1097 = vst [vmem:[#allocation2 + $0x30] sm:$0x3] 0.0
        %1098 = vst [vmem:[#allocation2 + $0x48] sm:$0x3] 0.0
        %1099 = vst [vmem:[#allocation2 + $0x60] sm:$0x3] 0.0
        %1100 = vst [vmem:[#allocation2 + $0x78] sm:$0x3] 0.0
        %1101 = vst [vmem:[#allocation2 + $0x90] sm:$0x3] 0.0
        %1102 = vst [vmem:[#allocation2 + $0xa8] sm:$0x3] 0.0
        %1103 = vst [vmem:[#allocation2 + $0xc0] sm:$0x3] 0.0
        %1104 = vst [vmem:[#allocation2 + $0xd8] sm:$0x3] 0.0
        %1105 = vst [vmem:[#allocation2 + $0xf0] sm:$0x3] 0.0
        %1106 = vst [vmem:[#allocation2 + $0x108] sm:$0x3] 0.0
        %1107 = vst [vmem:[#allocation2 + $0x120] sm:$0x3] 0.0
        %1108 = vst [vmem:[#allocation2 + $0x138] sm:$0x3] 0.0
        %1109 = vst [vmem:[#allocation2 + $0x150] sm:$0x3] 0.0
        %1110 = vst [vmem:[#allocation2 + $0x168] sm:$0x3] 0.0
        %1111 = vst [vmem:[#allocation2 + $0x12] sm:$0x3] 0.0
        %1112 = vst [vmem:[#allocation2 + $0x2a] sm:$0x3] 0.0
        %1113 = vst [vmem:[#allocation2 + $0x42] sm:$0x3] 0.0
        %1114 = vst [vmem:[#allocation2 + $0x5a] sm:$0x3] 0.0
        %1115 = vst [vmem:[#allocation2 + $0x72] sm:$0x3] 0.0
        %1116 = vst [vmem:[#allocation2 + $0x8a] sm:$0x3] 0.0
        %1117 = vst [vmem:[#allocation2 + $0xa2] sm:$0x3] 0.0
        %1118 = vst [vmem:[#allocation2 + $0xba] sm:$0x3] 0.0
        %1119 = vst [vmem:[#allocation2 + $0xd2] sm:$0x3] 0.0
        %1120 = vst [vmem:[#allocation2 + $0xea] sm:$0x3] 0.0
        %1121 = vst [vmem:[#allocation2 + $0x102] sm:$0x3] 0.0
        %1122 = vst [vmem:[#allocation2 + $0x11a] sm:$0x3] 0.0
        %1123 = vst [vmem:[#allocation2 + $0x132] sm:$0x3] 0.0
        %1124 = vst [vmem:[#allocation2 + $0x14a] sm:$0x3] 0.0
        %1125 = vst [vmem:[#allocation2 + $0x162] sm:$0x3] 0.0
        %1126 = vst [vmem:[#allocation2 + $0x17a] sm:$0x3] 0.0
        %1127 = vst [vmem:[#allocation2 + $0x2] sm:$0xff] %v1063
        %1128 = vst [vmem:[#allocation2 + $0xa] sm:$0xff] %v1064
        %1129 = vst [vmem:[#allocation2 + $0x1a] sm:$0xff] %v1065
        %1130 = vst [vmem:[#allocation2 + $0x22] sm:$0xff] %v1066
        %1131 = vst [vmem:[#allocation2 + $0x32] sm:$0xff] %v1067
        %1132 = vst [vmem:[#allocation2 + $0x3a] sm:$0xff] %v1068
        %1133 = vst [vmem:[#allocation2 + $0x4a] sm:$0xff] %v1069
        %1134 = vst [vmem:[#allocation2 + $0x52] sm:$0xff] %v1070
        %1135 = vst [vmem:[#allocation2 + $0x62] sm:$0xff] %v1071
        %1136 = vst [vmem:[#allocation2 + $0x6a] sm:$0xff] %v1072
        %1137 = vst [vmem:[#allocation2 + $0x7a] sm:$0xff] %v1073
        %1138 = vst [vmem:[#allocation2 + $0x82] sm:$0xff] %v1074
        %1139 = vst [vmem:[#allocation2 + $0x92] sm:$0xff] %v1075
        %1140 = vst [vmem:[#allocation2 + $0x9a] sm:$0xff] %v1076
        %1141 = vst [vmem:[#allocation2 + $0xaa] sm:$0xff] %v1077
        %1142 = vst [vmem:[#allocation2 + $0xb2] sm:$0xff] %v1078
        %1143 = vst [vmem:[#allocation2 + $0xc2] sm:$0xff] %v1079
        %1144 = vst [vmem:[#allocation2 + $0xca] sm:$0xff] %v1080
        %1145 = vst [vmem:[#allocation2 + $0xda] sm:$0xff] %v1081
        %1146 = vst [vmem:[#allocation2 + $0xe2] sm:$0xff] %v1082
        %1147 = vst [vmem:[#allocation2 + $0xf2] sm:$0xff] %v1083
        %1148 = vst [vmem:[#allocation2 + $0xfa] sm:$0xff] %v1084
        %1149 = vst [vmem:[#allocation2 + $0x10a] sm:$0xff] %v1085
        %1150 = vst [vmem:[#allocation2 + $0x112] sm:$0xff] %v1086
        %1151 = vst [vmem:[#allocation2 + $0x122] sm:$0xff] %v1087
        %1152 = vst [vmem:[#allocation2 + $0x12a] sm:$0xff] %v1088
        %1153 = vst [vmem:[#allocation2 + $0x13a] sm:$0xff] %v1089
        %1154 = vst [vmem:[#allocation2 + $0x142] sm:$0xff] %v1090
        %1155 = vst [vmem:[#allocation2 + $0x152] sm:$0xff] %v1091
        %1156 = vst [vmem:[#allocation2 + $0x15a] sm:$0xff] %v1092
        %1157 = vst [vmem:[#allocation2 + $0x16a] sm:$0xff] %v1093
        %1158 = vst [vmem:[#allocation2 + $0x172] sm:$0xff] %v1094
        %v1159 = vld [vmem:[#allocation2] sm:$0xff]
        %v1160 = vld [vmem:[#allocation2 + $0x8] sm:$0xff]
        %v1161 = vld [vmem:[#allocation2 + $0x18] sm:$0xff]
        %v1162 = vld [vmem:[#allocation2 + $0x20] sm:$0xff]
        %v1163 = vld [vmem:[#allocation2 + $0x30] sm:$0xff]
        %v1164 = vld [vmem:[#allocation2 + $0x38] sm:$0xff]
        %v1165 = vld [vmem:[#allocation2 + $0x48] sm:$0xff]
        %v1166 = vld [vmem:[#allocation2 + $0x50] sm:$0xff]
        %v1167 = vld [vmem:[#allocation2 + $0x60] sm:$0xff]
        %v1168 = vld [vmem:[#allocation2 + $0x68] sm:$0xff]
        %v1169 = vld [vmem:[#allocation2 + $0x78] sm:$0xff]
        %v1170 = vld [vmem:[#allocation2 + $0x80] sm:$0xff]
        %v1171 = vld [vmem:[#allocation2 + $0x90] sm:$0xff]
        %v1172 = vld [vmem:[#allocation2 + $0x98] sm:$0xff]
        %v1173 = vld [vmem:[#allocation2 + $0xa8] sm:$0xff]
        %v1174 = vld [vmem:[#allocation2 + $0xb0] sm:$0xff]
        %v1175 = vld [vmem:[#allocation2 + $0xc0] sm:$0xff]
        %v1176 = vld [vmem:[#allocation2 + $0xc8] sm:$0xff]
        %v1177 = vld [vmem:[#allocation2 + $0xd8] sm:$0xff]
        %v1178 = vld [vmem:[#allocation2 + $0xe0] sm:$0xff]
        %v1179 = vld [vmem:[#allocation2 + $0xf0] sm:$0xff]
        %v1180 = vld [vmem:[#allocation2 + $0xf8] sm:$0xff]
        %v1181 = vld [vmem:[#allocation2 + $0x108] sm:$0xff]
        %v1182 = vld [vmem:[#allocation2 + $0x110] sm:$0xff]
        %v1183 = vld [vmem:[#allocation2 + $0x120] sm:$0xff]
        %v1184 = vld [vmem:[#allocation2 + $0x128] sm:$0xff]
        %v1185 = vld [vmem:[#allocation2 + $0x138] sm:$0xff]
        %v1186 = vld [vmem:[#allocation2 + $0x140] sm:$0xff]
        %v1187 = vld [vmem:[#allocation2 + $0x150] sm:$0xff]
        %v1188 = vld [vmem:[#allocation2 + $0x158] sm:$0xff]
        %v1189 = vld [vmem:[#allocation2 + $0x168] sm:$0xff]
        %v1190 = vld [vmem:[#allocation2 + $0x170] sm:$0xff]
        %1191 = vst [vmem:[#allocation3] sm:$0xff] %v1159
        %1192 = vst [vmem:[#allocation3 + $0x8] sm:$0xff] %v1160
        %1193 = vst [vmem:[#allocation3 + $0x10] sm:$0xff] %v1161
        %1194 = vst [vmem:[#allocation3 + $0x18] sm:$0xff] %v1162
        %1195 = vst [vmem:[#allocation3 + $0x20] sm:$0xff] %v1163
        %1196 = vst [vmem:[#allocation3 + $0x28] sm:$0xff] %v1164
        %1197 = vst [vmem:[#allocation3 + $0x30] sm:$0xff] %v1165
        %1198 = vst [vmem:[#allocation3 + $0x38] sm:$0xff] %v1166
        %1199 = vst [vmem:[#allocation3 + $0x40] sm:$0xff] %v1167
        %1200 = vst [vmem:[#allocation3 + $0x48] sm:$0xff] %v1168
        %1201 = vst [vmem:[#allocation3 + $0x50] sm:$0xff] %v1169
        %1202 = vst [vmem:[#allocation3 + $0x58] sm:$0xff] %v1170
        %1203 = vst [vmem:[#allocation3 + $0x60] sm:$0xff] %v1171
        %1204 = vst [vmem:[#allocation3 + $0x68] sm:$0xff] %v1172
        %1205 = vst [vmem:[#allocation3 + $0x70] sm:$0xff] %v1173
        %1206 = vst [vmem:[#allocation3 + $0x78] sm:$0xff] %v1174
        %1207 = vst [vmem:[#allocation3 + $0x80] sm:$0xff] %v1175
        %1208 = vst [vmem:[#allocation3 + $0x88] sm:$0xff] %v1176
        %1209 = vst [vmem:[#allocation3 + $0x90] sm:$0xff] %v1177
        %1210 = vst [vmem:[#allocation3 + $0x98] sm:$0xff] %v1178
        %1211 = vst [vmem:[#allocation3 + $0xa0] sm:$0xff] %v1179
        %1212 = vst [vmem:[#allocation3 + $0xa8] sm:$0xff] %v1180
        %1213 = vst [vmem:[#allocation3 + $0xb0] sm:$0xff] %v1181
        %1214 = vst [vmem:[#allocation3 + $0xb8] sm:$0xff] %v1182
        %1215 = vst [vmem:[#allocation3 + $0xc0] sm:$0xff] %v1183
        %1216 = vst [vmem:[#allocation3 + $0xc8] sm:$0xff] %v1184
        %1217 = vst [vmem:[#allocation3 + $0xd0] sm:$0xff] %v1185
        %1218 = vst [vmem:[#allocation3 + $0xd8] sm:$0xff] %v1186
        %1219 = vst [vmem:[#allocation3 + $0xe0] sm:$0xff] %v1187
        %1220 = vst [vmem:[#allocation3 + $0xe8] sm:$0xff] %v1188
        %1221 = vst [vmem:[#allocation3 + $0xf0] sm:$0xff] %v1189
        %1222 = vst [vmem:[#allocation3 + $0xf8] sm:$0xff] %v1190
        %v1223 = vld [vmem:[#allocation2 + $0x1] sm:$0xff]
        %v1224 = vld [vmem:[#allocation2 + $0x9] sm:$0xff]
        %v1225 = vld [vmem:[#allocation2 + $0x19] sm:$0xff]
        %v1226 = vld [vmem:[#allocation2 + $0x21] sm:$0xff]
        %v1227 = vld [vmem:[#allocation2 + $0x31] sm:$0xff]
        %v1228 = vld [vmem:[#allocation2 + $0x39] sm:$0xff]
        %v1229 = vld [vmem:[#allocation2 + $0x49] sm:$0xff]
        %v1230 = vld [vmem:[#allocation2 + $0x51] sm:$0xff]
        %v1231 = vld [vmem:[#allocation2 + $0x61] sm:$0xff]
        %v1232 = vld [vmem:[#allocation2 + $0x69] sm:$0xff]
        %v1233 = vld [vmem:[#allocation2 + $0x79] sm:$0xff]
        %v1234 = vld [vmem:[#allocation2 + $0x81] sm:$0xff]
        %v1235 = vld [vmem:[#allocation2 + $0x91] sm:$0xff]
        %v1236 = vld [vmem:[#allocation2 + $0x99] sm:$0xff]
        %v1237 = vld [vmem:[#allocation2 + $0xa9] sm:$0xff]
        %v1238 = vld [vmem:[#allocation2 + $0xb1] sm:$0xff]
        %v1239 = vld [vmem:[#allocation2 + $0xc1] sm:$0xff]
        %v1240 = vld [vmem:[#allocation2 + $0xc9] sm:$0xff]
        %v1241 = vld [vmem:[#allocation2 + $0xd9] sm:$0xff]
        %v1242 = vld [vmem:[#allocation2 + $0xe1] sm:$0xff]
        %v1243 = vld [vmem:[#allocation2 + $0xf1] sm:$0xff]
        %v1244 = vld [vmem:[#allocation2 + $0xf9] sm:$0xff]
        %v1245 = vld [vmem:[#allocation2 + $0x109] sm:$0xff]
        %v1246 = vld [vmem:[#allocation2 + $0x111] sm:$0xff]
        %v1247 = vld [vmem:[#allocation2 + $0x121] sm:$0xff]
        %v1248 = vld [vmem:[#allocation2 + $0x129] sm:$0xff]
        %v1249 = vld [vmem:[#allocation2 + $0x139] sm:$0xff]
        %v1250 = vld [vmem:[#allocation2 + $0x141] sm:$0xff]
        %v1251 = vld [vmem:[#allocation2 + $0x151] sm:$0xff]
        %v1252 = vld [vmem:[#allocation2 + $0x159] sm:$0xff]
        %v1253 = vld [vmem:[#allocation2 + $0x169] sm:$0xff]
        %v1254 = vld [vmem:[#allocation2 + $0x171] sm:$0xff]
        %s1255 = scalar_lea.vmem [#allocation3], 256
        %1256 = vst [vmem:[%s1255] sm:$0xff] %v1223
        %1257 = vst [vmem:[%s1255 + $0x8] sm:$0xff] %v1224
        %1258 = vst [vmem:[%s1255 + $0x10] sm:$0xff] %v1225
        %1259 = vst [vmem:[%s1255 + $0x18] sm:$0xff] %v1226
        %1260 = vst [vmem:[%s1255 + $0x20] sm:$0xff] %v1227
        %1261 = vst [vmem:[%s1255 + $0x28] sm:$0xff] %v1228
        %1262 = vst [vmem:[%s1255 + $0x30] sm:$0xff] %v1229
        %1263 = vst [vmem:[%s1255 + $0x38] sm:$0xff] %v1230
        %1264 = vst [vmem:[%s1255 + $0x40] sm:$0xff] %v1231
        %1265 = vst [vmem:[%s1255 + $0x48] sm:$0xff] %v1232
        %1266 = vst [vmem:[%s1255 + $0x50] sm:$0xff] %v1233
        %1267 = vst [vmem:[%s1255 + $0x58] sm:$0xff] %v1234
        %1268 = vst [vmem:[%s1255 + $0x60] sm:$0xff] %v1235
        %1269 = vst [vmem:[%s1255 + $0x68] sm:$0xff] %v1236
        %1270 = vst [vmem:[%s1255 + $0x70] sm:$0xff] %v1237
        %1271 = vst [vmem:[%s1255 + $0x78] sm:$0xff] %v1238
        %1272 = vst [vmem:[%s1255 + $0x80] sm:$0xff] %v1239
        %1273 = vst [vmem:[%s1255 + $0x88] sm:$0xff] %v1240
        %1274 = vst [vmem:[%s1255 + $0x90] sm:$0xff] %v1241
        %1275 = vst [vmem:[%s1255 + $0x98] sm:$0xff] %v1242
        %1276 = vst [vmem:[%s1255 + $0xa0] sm:$0xff] %v1243
        %1277 = vst [vmem:[%s1255 + $0xa8] sm:$0xff] %v1244
        %1278 = vst [vmem:[%s1255 + $0xb0] sm:$0xff] %v1245
        %1279 = vst [vmem:[%s1255 + $0xb8] sm:$0xff] %v1246
        %1280 = vst [vmem:[%s1255 + $0xc0] sm:$0xff] %v1247
        %1281 = vst [vmem:[%s1255 + $0xc8] sm:$0xff] %v1248
        %1282 = vst [vmem:[%s1255 + $0xd0] sm:$0xff] %v1249
        %1283 = vst [vmem:[%s1255 + $0xd8] sm:$0xff] %v1250
        %1284 = vst [vmem:[%s1255 + $0xe0] sm:$0xff] %v1251
        %1285 = vst [vmem:[%s1255 + $0xe8] sm:$0xff] %v1252
        %1286 = vst [vmem:[%s1255 + $0xf0] sm:$0xff] %v1253
        %1287 = vst [vmem:[%s1255 + $0xf8] sm:$0xff] %v1254
        %v1288 = vld [vmem:[#allocation2 + $0x2] sm:$0xff]
        %v1289 = vld [vmem:[#allocation2 + $0xa] sm:$0xff]
        %v1290 = vld [vmem:[#allocation2 + $0x1a] sm:$0xff]
        %v1291 = vld [vmem:[#allocation2 + $0x22] sm:$0xff]
        %v1292 = vld [vmem:[#allocation2 + $0x32] sm:$0xff]
        %v1293 = vld [vmem:[#allocation2 + $0x3a] sm:$0xff]
        %v1294 = vld [vmem:[#allocation2 + $0x4a] sm:$0xff]
        %v1295 = vld [vmem:[#allocation2 + $0x52] sm:$0xff]
        %v1296 = vld [vmem:[#allocation2 + $0x62] sm:$0xff]
        %v1297 = vld [vmem:[#allocation2 + $0x6a] sm:$0xff]
        %v1298 = vld [vmem:[#allocation2 + $0x7a] sm:$0xff]
        %v1299 = vld [vmem:[#allocation2 + $0x82] sm:$0xff]
        %v1300 = vld [vmem:[#allocation2 + $0x92] sm:$0xff]
        %v1301 = vld [vmem:[#allocation2 + $0x9a] sm:$0xff]
        %v1302 = vld [vmem:[#allocation2 + $0xaa] sm:$0xff]
        %v1303 = vld [vmem:[#allocation2 + $0xb2] sm:$0xff]
        %v1304 = vld [vmem:[#allocation2 + $0xc2] sm:$0xff]
        %v1305 = vld [vmem:[#allocation2 + $0xca] sm:$0xff]
        %v1306 = vld [vmem:[#allocation2 + $0xda] sm:$0xff]
        %v1307 = vld [vmem:[#allocation2 + $0xe2] sm:$0xff]
        %v1308 = vld [vmem:[#allocation2 + $0xf2] sm:$0xff]
        %v1309 = vld [vmem:[#allocation2 + $0xfa] sm:$0xff]
        %v1310 = vld [vmem:[#allocation2 + $0x10a] sm:$0xff]
        %v1311 = vld [vmem:[#allocation2 + $0x112] sm:$0xff]
        %v1312 = vld [vmem:[#allocation2 + $0x122] sm:$0xff]
        %v1313 = vld [vmem:[#allocation2 + $0x12a] sm:$0xff]
        %v1314 = vld [vmem:[#allocation2 + $0x13a] sm:$0xff]
        %v1315 = vld [vmem:[#allocation2 + $0x142] sm:$0xff]
        %v1316 = vld [vmem:[#allocation2 + $0x152] sm:$0xff]
        %v1317 = vld [vmem:[#allocation2 + $0x15a] sm:$0xff]
        %v1318 = vld [vmem:[#allocation2 + $0x16a] sm:$0xff]
        %v1319 = vld [vmem:[#allocation2 + $0x172] sm:$0xff]
        %s1320 = scalar_lea.vmem [#allocation3], 512
        %1321 = vst [vmem:[%s1320] sm:$0xff] %v1288
        %1322 = vst [vmem:[%s1320 + $0x8] sm:$0xff] %v1289
        %1323 = vst [vmem:[%s1320 + $0x10] sm:$0xff] %v1290
        %1324 = vst [vmem:[%s1320 + $0x18] sm:$0xff] %v1291
        %1325 = vst [vmem:[%s1320 + $0x20] sm:$0xff] %v1292
        %1326 = vst [vmem:[%s1320 + $0x28] sm:$0xff] %v1293
        %1327 = vst [vmem:[%s1320 + $0x30] sm:$0xff] %v1294
        %1328 = vst [vmem:[%s1320 + $0x38] sm:$0xff] %v1295
        %1329 = vst [vmem:[%s1320 + $0x40] sm:$0xff] %v1296
        %1330 = vst [vmem:[%s1320 + $0x48] sm:$0xff] %v1297
        %1331 = vst [vmem:[%s1320 + $0x50] sm:$0xff] %v1298
        %1332 = vst [vmem:[%s1320 + $0x58] sm:$0xff] %v1299
        %1333 = vst [vmem:[%s1320 + $0x60] sm:$0xff] %v1300
        %1334 = vst [vmem:[%s1320 + $0x68] sm:$0xff] %v1301
        %1335 = vst [vmem:[%s1320 + $0x70] sm:$0xff] %v1302
        %1336 = vst [vmem:[%s1320 + $0x78] sm:$0xff] %v1303
        %1337 = vst [vmem:[%s1320 + $0x80] sm:$0xff] %v1304
        %1338 = vst [vmem:[%s1320 + $0x88] sm:$0xff] %v1305
        %1339 = vst [vmem:[%s1320 + $0x90] sm:$0xff] %v1306
        %1340 = vst [vmem:[%s1320 + $0x98] sm:$0xff] %v1307
        %1341 = vst [vmem:[%s1320 + $0xa0] sm:$0xff] %v1308
        %1342 = vst [vmem:[%s1320 + $0xa8] sm:$0xff] %v1309
        %1343 = vst [vmem:[%s1320 + $0xb0] sm:$0xff] %v1310
        %1344 = vst [vmem:[%s1320 + $0xb8] sm:$0xff] %v1311
        %1345 = vst [vmem:[%s1320 + $0xc0] sm:$0xff] %v1312
        %1346 = vst [vmem:[%s1320 + $0xc8] sm:$0xff] %v1313
        %1347 = vst [vmem:[%s1320 + $0xd0] sm:$0xff] %v1314
        %1348 = vst [vmem:[%s1320 + $0xd8] sm:$0xff] %v1315
        %1349 = vst [vmem:[%s1320 + $0xe0] sm:$0xff] %v1316
        %1350 = vst [vmem:[%s1320 + $0xe8] sm:$0xff] %v1317
        %1351 = vst [vmem:[%s1320 + $0xf0] sm:$0xff] %v1318
        %1352 = vst [vmem:[%s1320 + $0xf8] sm:$0xff] %v1319
        %v1353 = vld [vmem:[#allocation2 + $0x3] sm:$0xff]
        %v1354 = vld [vmem:[#allocation2 + $0xb] sm:$0xff]
        %v1355 = vld [vmem:[#allocation2 + $0x1b] sm:$0xff]
        %v1356 = vld [vmem:[#allocation2 + $0x23] sm:$0xff]
        %v1357 = vld [vmem:[#allocation2 + $0x33] sm:$0xff]
        %v1358 = vld [vmem:[#allocation2 + $0x3b] sm:$0xff]
        %v1359 = vld [vmem:[#allocation2 + $0x4b] sm:$0xff]
        %v1360 = vld [vmem:[#allocation2 + $0x53] sm:$0xff]
        %v1361 = vld [vmem:[#allocation2 + $0x63] sm:$0xff]
        %v1362 = vld [vmem:[#allocation2 + $0x6b] sm:$0xff]
        %v1363 = vld [vmem:[#allocation2 + $0x7b] sm:$0xff]
        %v1364 = vld [vmem:[#allocation2 + $0x83] sm:$0xff]
        %v1365 = vld [vmem:[#allocation2 + $0x93] sm:$0xff]
        %v1366 = vld [vmem:[#allocation2 + $0x9b] sm:$0xff]
        %v1367 = vld [vmem:[#allocation2 + $0xab] sm:$0xff]
        %v1368 = vld [vmem:[#allocation2 + $0xb3] sm:$0xff]
        %v1369 = vld [vmem:[#allocation2 + $0xc3] sm:$0xff]
        %v1370 = vld [vmem:[#allocation2 + $0xcb] sm:$0xff]
        %v1371 = vld [vmem:[#allocation2 + $0xdb] sm:$0xff]
        %v1372 = vld [vmem:[#allocation2 + $0xe3] sm:$0xff]
        %v1373 = vld [vmem:[#allocation2 + $0xf3] sm:$0xff]
        %v1374 = vld [vmem:[#allocation2 + $0xfb] sm:$0xff]
        %v1375 = vld [vmem:[#allocation2 + $0x10b] sm:$0xff]
        %v1376 = vld [vmem:[#allocation2 + $0x113] sm:$0xff]
        %v1377 = vld [vmem:[#allocation2 + $0x123] sm:$0xff]
        %v1378 = vld [vmem:[#allocation2 + $0x12b] sm:$0xff]
        %v1379 = vld [vmem:[#allocation2 + $0x13b] sm:$0xff]
        %v1380 = vld [vmem:[#allocation2 + $0x143] sm:$0xff]
        %v1381 = vld [vmem:[#allocation2 + $0x153] sm:$0xff]
        %v1382 = vld [vmem:[#allocation2 + $0x15b] sm:$0xff]
        %v1383 = vld [vmem:[#allocation2 + $0x16b] sm:$0xff]
        %v1384 = vld [vmem:[#allocation2 + $0x173] sm:$0xff]
        %s1385 = scalar_lea.vmem [#allocation3], 768
        %1386 = vst [vmem:[%s1385] sm:$0xff] %v1353
        %1387 = vst [vmem:[%s1385 + $0x8] sm:$0xff] %v1354
        %1388 = vst [vmem:[%s1385 + $0x10] sm:$0xff] %v1355
        %1389 = vst [vmem:[%s1385 + $0x18] sm:$0xff] %v1356
        %1390 = vst [vmem:[%s1385 + $0x20] sm:$0xff] %v1357
        %1391 = vst [vmem:[%s1385 + $0x28] sm:$0xff] %v1358
        %1392 = vst [vmem:[%s1385 + $0x30] sm:$0xff] %v1359
        %1393 = vst [vmem:[%s1385 + $0x38] sm:$0xff] %v1360
        %1394 = vst [vmem:[%s1385 + $0x40] sm:$0xff] %v1361
        %1395 = vst [vmem:[%s1385 + $0x48] sm:$0xff] %v1362
        %1396 = vst [vmem:[%s1385 + $0x50] sm:$0xff] %v1363
        %1397 = vst [vmem:[%s1385 + $0x58] sm:$0xff] %v1364
        %1398 = vst [vmem:[%s1385 + $0x60] sm:$0xff] %v1365
        %1399 = vst [vmem:[%s1385 + $0x68] sm:$0xff] %v1366
        %1400 = vst [vmem:[%s1385 + $0x70] sm:$0xff] %v1367
        %1401 = vst [vmem:[%s1385 + $0x78] sm:$0xff] %v1368
        %1402 = vst [vmem:[%s1385 + $0x80] sm:$0xff] %v1369
        %1403 = vst [vmem:[%s1385 + $0x88] sm:$0xff] %v1370
        %1404 = vst [vmem:[%s1385 + $0x90] sm:$0xff] %v1371
        %1405 = vst [vmem:[%s1385 + $0x98] sm:$0xff] %v1372
        %1406 = vst [vmem:[%s1385 + $0xa0] sm:$0xff] %v1373
        %1407 = vst [vmem:[%s1385 + $0xa8] sm:$0xff] %v1374
        %1408 = vst [vmem:[%s1385 + $0xb0] sm:$0xff] %v1375
        %1409 = vst [vmem:[%s1385 + $0xb8] sm:$0xff] %v1376
        %1410 = vst [vmem:[%s1385 + $0xc0] sm:$0xff] %v1377
        %1411 = vst [vmem:[%s1385 + $0xc8] sm:$0xff] %v1378
        %1412 = vst [vmem:[%s1385 + $0xd0] sm:$0xff] %v1379
        %1413 = vst [vmem:[%s1385 + $0xd8] sm:$0xff] %v1380
        %1414 = vst [vmem:[%s1385 + $0xe0] sm:$0xff] %v1381
        %1415 = vst [vmem:[%s1385 + $0xe8] sm:$0xff] %v1382
        %1416 = vst [vmem:[%s1385 + $0xf0] sm:$0xff] %v1383
        %1417 = vst [vmem:[%s1385 + $0xf8] sm:$0xff] %v1384
        %v1418 = vld [vmem:[#allocation2 + $0x4] sm:$0xff]
        %v1419 = vld [vmem:[#allocation2 + $0xc] sm:$0xff]
        %v1420 = vld [vmem:[#allocation2 + $0x1c] sm:$0xff]
        %v1421 = vld [vmem:[#allocation2 + $0x24] sm:$0xff]
        %v1422 = vld [vmem:[#allocation2 + $0x34] sm:$0xff]
        %v1423 = vld [vmem:[#allocation2 + $0x3c] sm:$0xff]
        %v1424 = vld [vmem:[#allocation2 + $0x4c] sm:$0xff]
        %v1425 = vld [vmem:[#allocation2 + $0x54] sm:$0xff]
        %v1426 = vld [vmem:[#allocation2 + $0x64] sm:$0xff]
        %v1427 = vld [vmem:[#allocation2 + $0x6c] sm:$0xff]
        %v1428 = vld [vmem:[#allocation2 + $0x7c] sm:$0xff]
        %v1429 = vld [vmem:[#allocation2 + $0x84] sm:$0xff]
        %v1430 = vld [vmem:[#allocation2 + $0x94] sm:$0xff]
        %v1431 = vld [vmem:[#allocation2 + $0x9c] sm:$0xff]
        %v1432 = vld [vmem:[#allocation2 + $0xac] sm:$0xff]
        %v1433 = vld [vmem:[#allocation2 + $0xb4] sm:$0xff]
        %v1434 = vld [vmem:[#allocation2 + $0xc4] sm:$0xff]
        %v1435 = vld [vmem:[#allocation2 + $0xcc] sm:$0xff]
        %v1436 = vld [vmem:[#allocation2 + $0xdc] sm:$0xff]
        %v1437 = vld [vmem:[#allocation2 + $0xe4] sm:$0xff]
        %v1438 = vld [vmem:[#allocation2 + $0xf4] sm:$0xff]
        %v1439 = vld [vmem:[#allocation2 + $0xfc] sm:$0xff]
        %v1440 = vld [vmem:[#allocation2 + $0x10c] sm:$0xff]
        %v1441 = vld [vmem:[#allocation2 + $0x114] sm:$0xff]
        %v1442 = vld [vmem:[#allocation2 + $0x124] sm:$0xff]
        %v1443 = vld [vmem:[#allocation2 + $0x12c] sm:$0xff]
        %v1444 = vld [vmem:[#allocation2 + $0x13c] sm:$0xff]
        %v1445 = vld [vmem:[#allocation2 + $0x144] sm:$0xff]
        %v1446 = vld [vmem:[#allocation2 + $0x154] sm:$0xff]
        %v1447 = vld [vmem:[#allocation2 + $0x15c] sm:$0xff]
        %v1448 = vld [vmem:[#allocation2 + $0x16c] sm:$0xff]
        %v1449 = vld [vmem:[#allocation2 + $0x174] sm:$0xff]
        %s1450 = scalar_lea.vmem [#allocation3], 1024
        %1451 = vst [vmem:[%s1450] sm:$0xff] %v1418
        %1452 = vst [vmem:[%s1450 + $0x8] sm:$0xff] %v1419
        %1453 = vst [vmem:[%s1450 + $0x10] sm:$0xff] %v1420
        %1454 = vst [vmem:[%s1450 + $0x18] sm:$0xff] %v1421
        %1455 = vst [vmem:[%s1450 + $0x20] sm:$0xff] %v1422
        %1456 = vst [vmem:[%s1450 + $0x28] sm:$0xff] %v1423
        %1457 = vst [vmem:[%s1450 + $0x30] sm:$0xff] %v1424
        %1458 = vst [vmem:[%s1450 + $0x38] sm:$0xff] %v1425
        %1459 = vst [vmem:[%s1450 + $0x40] sm:$0xff] %v1426
        %1460 = vst [vmem:[%s1450 + $0x48] sm:$0xff] %v1427
        %1461 = vst [vmem:[%s1450 + $0x50] sm:$0xff] %v1428
        %1462 = vst [vmem:[%s1450 + $0x58] sm:$0xff] %v1429
        %1463 = vst [vmem:[%s1450 + $0x60] sm:$0xff] %v1430
        %1464 = vst [vmem:[%s1450 + $0x68] sm:$0xff] %v1431
        %1465 = vst [vmem:[%s1450 + $0x70] sm:$0xff] %v1432
        %1466 = vst [vmem:[%s1450 + $0x78] sm:$0xff] %v1433
        %1467 = vst [vmem:[%s1450 + $0x80] sm:$0xff] %v1434
        %1468 = vst [vmem:[%s1450 + $0x88] sm:$0xff] %v1435
        %1469 = vst [vmem:[%s1450 + $0x90] sm:$0xff] %v1436
        %1470 = vst [vmem:[%s1450 + $0x98] sm:$0xff] %v1437
        %1471 = vst [vmem:[%s1450 + $0xa0] sm:$0xff] %v1438
        %1472 = vst [vmem:[%s1450 + $0xa8] sm:$0xff] %v1439
        %1473 = vst [vmem:[%s1450 + $0xb0] sm:$0xff] %v1440
        %1474 = vst [vmem:[%s1450 + $0xb8] sm:$0xff] %v1441
        %1475 = vst [vmem:[%s1450 + $0xc0] sm:$0xff] %v1442
        %1476 = vst [vmem:[%s1450 + $0xc8] sm:$0xff] %v1443
        %1477 = vst [vmem:[%s1450 + $0xd0] sm:$0xff] %v1444
        %1478 = vst [vmem:[%s1450 + $0xd8] sm:$0xff] %v1445
        %1479 = vst [vmem:[%s1450 + $0xe0] sm:$0xff] %v1446
        %1480 = vst [vmem:[%s1450 + $0xe8] sm:$0xff] %v1447
        %1481 = vst [vmem:[%s1450 + $0xf0] sm:$0xff] %v1448
        %1482 = vst [vmem:[%s1450 + $0xf8] sm:$0xff] %v1449
        %v1483 = vld [vmem:[#allocation3] sm:$0xff]
        %v1484 = vld [vmem:[#allocation3 + $0x8] sm:$0xff]
        %v1485 = vld [vmem:[#allocation3 + $0x10] sm:$0xff]
        %v1486 = vld [vmem:[#allocation3 + $0x18] sm:$0xff]
        %v1487 = vld [vmem:[#allocation3 + $0x20] sm:$0xff]
        %v1488 = vld [vmem:[#allocation3 + $0x28] sm:$0xff]
        %v1489 = vld [vmem:[#allocation3 + $0x30] sm:$0xff]
        %v1490 = vld [vmem:[#allocation3 + $0x38] sm:$0xff]
        %v1491 = vld [vmem:[#allocation3 + $0x40] sm:$0xff]
        %v1492 = vld [vmem:[#allocation3 + $0x48] sm:$0xff]
        %v1493 = vld [vmem:[#allocation3 + $0x50] sm:$0xff]
        %v1494 = vld [vmem:[#allocation3 + $0x58] sm:$0xff]
        %v1495 = vld [vmem:[#allocation3 + $0x60] sm:$0xff]
        %v1496 = vld [vmem:[#allocation3 + $0x68] sm:$0xff]
        %v1497 = vld [vmem:[#allocation3 + $0x70] sm:$0xff]
        %v1498 = vld [vmem:[#allocation3 + $0x78] sm:$0xff]
        %v1499 = vld [vmem:[#allocation3 + $0x80] sm:$0xff]
        %v1500 = vld [vmem:[#allocation3 + $0x88] sm:$0xff]
        %v1501 = vld [vmem:[#allocation3 + $0x90] sm:$0xff]
        %v1502 = vld [vmem:[#allocation3 + $0x98] sm:$0xff]
        %v1503 = vld [vmem:[#allocation3 + $0xa0] sm:$0xff]
        %v1504 = vld [vmem:[#allocation3 + $0xa8] sm:$0xff]
        %v1505 = vld [vmem:[#allocation3 + $0xb0] sm:$0xff]
        %v1506 = vld [vmem:[#allocation3 + $0xb8] sm:$0xff]
        %v1507 = vld [vmem:[#allocation3 + $0xc0] sm:$0xff]
        %v1508 = vld [vmem:[#allocation3 + $0xc8] sm:$0xff]
        %v1509 = vld [vmem:[#allocation3 + $0xd0] sm:$0xff]
        %v1510 = vld [vmem:[#allocation3 + $0xd8] sm:$0xff]
        %v1511 = vld [vmem:[#allocation3 + $0xe0] sm:$0xff]
        %v1512 = vld [vmem:[#allocation3 + $0xe8] sm:$0xff]
        %v1513 = vld [vmem:[#allocation3 + $0xf0] sm:$0xff]
        %v1514 = vld [vmem:[#allocation3 + $0xf8] sm:$0xff]
        %v1515 = vld [vmem:[%s3 + $0xa] sm:$0x1]
        %v1516 = vlaneseq
        %v1517 = vshrl.u32 %v1516, 7
        %v1518 = vsub.s32 0, %v1517
        %v1519 = vrot.slane %v1515, %v1518
        %v1520 = vmul.f32 %v1483, %v1519
        %v1521 = vmul.f32 %v1484, %v1519
        %v1522 = vmul.f32 %v1485, %v1519
        %v1523 = vmul.f32 %v1486, %v1519
        %v1524 = vmul.f32 %v1487, %v1519
        %v1525 = vmul.f32 %v1488, %v1519
        %v1526 = vmul.f32 %v1489, %v1519
        %v1527 = vmul.f32 %v1490, %v1519
        %v1528 = vmul.f32 %v1491, %v1519
        %v1529 = vmul.f32 %v1492, %v1519
        %v1530 = vmul.f32 %v1493, %v1519
        %v1531 = vmul.f32 %v1494, %v1519
        %v1532 = vmul.f32 %v1495, %v1519
        %v1533 = vmul.f32 %v1496, %v1519
        %v1534 = vmul.f32 %v1497, %v1519
        %v1535 = vmul.f32 %v1498, %v1519
        %v1536 = vmul.f32 %v1499, %v1519
        %v1537 = vmul.f32 %v1500, %v1519
        %v1538 = vmul.f32 %v1501, %v1519
        %v1539 = vmul.f32 %v1502, %v1519
        %v1540 = vmul.f32 %v1503, %v1519
        %v1541 = vmul.f32 %v1504, %v1519
        %v1542 = vmul.f32 %v1505, %v1519
        %v1543 = vmul.f32 %v1506, %v1519
        %v1544 = vmul.f32 %v1507, %v1519
        %v1545 = vmul.f32 %v1508, %v1519
        %v1546 = vmul.f32 %v1509, %v1519
        %v1547 = vmul.f32 %v1510, %v1519
        %v1548 = vmul.f32 %v1511, %v1519
        %v1549 = vmul.f32 %v1512, %v1519
        %v1550 = vmul.f32 %v1513, %v1519
        %v1551 = vmul.f32 %v1514, %v1519
        %v1552 = vld [vmem:[%s1255] sm:$0xff]
        %v1553 = vld [vmem:[%s1255 + $0x8] sm:$0xff]
        %v1554 = vld [vmem:[%s1255 + $0x10] sm:$0xff]
        %v1555 = vld [vmem:[%s1255 + $0x18] sm:$0xff]
        %v1556 = vld [vmem:[%s1255 + $0x20] sm:$0xff]
        %v1557 = vld [vmem:[%s1255 + $0x28] sm:$0xff]
        %v1558 = vld [vmem:[%s1255 + $0x30] sm:$0xff]
        %v1559 = vld [vmem:[%s1255 + $0x38] sm:$0xff]
        %v1560 = vld [vmem:[%s1255 + $0x40] sm:$0xff]
        %v1561 = vld [vmem:[%s1255 + $0x48] sm:$0xff]
        %v1562 = vld [vmem:[%s1255 + $0x50] sm:$0xff]
        %v1563 = vld [vmem:[%s1255 + $0x58] sm:$0xff]
        %v1564 = vld [vmem:[%s1255 + $0x60] sm:$0xff]
        %v1565 = vld [vmem:[%s1255 + $0x68] sm:$0xff]
        %v1566 = vld [vmem:[%s1255 + $0x70] sm:$0xff]
        %v1567 = vld [vmem:[%s1255 + $0x78] sm:$0xff]
        %v1568 = vld [vmem:[%s1255 + $0x80] sm:$0xff]
        %v1569 = vld [vmem:[%s1255 + $0x88] sm:$0xff]
        %v1570 = vld [vmem:[%s1255 + $0x90] sm:$0xff]
        %v1571 = vld [vmem:[%s1255 + $0x98] sm:$0xff]
        %v1572 = vld [vmem:[%s1255 + $0xa0] sm:$0xff]
        %v1573 = vld [vmem:[%s1255 + $0xa8] sm:$0xff]
        %v1574 = vld [vmem:[%s1255 + $0xb0] sm:$0xff]
        %v1575 = vld [vmem:[%s1255 + $0xb8] sm:$0xff]
        %v1576 = vld [vmem:[%s1255 + $0xc0] sm:$0xff]
        %v1577 = vld [vmem:[%s1255 + $0xc8] sm:$0xff]
        %v1578 = vld [vmem:[%s1255 + $0xd0] sm:$0xff]
        %v1579 = vld [vmem:[%s1255 + $0xd8] sm:$0xff]
        %v1580 = vld [vmem:[%s1255 + $0xe0] sm:$0xff]
        %v1581 = vld [vmem:[%s1255 + $0xe8] sm:$0xff]
        %v1582 = vld [vmem:[%s1255 + $0xf0] sm:$0xff]
        %v1583 = vld [vmem:[%s1255 + $0xf8] sm:$0xff]
        %v1584 = vld [vmem:[%s3 + $0xb] sm:$0x1]
        %v1585 = vlaneseq
        %v1586 = vshrl.u32 %v1585, 7
        %v1587 = vsub.s32 0, %v1586
        %v1588 = vrot.slane %v1584, %v1587
        %v1589 = vmul.f32 %v1552, %v1588
        %v1590 = vmul.f32 %v1553, %v1588
        %v1591 = vmul.f32 %v1554, %v1588
        %v1592 = vmul.f32 %v1555, %v1588
        %v1593 = vmul.f32 %v1556, %v1588
        %v1594 = vmul.f32 %v1557, %v1588
        %v1595 = vmul.f32 %v1558, %v1588
        %v1596 = vmul.f32 %v1559, %v1588
        %v1597 = vmul.f32 %v1560, %v1588
        %v1598 = vmul.f32 %v1561, %v1588
        %v1599 = vmul.f32 %v1562, %v1588
        %v1600 = vmul.f32 %v1563, %v1588
        %v1601 = vmul.f32 %v1564, %v1588
        %v1602 = vmul.f32 %v1565, %v1588
        %v1603 = vmul.f32 %v1566, %v1588
        %v1604 = vmul.f32 %v1567, %v1588
        %v1605 = vmul.f32 %v1568, %v1588
        %v1606 = vmul.f32 %v1569, %v1588
        %v1607 = vmul.f32 %v1570, %v1588
        %v1608 = vmul.f32 %v1571, %v1588
        %v1609 = vmul.f32 %v1572, %v1588
        %v1610 = vmul.f32 %v1573, %v1588
        %v1611 = vmul.f32 %v1574, %v1588
        %v1612 = vmul.f32 %v1575, %v1588
        %v1613 = vmul.f32 %v1576, %v1588
        %v1614 = vmul.f32 %v1577, %v1588
        %v1615 = vmul.f32 %v1578, %v1588
        %v1616 = vmul.f32 %v1579, %v1588
        %v1617 = vmul.f32 %v1580, %v1588
        %v1618 = vmul.f32 %v1581, %v1588
        %v1619 = vmul.f32 %v1582, %v1588
        %v1620 = vmul.f32 %v1583, %v1588
        %v1621 = vadd.f32 %v1520, %v1589
        %v1622 = vadd.f32 %v1521, %v1590
        %v1623 = vadd.f32 %v1522, %v1591
        %v1624 = vadd.f32 %v1523, %v1592
        %v1625 = vadd.f32 %v1524, %v1593
        %v1626 = vadd.f32 %v1525, %v1594
        %v1627 = vadd.f32 %v1526, %v1595
        %v1628 = vadd.f32 %v1527, %v1596
        %v1629 = vadd.f32 %v1528, %v1597
        %v1630 = vadd.f32 %v1529, %v1598
        %v1631 = vadd.f32 %v1530, %v1599
        %v1632 = vadd.f32 %v1531, %v1600
        %v1633 = vadd.f32 %v1532, %v1601
        %v1634 = vadd.f32 %v1533, %v1602
        %v1635 = vadd.f32 %v1534, %v1603
        %v1636 = vadd.f32 %v1535, %v1604
        %v1637 = vadd.f32 %v1536, %v1605
        %v1638 = vadd.f32 %v1537, %v1606
        %v1639 = vadd.f32 %v1538, %v1607
        %v1640 = vadd.f32 %v1539, %v1608
        %v1641 = vadd.f32 %v1540, %v1609
        %v1642 = vadd.f32 %v1541, %v1610
        %v1643 = vadd.f32 %v1542, %v1611
        %v1644 = vadd.f32 %v1543, %v1612
        %v1645 = vadd.f32 %v1544, %v1613
        %v1646 = vadd.f32 %v1545, %v1614
        %v1647 = vadd.f32 %v1546, %v1615
        %v1648 = vadd.f32 %v1547, %v1616
        %v1649 = vadd.f32 %v1548, %v1617
        %v1650 = vadd.f32 %v1549, %v1618
        %v1651 = vadd.f32 %v1550, %v1619
        %v1652 = vadd.f32 %v1551, %v1620
        %v1653 = vld [vmem:[%s1320] sm:$0xff]
        %v1654 = vld [vmem:[%s1320 + $0x8] sm:$0xff]
        %v1655 = vld [vmem:[%s1320 + $0x10] sm:$0xff]
        %v1656 = vld [vmem:[%s1320 + $0x18] sm:$0xff]
        %v1657 = vld [vmem:[%s1320 + $0x20] sm:$0xff]
        %v1658 = vld [vmem:[%s1320 + $0x28] sm:$0xff]
        %v1659 = vld [vmem:[%s1320 + $0x30] sm:$0xff]
        %v1660 = vld [vmem:[%s1320 + $0x38] sm:$0xff]
        %v1661 = vld [vmem:[%s1320 + $0x40] sm:$0xff]
        %v1662 = vld [vmem:[%s1320 + $0x48] sm:$0xff]
        %v1663 = vld [vmem:[%s1320 + $0x50] sm:$0xff]
        %v1664 = vld [vmem:[%s1320 + $0x58] sm:$0xff]
        %v1665 = vld [vmem:[%s1320 + $0x60] sm:$0xff]
        %v1666 = vld [vmem:[%s1320 + $0x68] sm:$0xff]
        %v1667 = vld [vmem:[%s1320 + $0x70] sm:$0xff]
        %v1668 = vld [vmem:[%s1320 + $0x78] sm:$0xff]
        %v1669 = vld [vmem:[%s1320 + $0x80] sm:$0xff]
        %v1670 = vld [vmem:[%s1320 + $0x88] sm:$0xff]
        %v1671 = vld [vmem:[%s1320 + $0x90] sm:$0xff]
        %v1672 = vld [vmem:[%s1320 + $0x98] sm:$0xff]
        %v1673 = vld [vmem:[%s1320 + $0xa0] sm:$0xff]
        %v1674 = vld [vmem:[%s1320 + $0xa8] sm:$0xff]
        %v1675 = vld [vmem:[%s1320 + $0xb0] sm:$0xff]
        %v1676 = vld [vmem:[%s1320 + $0xb8] sm:$0xff]
        %v1677 = vld [vmem:[%s1320 + $0xc0] sm:$0xff]
        %v1678 = vld [vmem:[%s1320 + $0xc8] sm:$0xff]
        %v1679 = vld [vmem:[%s1320 + $0xd0] sm:$0xff]
        %v1680 = vld [vmem:[%s1320 + $0xd8] sm:$0xff]
        %v1681 = vld [vmem:[%s1320 + $0xe0] sm:$0xff]
        %v1682 = vld [vmem:[%s1320 + $0xe8] sm:$0xff]
        %v1683 = vld [vmem:[%s1320 + $0xf0] sm:$0xff]
        %v1684 = vld [vmem:[%s1320 + $0xf8] sm:$0xff]
        %v1685 = vld [vmem:[%s3 + $0xc] sm:$0x1]
        %v1686 = vlaneseq
        %v1687 = vshrl.u32 %v1686, 7
        %v1688 = vsub.s32 0, %v1687
        %v1689 = vrot.slane %v1685, %v1688
        %v1690 = vmul.f32 %v1653, %v1689
        %v1691 = vmul.f32 %v1654, %v1689
        %v1692 = vmul.f32 %v1655, %v1689
        %v1693 = vmul.f32 %v1656, %v1689
        %v1694 = vmul.f32 %v1657, %v1689
        %v1695 = vmul.f32 %v1658, %v1689
        %v1696 = vmul.f32 %v1659, %v1689
        %v1697 = vmul.f32 %v1660, %v1689
        %v1698 = vmul.f32 %v1661, %v1689
        %v1699 = vmul.f32 %v1662, %v1689
        %v1700 = vmul.f32 %v1663, %v1689
        %v1701 = vmul.f32 %v1664, %v1689
        %v1702 = vmul.f32 %v1665, %v1689
        %v1703 = vmul.f32 %v1666, %v1689
        %v1704 = vmul.f32 %v1667, %v1689
        %v1705 = vmul.f32 %v1668, %v1689
        %v1706 = vmul.f32 %v1669, %v1689
        %v1707 = vmul.f32 %v1670, %v1689
        %v1708 = vmul.f32 %v1671, %v1689
        %v1709 = vmul.f32 %v1672, %v1689
        %v1710 = vmul.f32 %v1673, %v1689
        %v1711 = vmul.f32 %v1674, %v1689
        %v1712 = vmul.f32 %v1675, %v1689
        %v1713 = vmul.f32 %v1676, %v1689
        %v1714 = vmul.f32 %v1677, %v1689
        %v1715 = vmul.f32 %v1678, %v1689
        %v1716 = vmul.f32 %v1679, %v1689
        %v1717 = vmul.f32 %v1680, %v1689
        %v1718 = vmul.f32 %v1681, %v1689
        %v1719 = vmul.f32 %v1682, %v1689
        %v1720 = vmul.f32 %v1683, %v1689
        %v1721 = vmul.f32 %v1684, %v1689
        %v1722 = vadd.f32 %v1621, %v1690
        %v1723 = vadd.f32 %v1622, %v1691
        %v1724 = vadd.f32 %v1623, %v1692
        %v1725 = vadd.f32 %v1624, %v1693
        %v1726 = vadd.f32 %v1625, %v1694
        %v1727 = vadd.f32 %v1626, %v1695
        %v1728 = vadd.f32 %v1627, %v1696
        %v1729 = vadd.f32 %v1628, %v1697
        %v1730 = vadd.f32 %v1629, %v1698
        %v1731 = vadd.f32 %v1630, %v1699
        %v1732 = vadd.f32 %v1631, %v1700
        %v1733 = vadd.f32 %v1632, %v1701
        %v1734 = vadd.f32 %v1633, %v1702
        %v1735 = vadd.f32 %v1634, %v1703
        %v1736 = vadd.f32 %v1635, %v1704
        %v1737 = vadd.f32 %v1636, %v1705
        %v1738 = vadd.f32 %v1637, %v1706
        %v1739 = vadd.f32 %v1638, %v1707
        %v1740 = vadd.f32 %v1639, %v1708
        %v1741 = vadd.f32 %v1640, %v1709
        %v1742 = vadd.f32 %v1641, %v1710
        %v1743 = vadd.f32 %v1642, %v1711
        %v1744 = vadd.f32 %v1643, %v1712
        %v1745 = vadd.f32 %v1644, %v1713
        %v1746 = vadd.f32 %v1645, %v1714
        %v1747 = vadd.f32 %v1646, %v1715
        %v1748 = vadd.f32 %v1647, %v1716
        %v1749 = vadd.f32 %v1648, %v1717
        %v1750 = vadd.f32 %v1649, %v1718
        %v1751 = vadd.f32 %v1650, %v1719
        %v1752 = vadd.f32 %v1651, %v1720
        %v1753 = vadd.f32 %v1652, %v1721
        %v1754 = vld [vmem:[%s1385] sm:$0xff]
        %v1755 = vld [vmem:[%s1385 + $0x8] sm:$0xff]
        %v1756 = vld [vmem:[%s1385 + $0x10] sm:$0xff]
        %v1757 = vld [vmem:[%s1385 + $0x18] sm:$0xff]
        %v1758 = vld [vmem:[%s1385 + $0x20] sm:$0xff]
        %v1759 = vld [vmem:[%s1385 + $0x28] sm:$0xff]
        %v1760 = vld [vmem:[%s1385 + $0x30] sm:$0xff]
        %v1761 = vld [vmem:[%s1385 + $0x38] sm:$0xff]
        %v1762 = vld [vmem:[%s1385 + $0x40] sm:$0xff]
        %v1763 = vld [vmem:[%s1385 + $0x48] sm:$0xff]
        %v1764 = vld [vmem:[%s1385 + $0x50] sm:$0xff]
        %v1765 = vld [vmem:[%s1385 + $0x58] sm:$0xff]
        %v1766 = vld [vmem:[%s1385 + $0x60] sm:$0xff]
        %v1767 = vld [vmem:[%s1385 + $0x68] sm:$0xff]
        %v1768 = vld [vmem:[%s1385 + $0x70] sm:$0xff]
        %v1769 = vld [vmem:[%s1385 + $0x78] sm:$0xff]
        %v1770 = vld [vmem:[%s1385 + $0x80] sm:$0xff]
        %v1771 = vld [vmem:[%s1385 + $0x88] sm:$0xff]
        %v1772 = vld [vmem:[%s1385 + $0x90] sm:$0xff]
        %v1773 = vld [vmem:[%s1385 + $0x98] sm:$0xff]
        %v1774 = vld [vmem:[%s1385 + $0xa0] sm:$0xff]
        %v1775 = vld [vmem:[%s1385 + $0xa8] sm:$0xff]
        %v1776 = vld [vmem:[%s1385 + $0xb0] sm:$0xff]
        %v1777 = vld [vmem:[%s1385 + $0xb8] sm:$0xff]
        %v1778 = vld [vmem:[%s1385 + $0xc0] sm:$0xff]
        %v1779 = vld [vmem:[%s1385 + $0xc8] sm:$0xff]
        %v1780 = vld [vmem:[%s1385 + $0xd0] sm:$0xff]
        %v1781 = vld [vmem:[%s1385 + $0xd8] sm:$0xff]
        %v1782 = vld [vmem:[%s1385 + $0xe0] sm:$0xff]
        %v1783 = vld [vmem:[%s1385 + $0xe8] sm:$0xff]
        %v1784 = vld [vmem:[%s1385 + $0xf0] sm:$0xff]
        %v1785 = vld [vmem:[%s1385 + $0xf8] sm:$0xff]
        %v1786 = vld [vmem:[%s3 + $0xd] sm:$0x1]
        %v1787 = vlaneseq
        %v1788 = vshrl.u32 %v1787, 7
        %v1789 = vsub.s32 0, %v1788
        %v1790 = vrot.slane %v1786, %v1789
        %v1791 = vmul.f32 %v1754, %v1790
        %v1792 = vmul.f32 %v1755, %v1790
        %v1793 = vmul.f32 %v1756, %v1790
        %v1794 = vmul.f32 %v1757, %v1790
        %v1795 = vmul.f32 %v1758, %v1790
        %v1796 = vmul.f32 %v1759, %v1790
        %v1797 = vmul.f32 %v1760, %v1790
        %v1798 = vmul.f32 %v1761, %v1790
        %v1799 = vmul.f32 %v1762, %v1790
        %v1800 = vmul.f32 %v1763, %v1790
        %v1801 = vmul.f32 %v1764, %v1790
        %v1802 = vmul.f32 %v1765, %v1790
        %v1803 = vmul.f32 %v1766, %v1790
        %v1804 = vmul.f32 %v1767, %v1790
        %v1805 = vmul.f32 %v1768, %v1790
        %v1806 = vmul.f32 %v1769, %v1790
        %v1807 = vmul.f32 %v1770, %v1790
        %v1808 = vmul.f32 %v1771, %v1790
        %v1809 = vmul.f32 %v1772, %v1790
        %v1810 = vmul.f32 %v1773, %v1790
        %v1811 = vmul.f32 %v1774, %v1790
        %v1812 = vmul.f32 %v1775, %v1790
        %v1813 = vmul.f32 %v1776, %v1790
        %v1814 = vmul.f32 %v1777, %v1790
        %v1815 = vmul.f32 %v1778, %v1790
        %v1816 = vmul.f32 %v1779, %v1790
        %v1817 = vmul.f32 %v1780, %v1790
        %v1818 = vmul.f32 %v1781, %v1790
        %v1819 = vmul.f32 %v1782, %v1790
        %v1820 = vmul.f32 %v1783, %v1790
        %v1821 = vmul.f32 %v1784, %v1790
        %v1822 = vmul.f32 %v1785, %v1790
        %v1823 = vadd.f32 %v1722, %v1791
        %v1824 = vadd.f32 %v1723, %v1792
        %v1825 = vadd.f32 %v1724, %v1793
        %v1826 = vadd.f32 %v1725, %v1794
        %v1827 = vadd.f32 %v1726, %v1795
        %v1828 = vadd.f32 %v1727, %v1796
        %v1829 = vadd.f32 %v1728, %v1797
        %v1830 = vadd.f32 %v1729, %v1798
        %v1831 = vadd.f32 %v1730, %v1799
        %v1832 = vadd.f32 %v1731, %v1800
        %v1833 = vadd.f32 %v1732, %v1801
        %v1834 = vadd.f32 %v1733, %v1802
        %v1835 = vadd.f32 %v1734, %v1803
        %v1836 = vadd.f32 %v1735, %v1804
        %v1837 = vadd.f32 %v1736, %v1805
        %v1838 = vadd.f32 %v1737, %v1806
        %v1839 = vadd.f32 %v1738, %v1807
        %v1840 = vadd.f32 %v1739, %v1808
        %v1841 = vadd.f32 %v1740, %v1809
        %v1842 = vadd.f32 %v1741, %v1810
        %v1843 = vadd.f32 %v1742, %v1811
        %v1844 = vadd.f32 %v1743, %v1812
        %v1845 = vadd.f32 %v1744, %v1813
        %v1846 = vadd.f32 %v1745, %v1814
        %v1847 = vadd.f32 %v1746, %v1815
        %v1848 = vadd.f32 %v1747, %v1816
        %v1849 = vadd.f32 %v1748, %v1817
        %v1850 = vadd.f32 %v1749, %v1818
        %v1851 = vadd.f32 %v1750, %v1819
        %v1852 = vadd.f32 %v1751, %v1820
        %v1853 = vadd.f32 %v1752, %v1821
        %v1854 = vadd.f32 %v1753, %v1822
        %v1855 = vld [vmem:[%s1450] sm:$0xff]
        %v1856 = vld [vmem:[%s1450 + $0x8] sm:$0xff]
        %v1857 = vld [vmem:[%s1450 + $0x10] sm:$0xff]
        %v1858 = vld [vmem:[%s1450 + $0x18] sm:$0xff]
        %v1859 = vld [vmem:[%s1450 + $0x20] sm:$0xff]
        %v1860 = vld [vmem:[%s1450 + $0x28] sm:$0xff]
        %v1861 = vld [vmem:[%s1450 + $0x30] sm:$0xff]
        %v1862 = vld [vmem:[%s1450 + $0x38] sm:$0xff]
        %v1863 = vld [vmem:[%s1450 + $0x40] sm:$0xff]
        %v1864 = vld [vmem:[%s1450 + $0x48] sm:$0xff]
        %v1865 = vld [vmem:[%s1450 + $0x50] sm:$0xff]
        %v1866 = vld [vmem:[%s1450 + $0x58] sm:$0xff]
        %v1867 = vld [vmem:[%s1450 + $0x60] sm:$0xff]
        %v1868 = vld [vmem:[%s1450 + $0x68] sm:$0xff]
        %v1869 = vld [vmem:[%s1450 + $0x70] sm:$0xff]
        %v1870 = vld [vmem:[%s1450 + $0x78] sm:$0xff]
        %v1871 = vld [vmem:[%s1450 + $0x80] sm:$0xff]
        %v1872 = vld [vmem:[%s1450 + $0x88] sm:$0xff]
        %v1873 = vld [vmem:[%s1450 + $0x90] sm:$0xff]
        %v1874 = vld [vmem:[%s1450 + $0x98] sm:$0xff]
        %v1875 = vld [vmem:[%s1450 + $0xa0] sm:$0xff]
        %v1876 = vld [vmem:[%s1450 + $0xa8] sm:$0xff]
        %v1877 = vld [vmem:[%s1450 + $0xb0] sm:$0xff]
        %v1878 = vld [vmem:[%s1450 + $0xb8] sm:$0xff]
        %v1879 = vld [vmem:[%s1450 + $0xc0] sm:$0xff]
        %v1880 = vld [vmem:[%s1450 + $0xc8] sm:$0xff]
        %v1881 = vld [vmem:[%s1450 + $0xd0] sm:$0xff]
        %v1882 = vld [vmem:[%s1450 + $0xd8] sm:$0xff]
        %v1883 = vld [vmem:[%s1450 + $0xe0] sm:$0xff]
        %v1884 = vld [vmem:[%s1450 + $0xe8] sm:$0xff]
        %v1885 = vld [vmem:[%s1450 + $0xf0] sm:$0xff]
        %v1886 = vld [vmem:[%s1450 + $0xf8] sm:$0xff]
        %v1887 = vld [vmem:[%s3 + $0xe] sm:$0x1]
        %v1888 = vlaneseq
        %v1889 = vshrl.u32 %v1888, 7
        %v1890 = vsub.s32 0, %v1889
        %v1891 = vrot.slane %v1887, %v1890
        %v1892 = vmul.f32 %v1855, %v1891
        %v1893 = vmul.f32 %v1856, %v1891
        %v1894 = vmul.f32 %v1857, %v1891
        %v1895 = vmul.f32 %v1858, %v1891
        %v1896 = vmul.f32 %v1859, %v1891
        %v1897 = vmul.f32 %v1860, %v1891
        %v1898 = vmul.f32 %v1861, %v1891
        %v1899 = vmul.f32 %v1862, %v1891
        %v1900 = vmul.f32 %v1863, %v1891
        %v1901 = vmul.f32 %v1864, %v1891
        %v1902 = vmul.f32 %v1865, %v1891
        %v1903 = vmul.f32 %v1866, %v1891
        %v1904 = vmul.f32 %v1867, %v1891
        %v1905 = vmul.f32 %v1868, %v1891
        %v1906 = vmul.f32 %v1869, %v1891
        %v1907 = vmul.f32 %v1870, %v1891
        %v1908 = vmul.f32 %v1871, %v1891
        %v1909 = vmul.f32 %v1872, %v1891
        %v1910 = vmul.f32 %v1873, %v1891
        %v1911 = vmul.f32 %v1874, %v1891
        %v1912 = vmul.f32 %v1875, %v1891
        %v1913 = vmul.f32 %v1876, %v1891
        %v1914 = vmul.f32 %v1877, %v1891
        %v1915 = vmul.f32 %v1878, %v1891
        %v1916 = vmul.f32 %v1879, %v1891
        %v1917 = vmul.f32 %v1880, %v1891
        %v1918 = vmul.f32 %v1881, %v1891
        %v1919 = vmul.f32 %v1882, %v1891
        %v1920 = vmul.f32 %v1883, %v1891
        %v1921 = vmul.f32 %v1884, %v1891
        %v1922 = vmul.f32 %v1885, %v1891
        %v1923 = vmul.f32 %v1886, %v1891
        %v1924 = vadd.f32 %v1823, %v1892
        %v1925 = vadd.f32 %v1824, %v1893
        %v1926 = vadd.f32 %v1825, %v1894
        %v1927 = vadd.f32 %v1826, %v1895
        %v1928 = vadd.f32 %v1827, %v1896
        %v1929 = vadd.f32 %v1828, %v1897
        %v1930 = vadd.f32 %v1829, %v1898
        %v1931 = vadd.f32 %v1830, %v1899
        %v1932 = vadd.f32 %v1831, %v1900
        %v1933 = vadd.f32 %v1832, %v1901
        %v1934 = vadd.f32 %v1833, %v1902
        %v1935 = vadd.f32 %v1834, %v1903
        %v1936 = vadd.f32 %v1835, %v1904
        %v1937 = vadd.f32 %v1836, %v1905
        %v1938 = vadd.f32 %v1837, %v1906
        %v1939 = vadd.f32 %v1838, %v1907
        %v1940 = vadd.f32 %v1839, %v1908
        %v1941 = vadd.f32 %v1840, %v1909
        %v1942 = vadd.f32 %v1841, %v1910
        %v1943 = vadd.f32 %v1842, %v1911
        %v1944 = vadd.f32 %v1843, %v1912
        %v1945 = vadd.f32 %v1844, %v1913
        %v1946 = vadd.f32 %v1845, %v1914
        %v1947 = vadd.f32 %v1846, %v1915
        %v1948 = vadd.f32 %v1847, %v1916
        %v1949 = vadd.f32 %v1848, %v1917
        %v1950 = vadd.f32 %v1849, %v1918
        %v1951 = vadd.f32 %v1850, %v1919
        %v1952 = vadd.f32 %v1851, %v1920
        %v1953 = vadd.f32 %v1852, %v1921
        %v1954 = vadd.f32 %v1853, %v1922
        %v1955 = vadd.f32 %v1854, %v1923
        %1956 = vst [vmem:[#allocation4] sm:$0xff] %v1924
        %1957 = vst [vmem:[#allocation4 + $0x8] sm:$0xff] %v1925
        %1958 = vst [vmem:[#allocation4 + $0x10] sm:$0xff] %v1926
        %1959 = vst [vmem:[#allocation4 + $0x18] sm:$0xff] %v1927
        %1960 = vst [vmem:[#allocation4 + $0x20] sm:$0xff] %v1928
        %1961 = vst [vmem:[#allocation4 + $0x28] sm:$0xff] %v1929
        %1962 = vst [vmem:[#allocation4 + $0x30] sm:$0xff] %v1930
        %1963 = vst [vmem:[#allocation4 + $0x38] sm:$0xff] %v1931
        %1964 = vst [vmem:[#allocation4 + $0x40] sm:$0xff] %v1932
        %1965 = vst [vmem:[#allocation4 + $0x48] sm:$0xff] %v1933
        %1966 = vst [vmem:[#allocation4 + $0x50] sm:$0xff] %v1934
        %1967 = vst [vmem:[#allocation4 + $0x58] sm:$0xff] %v1935
        %1968 = vst [vmem:[#allocation4 + $0x60] sm:$0xff] %v1936
        %1969 = vst [vmem:[#allocation4 + $0x68] sm:$0xff] %v1937
        %1970 = vst [vmem:[#allocation4 + $0x70] sm:$0xff] %v1938
        %1971 = vst [vmem:[#allocation4 + $0x78] sm:$0xff] %v1939
        %1972 = vst [vmem:[#allocation4 + $0x80] sm:$0xff] %v1940
        %1973 = vst [vmem:[#allocation4 + $0x88] sm:$0xff] %v1941
        %1974 = vst [vmem:[#allocation4 + $0x90] sm:$0xff] %v1942
        %1975 = vst [vmem:[#allocation4 + $0x98] sm:$0xff] %v1943
        %1976 = vst [vmem:[#allocation4 + $0xa0] sm:$0xff] %v1944
        %1977 = vst [vmem:[#allocation4 + $0xa8] sm:$0xff] %v1945
        %1978 = vst [vmem:[#allocation4 + $0xb0] sm:$0xff] %v1946
        %1979 = vst [vmem:[#allocation4 + $0xb8] sm:$0xff] %v1947
        %1980 = vst [vmem:[#allocation4 + $0xc0] sm:$0xff] %v1948
        %1981 = vst [vmem:[#allocation4 + $0xc8] sm:$0xff] %v1949
        %1982 = vst [vmem:[#allocation4 + $0xd0] sm:$0xff] %v1950
        %1983 = vst [vmem:[#allocation4 + $0xd8] sm:$0xff] %v1951
        %1984 = vst [vmem:[#allocation4 + $0xe0] sm:$0xff] %v1952
        %1985 = vst [vmem:[#allocation4 + $0xe8] sm:$0xff] %v1953
        %1986 = vst [vmem:[#allocation4 + $0xf0] sm:$0xff] %v1954
        %1987 = vst [vmem:[#allocation4 + $0xf8] sm:$0xff] %v1955
        %s1988 = scalar_lea.vmem [#allocation4], 32
        %v1989 = vld [vmem:[%s1988] sm:$0xff]
        %v1990 = vld [vmem:[%s1988 + $0x8] sm:$0xff]
        %v1991 = vld [vmem:[%s1988 + $0x10] sm:$0xff]
        %v1992 = vld [vmem:[%s1988 + $0x18] sm:$0xff]
        %v1993 = vld [vmem:[%s1988 + $0x20] sm:$0xff]
        %v1994 = vld [vmem:[%s1988 + $0x28] sm:$0xff]
        %v1995 = vld [vmem:[%s1988 + $0x30] sm:$0xff]
        %v1996 = vld [vmem:[%s1988 + $0x38] sm:$0xff]
        %v1997 = vld [vmem:[%s1988 + $0x40] sm:$0xff]
        %v1998 = vld [vmem:[%s1988 + $0x48] sm:$0xff]
        %v1999 = vld [vmem:[%s1988 + $0x50] sm:$0xff]
        %v2000 = vld [vmem:[%s1988 + $0x58] sm:$0xff]
        %v2001 = vld [vmem:[%s1988 + $0x60] sm:$0xff]
        %v2002 = vld [vmem:[%s1988 + $0x68] sm:$0xff]
        %v2003 = vld [vmem:[%s1988 + $0x70] sm:$0xff]
        %v2004 = vld [vmem:[%s1988 + $0x78] sm:$0xff]
        %v2005 = vld [vmem:[%s1988 + $0x80] sm:$0xff]
        %v2006 = vld [vmem:[%s1988 + $0x88] sm:$0xff]
        %v2007 = vld [vmem:[%s1988 + $0x90] sm:$0xff]
        %v2008 = vld [vmem:[%s1988 + $0x98] sm:$0xff]
        %v2009 = vld [vmem:[%s1988 + $0xa0] sm:$0xff]
        %v2010 = vld [vmem:[%s1988 + $0xa8] sm:$0xff]
        %v2011 = vld [vmem:[%s1988 + $0xb0] sm:$0xff]
        %v2012 = vld [vmem:[%s1988 + $0xb8] sm:$0xff]
        %v2013 = vld [vmem:[%s1988 + $0xc0] sm:$0xff]
        %v2014 = vld [vmem:[%s1988 + $0xc8] sm:$0xff]
        %v2015 = vld [vmem:[%s1988 + $0xd0] sm:$0xff]
        %v2016 = vld [vmem:[%s1988 + $0xd8] sm:$0xff]
        %v2017 = vld [vmem:[#allocation3] sm:$0xff]
        %v2018 = vld [vmem:[#allocation3 + $0x8] sm:$0xff]
        %v2019 = vld [vmem:[#allocation3 + $0x10] sm:$0xff]
        %v2020 = vld [vmem:[#allocation3 + $0x18] sm:$0xff]
        %v2021 = vld [vmem:[#allocation3 + $0x20] sm:$0xff]
        %v2022 = vld [vmem:[#allocation3 + $0x28] sm:$0xff]
        %v2023 = vld [vmem:[#allocation3 + $0x30] sm:$0xff]
        %v2024 = vld [vmem:[#allocation3 + $0x38] sm:$0xff]
        %v2025 = vld [vmem:[#allocation3 + $0x40] sm:$0xff]
        %v2026 = vld [vmem:[#allocation3 + $0x48] sm:$0xff]
        %v2027 = vld [vmem:[#allocation3 + $0x50] sm:$0xff]
        %v2028 = vld [vmem:[#allocation3 + $0x58] sm:$0xff]
        %v2029 = vld [vmem:[#allocation3 + $0x60] sm:$0xff]
        %v2030 = vld [vmem:[#allocation3 + $0x68] sm:$0xff]
        %v2031 = vld [vmem:[#allocation3 + $0x70] sm:$0xff]
        %v2032 = vld [vmem:[#allocation3 + $0x78] sm:$0xff]
        %v2033 = vld [vmem:[#allocation3 + $0x80] sm:$0xff]
        %v2034 = vld [vmem:[#allocation3 + $0x88] sm:$0xff]
        %v2035 = vld [vmem:[#allocation3 + $0x90] sm:$0xff]
        %v2036 = vld [vmem:[#allocation3 + $0x98] sm:$0xff]
        %v2037 = vld [vmem:[#allocation3 + $0xa0] sm:$0xff]
        %v2038 = vld [vmem:[#allocation3 + $0xa8] sm:$0xff]
        %v2039 = vld [vmem:[#allocation3 + $0xb0] sm:$0xff]
        %v2040 = vld [vmem:[#allocation3 + $0xb8] sm:$0xff]
        %v2041 = vld [vmem:[#allocation3 + $0xc0] sm:$0xff]
        %v2042 = vld [vmem:[#allocation3 + $0xc8] sm:$0xff]
        %v2043 = vld [vmem:[#allocation3 + $0xd0] sm:$0xff]
        %v2044 = vld [vmem:[#allocation3 + $0xd8] sm:$0xff]
        %v2045 = vld [vmem:[%s3] sm:$0x1]
        %v2046 = vlaneseq
        %v2047 = vshrl.u32 %v2046, 7
        %v2048 = vsub.s32 0, %v2047
        %v2049 = vrot.slane %v2045, %v2048
        %v2050 = vmul.f32 %v2017, %v2049
        %v2051 = vmul.f32 %v2018, %v2049
        %v2052 = vmul.f32 %v2019, %v2049
        %v2053 = vmul.f32 %v2020, %v2049
        %v2054 = vmul.f32 %v2021, %v2049
        %v2055 = vmul.f32 %v2022, %v2049
        %v2056 = vmul.f32 %v2023, %v2049
        %v2057 = vmul.f32 %v2024, %v2049
        %v2058 = vmul.f32 %v2025, %v2049
        %v2059 = vmul.f32 %v2026, %v2049
        %v2060 = vmul.f32 %v2027, %v2049
        %v2061 = vmul.f32 %v2028, %v2049
        %v2062 = vmul.f32 %v2029, %v2049
        %v2063 = vmul.f32 %v2030, %v2049
        %v2064 = vmul.f32 %v2031, %v2049
        %v2065 = vmul.f32 %v2032, %v2049
        %v2066 = vmul.f32 %v2033, %v2049
        %v2067 = vmul.f32 %v2034, %v2049
        %v2068 = vmul.f32 %v2035, %v2049
        %v2069 = vmul.f32 %v2036, %v2049
        %v2070 = vmul.f32 %v2037, %v2049
        %v2071 = vmul.f32 %v2038, %v2049
        %v2072 = vmul.f32 %v2039, %v2049
        %v2073 = vmul.f32 %v2040, %v2049
        %v2074 = vmul.f32 %v2041, %v2049
        %v2075 = vmul.f32 %v2042, %v2049
        %v2076 = vmul.f32 %v2043, %v2049
        %v2077 = vmul.f32 %v2044, %v2049
        %v2078 = vld [vmem:[%s1255] sm:$0xff]
        %v2079 = vld [vmem:[%s1255 + $0x8] sm:$0xff]
        %v2080 = vld [vmem:[%s1255 + $0x10] sm:$0xff]
        %v2081 = vld [vmem:[%s1255 + $0x18] sm:$0xff]
        %v2082 = vld [vmem:[%s1255 + $0x20] sm:$0xff]
        %v2083 = vld [vmem:[%s1255 + $0x28] sm:$0xff]
        %v2084 = vld [vmem:[%s1255 + $0x30] sm:$0xff]
        %v2085 = vld [vmem:[%s1255 + $0x38] sm:$0xff]
        %v2086 = vld [vmem:[%s1255 + $0x40] sm:$0xff]
        %v2087 = vld [vmem:[%s1255 + $0x48] sm:$0xff]
        %v2088 = vld [vmem:[%s1255 + $0x50] sm:$0xff]
        %v2089 = vld [vmem:[%s1255 + $0x58] sm:$0xff]
        %v2090 = vld [vmem:[%s1255 + $0x60] sm:$0xff]
        %v2091 = vld [vmem:[%s1255 + $0x68] sm:$0xff]
        %v2092 = vld [vmem:[%s1255 + $0x70] sm:$0xff]
        %v2093 = vld [vmem:[%s1255 + $0x78] sm:$0xff]
        %v2094 = vld [vmem:[%s1255 + $0x80] sm:$0xff]
        %v2095 = vld [vmem:[%s1255 + $0x88] sm:$0xff]
        %v2096 = vld [vmem:[%s1255 + $0x90] sm:$0xff]
        %v2097 = vld [vmem:[%s1255 + $0x98] sm:$0xff]
        %v2098 = vld [vmem:[%s1255 + $0xa0] sm:$0xff]
        %v2099 = vld [vmem:[%s1255 + $0xa8] sm:$0xff]
        %v2100 = vld [vmem:[%s1255 + $0xb0] sm:$0xff]
        %v2101 = vld [vmem:[%s1255 + $0xb8] sm:$0xff]
        %v2102 = vld [vmem:[%s1255 + $0xc0] sm:$0xff]
        %v2103 = vld [vmem:[%s1255 + $0xc8] sm:$0xff]
        %v2104 = vld [vmem:[%s1255 + $0xd0] sm:$0xff]
        %v2105 = vld [vmem:[%s1255 + $0xd8] sm:$0xff]
        %v2106 = vld [vmem:[%s3 + $0x1] sm:$0x1]
        %v2107 = vlaneseq
        %v2108 = vshrl.u32 %v2107, 7
        %v2109 = vsub.s32 0, %v2108
        %v2110 = vrot.slane %v2106, %v2109
        %v2111 = vmul.f32 %v2078, %v2110
        %v2112 = vmul.f32 %v2079, %v2110
        %v2113 = vmul.f32 %v2080, %v2110
        %v2114 = vmul.f32 %v2081, %v2110
        %v2115 = vmul.f32 %v2082, %v2110
        %v2116 = vmul.f32 %v2083, %v2110
        %v2117 = vmul.f32 %v2084, %v2110
        %v2118 = vmul.f32 %v2085, %v2110
        %v2119 = vmul.f32 %v2086, %v2110
        %v2120 = vmul.f32 %v2087, %v2110
        %v2121 = vmul.f32 %v2088, %v2110
        %v2122 = vmul.f32 %v2089, %v2110
        %v2123 = vmul.f32 %v2090, %v2110
        %v2124 = vmul.f32 %v2091, %v2110
        %v2125 = vmul.f32 %v2092, %v2110
        %v2126 = vmul.f32 %v2093, %v2110
        %v2127 = vmul.f32 %v2094, %v2110
        %v2128 = vmul.f32 %v2095, %v2110
        %v2129 = vmul.f32 %v2096, %v2110
        %v2130 = vmul.f32 %v2097, %v2110
        %v2131 = vmul.f32 %v2098, %v2110
        %v2132 = vmul.f32 %v2099, %v2110
        %v2133 = vmul.f32 %v2100, %v2110
        %v2134 = vmul.f32 %v2101, %v2110
        %v2135 = vmul.f32 %v2102, %v2110
        %v2136 = vmul.f32 %v2103, %v2110
        %v2137 = vmul.f32 %v2104, %v2110
        %v2138 = vmul.f32 %v2105, %v2110
        %v2139 = vadd.f32 %v2050, %v2111
        %v2140 = vadd.f32 %v2051, %v2112
        %v2141 = vadd.f32 %v2052, %v2113
        %v2142 = vadd.f32 %v2053, %v2114
        %v2143 = vadd.f32 %v2054, %v2115
        %v2144 = vadd.f32 %v2055, %v2116
        %v2145 = vadd.f32 %v2056, %v2117
        %v2146 = vadd.f32 %v2057, %v2118
        %v2147 = vadd.f32 %v2058, %v2119
        %v2148 = vadd.f32 %v2059, %v2120
        %v2149 = vadd.f32 %v2060, %v2121
        %v2150 = vadd.f32 %v2061, %v2122
        %v2151 = vadd.f32 %v2062, %v2123
        %v2152 = vadd.f32 %v2063, %v2124
        %v2153 = vadd.f32 %v2064, %v2125
        %v2154 = vadd.f32 %v2065, %v2126
        %v2155 = vadd.f32 %v2066, %v2127
        %v2156 = vadd.f32 %v2067, %v2128
        %v2157 = vadd.f32 %v2068, %v2129
        %v2158 = vadd.f32 %v2069, %v2130
        %v2159 = vadd.f32 %v2070, %v2131
        %v2160 = vadd.f32 %v2071, %v2132
        %v2161 = vadd.f32 %v2072, %v2133
        %v2162 = vadd.f32 %v2073, %v2134
        %v2163 = vadd.f32 %v2074, %v2135
        %v2164 = vadd.f32 %v2075, %v2136
        %v2165 = vadd.f32 %v2076, %v2137
        %v2166 = vadd.f32 %v2077, %v2138
        %v2167 = vld [vmem:[%s1320] sm:$0xff]
        %v2168 = vld [vmem:[%s1320 + $0x8] sm:$0xff]
        %v2169 = vld [vmem:[%s1320 + $0x10] sm:$0xff]
        %v2170 = vld [vmem:[%s1320 + $0x18] sm:$0xff]
        %v2171 = vld [vmem:[%s1320 + $0x20] sm:$0xff]
        %v2172 = vld [vmem:[%s1320 + $0x28] sm:$0xff]
        %v2173 = vld [vmem:[%s1320 + $0x30] sm:$0xff]
        %v2174 = vld [vmem:[%s1320 + $0x38] sm:$0xff]
        %v2175 = vld [vmem:[%s1320 + $0x40] sm:$0xff]
        %v2176 = vld [vmem:[%s1320 + $0x48] sm:$0xff]
        %v2177 = vld [vmem:[%s1320 + $0x50] sm:$0xff]
        %v2178 = vld [vmem:[%s1320 + $0x58] sm:$0xff]
        %v2179 = vld [vmem:[%s1320 + $0x60] sm:$0xff]
        %v2180 = vld [vmem:[%s1320 + $0x68] sm:$0xff]
        %v2181 = vld [vmem:[%s1320 + $0x70] sm:$0xff]
        %v2182 = vld [vmem:[%s1320 + $0x78] sm:$0xff]
        %v2183 = vld [vmem:[%s1320 + $0x80] sm:$0xff]
        %v2184 = vld [vmem:[%s1320 + $0x88] sm:$0xff]
        %v2185 = vld [vmem:[%s1320 + $0x90] sm:$0xff]
        %v2186 = vld [vmem:[%s1320 + $0x98] sm:$0xff]
        %v2187 = vld [vmem:[%s1320 + $0xa0] sm:$0xff]
        %v2188 = vld [vmem:[%s1320 + $0xa8] sm:$0xff]
        %v2189 = vld [vmem:[%s1320 + $0xb0] sm:$0xff]
        %v2190 = vld [vmem:[%s1320 + $0xb8] sm:$0xff]
        %v2191 = vld [vmem:[%s1320 + $0xc0] sm:$0xff]
        %v2192 = vld [vmem:[%s1320 + $0xc8] sm:$0xff]
        %v2193 = vld [vmem:[%s1320 + $0xd0] sm:$0xff]
        %v2194 = vld [vmem:[%s1320 + $0xd8] sm:$0xff]
        %v2195 = vld [vmem:[%s3 + $0x2] sm:$0x1]
        %v2196 = vlaneseq
        %v2197 = vshrl.u32 %v2196, 7
        %v2198 = vsub.s32 0, %v2197
        %v2199 = vrot.slane %v2195, %v2198
        %v2200 = vmul.f32 %v2167, %v2199
        %v2201 = vmul.f32 %v2168, %v2199
        %v2202 = vmul.f32 %v2169, %v2199
        %v2203 = vmul.f32 %v2170, %v2199
        %v2204 = vmul.f32 %v2171, %v2199
        %v2205 = vmul.f32 %v2172, %v2199
        %v2206 = vmul.f32 %v2173, %v2199
        %v2207 = vmul.f32 %v2174, %v2199
        %v2208 = vmul.f32 %v2175, %v2199
        %v2209 = vmul.f32 %v2176, %v2199
        %v2210 = vmul.f32 %v2177, %v2199
        %v2211 = vmul.f32 %v2178, %v2199
        %v2212 = vmul.f32 %v2179, %v2199
        %v2213 = vmul.f32 %v2180, %v2199
        %v2214 = vmul.f32 %v2181, %v2199
        %v2215 = vmul.f32 %v2182, %v2199
        %v2216 = vmul.f32 %v2183, %v2199
        %v2217 = vmul.f32 %v2184, %v2199
        %v2218 = vmul.f32 %v2185, %v2199
        %v2219 = vmul.f32 %v2186, %v2199
        %v2220 = vmul.f32 %v2187, %v2199
        %v2221 = vmul.f32 %v2188, %v2199
        %v2222 = vmul.f32 %v2189, %v2199
        %v2223 = vmul.f32 %v2190, %v2199
        %v2224 = vmul.f32 %v2191, %v2199
        %v2225 = vmul.f32 %v2192, %v2199
        %v2226 = vmul.f32 %v2193, %v2199
        %v2227 = vmul.f32 %v2194, %v2199
        %v2228 = vadd.f32 %v2139, %v2200
        %v2229 = vadd.f32 %v2140, %v2201
        %v2230 = vadd.f32 %v2141, %v2202
        %v2231 = vadd.f32 %v2142, %v2203
        %v2232 = vadd.f32 %v2143, %v2204
        %v2233 = vadd.f32 %v2144, %v2205
        %v2234 = vadd.f32 %v2145, %v2206
        %v2235 = vadd.f32 %v2146, %v2207
        %v2236 = vadd.f32 %v2147, %v2208
        %v2237 = vadd.f32 %v2148, %v2209
        %v2238 = vadd.f32 %v2149, %v2210
        %v2239 = vadd.f32 %v2150, %v2211
        %v2240 = vadd.f32 %v2151, %v2212
        %v2241 = vadd.f32 %v2152, %v2213
        %v2242 = vadd.f32 %v2153, %v2214
        %v2243 = vadd.f32 %v2154, %v2215
        %v2244 = vadd.f32 %v2155, %v2216
        %v2245 = vadd.f32 %v2156, %v2217
        %v2246 = vadd.f32 %v2157, %v2218
        %v2247 = vadd.f32 %v2158, %v2219
        %v2248 = vadd.f32 %v2159, %v2220
        %v2249 = vadd.f32 %v2160, %v2221
        %v2250 = vadd.f32 %v2161, %v2222
        %v2251 = vadd.f32 %v2162, %v2223
        %v2252 = vadd.f32 %v2163, %v2224
        %v2253 = vadd.f32 %v2164, %v2225
        %v2254 = vadd.f32 %v2165, %v2226
        %v2255 = vadd.f32 %v2166, %v2227
        %v2256 = vld [vmem:[%s1385] sm:$0xff]
        %v2257 = vld [vmem:[%s1385 + $0x8] sm:$0xff]
        %v2258 = vld [vmem:[%s1385 + $0x10] sm:$0xff]
        %v2259 = vld [vmem:[%s1385 + $0x18] sm:$0xff]
        %v2260 = vld [vmem:[%s1385 + $0x20] sm:$0xff]
        %v2261 = vld [vmem:[%s1385 + $0x28] sm:$0xff]
        %v2262 = vld [vmem:[%s1385 + $0x30] sm:$0xff]
        %v2263 = vld [vmem:[%s1385 + $0x38] sm:$0xff]
        %v2264 = vld [vmem:[%s1385 + $0x40] sm:$0xff]
        %v2265 = vld [vmem:[%s1385 + $0x48] sm:$0xff]
        %v2266 = vld [vmem:[%s1385 + $0x50] sm:$0xff]
        %v2267 = vld [vmem:[%s1385 + $0x58] sm:$0xff]
        %v2268 = vld [vmem:[%s1385 + $0x60] sm:$0xff]
        %v2269 = vld [vmem:[%s1385 + $0x68] sm:$0xff]
        %v2270 = vld [vmem:[%s1385 + $0x70] sm:$0xff]
        %v2271 = vld [vmem:[%s1385 + $0x78] sm:$0xff]
        %v2272 = vld [vmem:[%s1385 + $0x80] sm:$0xff]
        %v2273 = vld [vmem:[%s1385 + $0x88] sm:$0xff]
        %v2274 = vld [vmem:[%s1385 + $0x90] sm:$0xff]
        %v2275 = vld [vmem:[%s1385 + $0x98] sm:$0xff]
        %v2276 = vld [vmem:[%s1385 + $0xa0] sm:$0xff]
        %v2277 = vld [vmem:[%s1385 + $0xa8] sm:$0xff]
        %v2278 = vld [vmem:[%s1385 + $0xb0] sm:$0xff]
        %v2279 = vld [vmem:[%s1385 + $0xb8] sm:$0xff]
        %v2280 = vld [vmem:[%s1385 + $0xc0] sm:$0xff]
        %v2281 = vld [vmem:[%s1385 + $0xc8] sm:$0xff]
        %v2282 = vld [vmem:[%s1385 + $0xd0] sm:$0xff]
        %v2283 = vld [vmem:[%s1385 + $0xd8] sm:$0xff]
        %v2284 = vld [vmem:[%s3 + $0x3] sm:$0x1]
        %v2285 = vlaneseq
        %v2286 = vshrl.u32 %v2285, 7
        %v2287 = vsub.s32 0, %v2286
        %v2288 = vrot.slane %v2284, %v2287
        %v2289 = vmul.f32 %v2256, %v2288
        %v2290 = vmul.f32 %v2257, %v2288
        %v2291 = vmul.f32 %v2258, %v2288
        %v2292 = vmul.f32 %v2259, %v2288
        %v2293 = vmul.f32 %v2260, %v2288
        %v2294 = vmul.f32 %v2261, %v2288
        %v2295 = vmul.f32 %v2262, %v2288
        %v2296 = vmul.f32 %v2263, %v2288
        %v2297 = vmul.f32 %v2264, %v2288
        %v2298 = vmul.f32 %v2265, %v2288
        %v2299 = vmul.f32 %v2266, %v2288
        %v2300 = vmul.f32 %v2267, %v2288
        %v2301 = vmul.f32 %v2268, %v2288
        %v2302 = vmul.f32 %v2269, %v2288
        %v2303 = vmul.f32 %v2270, %v2288
        %v2304 = vmul.f32 %v2271, %v2288
        %v2305 = vmul.f32 %v2272, %v2288
        %v2306 = vmul.f32 %v2273, %v2288
        %v2307 = vmul.f32 %v2274, %v2288
        %v2308 = vmul.f32 %v2275, %v2288
        %v2309 = vmul.f32 %v2276, %v2288
        %v2310 = vmul.f32 %v2277, %v2288
        %v2311 = vmul.f32 %v2278, %v2288
        %v2312 = vmul.f32 %v2279, %v2288
        %v2313 = vmul.f32 %v2280, %v2288
        %v2314 = vmul.f32 %v2281, %v2288
        %v2315 = vmul.f32 %v2282, %v2288
        %v2316 = vmul.f32 %v2283, %v2288
        %v2317 = vadd.f32 %v2228, %v2289
        %v2318 = vadd.f32 %v2229, %v2290
        %v2319 = vadd.f32 %v2230, %v2291
        %v2320 = vadd.f32 %v2231, %v2292
        %v2321 = vadd.f32 %v2232, %v2293
        %v2322 = vadd.f32 %v2233, %v2294
        %v2323 = vadd.f32 %v2234, %v2295
        %v2324 = vadd.f32 %v2235, %v2296
        %v2325 = vadd.f32 %v2236, %v2297
        %v2326 = vadd.f32 %v2237, %v2298
        %v2327 = vadd.f32 %v2238, %v2299
        %v2328 = vadd.f32 %v2239, %v2300
        %v2329 = vadd.f32 %v2240, %v2301
        %v2330 = vadd.f32 %v2241, %v2302
        %v2331 = vadd.f32 %v2242, %v2303
        %v2332 = vadd.f32 %v2243, %v2304
        %v2333 = vadd.f32 %v2244, %v2305
        %v2334 = vadd.f32 %v2245, %v2306
        %v2335 = vadd.f32 %v2246, %v2307
        %v2336 = vadd.f32 %v2247, %v2308
        %v2337 = vadd.f32 %v2248, %v2309
        %v2338 = vadd.f32 %v2249, %v2310
        %v2339 = vadd.f32 %v2250, %v2311
        %v2340 = vadd.f32 %v2251, %v2312
        %v2341 = vadd.f32 %v2252, %v2313
        %v2342 = vadd.f32 %v2253, %v2314
        %v2343 = vadd.f32 %v2254, %v2315
        %v2344 = vadd.f32 %v2255, %v2316
        %v2345 = vld [vmem:[%s1450] sm:$0xff]
        %v2346 = vld [vmem:[%s1450 + $0x8] sm:$0xff]
        %v2347 = vld [vmem:[%s1450 + $0x10] sm:$0xff]
        %v2348 = vld [vmem:[%s1450 + $0x18] sm:$0xff]
        %v2349 = vld [vmem:[%s1450 + $0x20] sm:$0xff]
        %v2350 = vld [vmem:[%s1450 + $0x28] sm:$0xff]
        %v2351 = vld [vmem:[%s1450 + $0x30] sm:$0xff]
        %v2352 = vld [vmem:[%s1450 + $0x38] sm:$0xff]
        %v2353 = vld [vmem:[%s1450 + $0x40] sm:$0xff]
        %v2354 = vld [vmem:[%s1450 + $0x48] sm:$0xff]
        %v2355 = vld [vmem:[%s1450 + $0x50] sm:$0xff]
        %v2356 = vld [vmem:[%s1450 + $0x58] sm:$0xff]
        %v2357 = vld [vmem:[%s1450 + $0x60] sm:$0xff]
        %v2358 = vld [vmem:[%s1450 + $0x68] sm:$0xff]
        %v2359 = vld [vmem:[%s1450 + $0x70] sm:$0xff]
        %v2360 = vld [vmem:[%s1450 + $0x78] sm:$0xff]
        %v2361 = vld [vmem:[%s1450 + $0x80] sm:$0xff]
        %v2362 = vld [vmem:[%s1450 + $0x88] sm:$0xff]
        %v2363 = vld [vmem:[%s1450 + $0x90] sm:$0xff]
        %v2364 = vld [vmem:[%s1450 + $0x98] sm:$0xff]
        %v2365 = vld [vmem:[%s1450 + $0xa0] sm:$0xff]
        %v2366 = vld [vmem:[%s1450 + $0xa8] sm:$0xff]
        %v2367 = vld [vmem:[%s1450 + $0xb0] sm:$0xff]
        %v2368 = vld [vmem:[%s1450 + $0xb8] sm:$0xff]
        %v2369 = vld [vmem:[%s1450 + $0xc0] sm:$0xff]
        %v2370 = vld [vmem:[%s1450 + $0xc8] sm:$0xff]
        %v2371 = vld [vmem:[%s1450 + $0xd0] sm:$0xff]
        %v2372 = vld [vmem:[%s1450 + $0xd8] sm:$0xff]
        %v2373 = vld [vmem:[%s3 + $0x4] sm:$0x1]
        %v2374 = vlaneseq
        %v2375 = vshrl.u32 %v2374, 7
        %v2376 = vsub.s32 0, %v2375
        %v2377 = vrot.slane %v2373, %v2376
        %v2378 = vmul.f32 %v2345, %v2377
        %v2379 = vmul.f32 %v2346, %v2377
        %v2380 = vmul.f32 %v2347, %v2377
        %v2381 = vmul.f32 %v2348, %v2377
        %v2382 = vmul.f32 %v2349, %v2377
        %v2383 = vmul.f32 %v2350, %v2377
        %v2384 = vmul.f32 %v2351, %v2377
        %v2385 = vmul.f32 %v2352, %v2377
        %v2386 = vmul.f32 %v2353, %v2377
        %v2387 = vmul.f32 %v2354, %v2377
        %v2388 = vmul.f32 %v2355, %v2377
        %v2389 = vmul.f32 %v2356, %v2377
        %v2390 = vmul.f32 %v2357, %v2377
        %v2391 = vmul.f32 %v2358, %v2377
        %v2392 = vmul.f32 %v2359, %v2377
        %v2393 = vmul.f32 %v2360, %v2377
        %v2394 = vmul.f32 %v2361, %v2377
        %v2395 = vmul.f32 %v2362, %v2377
        %v2396 = vmul.f32 %v2363, %v2377
        %v2397 = vmul.f32 %v2364, %v2377
        %v2398 = vmul.f32 %v2365, %v2377
        %v2399 = vmul.f32 %v2366, %v2377
        %v2400 = vmul.f32 %v2367, %v2377
        %v2401 = vmul.f32 %v2368, %v2377
        %v2402 = vmul.f32 %v2369, %v2377
        %v2403 = vmul.f32 %v2370, %v2377
        %v2404 = vmul.f32 %v2371, %v2377
        %v2405 = vmul.f32 %v2372, %v2377
        %v2406 = vadd.f32 %v2317, %v2378
        %v2407 = vadd.f32 %v2318, %v2379
        %v2408 = vadd.f32 %v2319, %v2380
        %v2409 = vadd.f32 %v2320, %v2381
        %v2410 = vadd.f32 %v2321, %v2382
        %v2411 = vadd.f32 %v2322, %v2383
        %v2412 = vadd.f32 %v2323, %v2384
        %v2413 = vadd.f32 %v2324, %v2385
        %v2414 = vadd.f32 %v2325, %v2386
        %v2415 = vadd.f32 %v2326, %v2387
        %v2416 = vadd.f32 %v2327, %v2388
        %v2417 = vadd.f32 %v2328, %v2389
        %v2418 = vadd.f32 %v2329, %v2390
        %v2419 = vadd.f32 %v2330, %v2391
        %v2420 = vadd.f32 %v2331, %v2392
        %v2421 = vadd.f32 %v2332, %v2393
        %v2422 = vadd.f32 %v2333, %v2394
        %v2423 = vadd.f32 %v2334, %v2395
        %v2424 = vadd.f32 %v2335, %v2396
        %v2425 = vadd.f32 %v2336, %v2397
        %v2426 = vadd.f32 %v2337, %v2398
        %v2427 = vadd.f32 %v2338, %v2399
        %v2428 = vadd.f32 %v2339, %v2400
        %v2429 = vadd.f32 %v2340, %v2401
        %v2430 = vadd.f32 %v2341, %v2402
        %v2431 = vadd.f32 %v2342, %v2403
        %v2432 = vadd.f32 %v2343, %v2404
        %v2433 = vadd.f32 %v2344, %v2405
        %v2434 = vadd.f32 %v1989, %v2406
        %v2435 = vadd.f32 %v1990, %v2407
        %v2436 = vadd.f32 %v1991, %v2408
        %v2437 = vadd.f32 %v1992, %v2409
        %v2438 = vadd.f32 %v1993, %v2410
        %v2439 = vadd.f32 %v1994, %v2411
        %v2440 = vadd.f32 %v1995, %v2412
        %v2441 = vadd.f32 %v1996, %v2413
        %v2442 = vadd.f32 %v1997, %v2414
        %v2443 = vadd.f32 %v1998, %v2415
        %v2444 = vadd.f32 %v1999, %v2416
        %v2445 = vadd.f32 %v2000, %v2417
        %v2446 = vadd.f32 %v2001, %v2418
        %v2447 = vadd.f32 %v2002, %v2419
        %v2448 = vadd.f32 %v2003, %v2420
        %v2449 = vadd.f32 %v2004, %v2421
        %v2450 = vadd.f32 %v2005, %v2422
        %v2451 = vadd.f32 %v2006, %v2423
        %v2452 = vadd.f32 %v2007, %v2424
        %v2453 = vadd.f32 %v2008, %v2425
        %v2454 = vadd.f32 %v2009, %v2426
        %v2455 = vadd.f32 %v2010, %v2427
        %v2456 = vadd.f32 %v2011, %v2428
        %v2457 = vadd.f32 %v2012, %v2429
        %v2458 = vadd.f32 %v2013, %v2430
        %v2459 = vadd.f32 %v2014, %v2431
        %v2460 = vadd.f32 %v2015, %v2432
        %v2461 = vadd.f32 %v2016, %v2433
        %2462 = vst [vmem:[%s1988] sm:$0xff] %v2434
        %2463 = vst [vmem:[%s1988 + $0x8] sm:$0xff] %v2435
        %2464 = vst [vmem:[%s1988 + $0x10] sm:$0xff] %v2436
        %2465 = vst [vmem:[%s1988 + $0x18] sm:$0xff] %v2437
        %2466 = vst [vmem:[%s1988 + $0x20] sm:$0xff] %v2438
        %2467 = vst [vmem:[%s1988 + $0x28] sm:$0xff] %v2439
        %2468 = vst [vmem:[%s1988 + $0x30] sm:$0xff] %v2440
        %2469 = vst [vmem:[%s1988 + $0x38] sm:$0xff] %v2441
        %2470 = vst [vmem:[%s1988 + $0x40] sm:$0xff] %v2442
        %2471 = vst [vmem:[%s1988 + $0x48] sm:$0xff] %v2443
        %2472 = vst [vmem:[%s1988 + $0x50] sm:$0xff] %v2444
        %2473 = vst [vmem:[%s1988 + $0x58] sm:$0xff] %v2445
        %2474 = vst [vmem:[%s1988 + $0x60] sm:$0xff] %v2446
        %2475 = vst [vmem:[%s1988 + $0x68] sm:$0xff] %v2447
        %2476 = vst [vmem:[%s1988 + $0x70] sm:$0xff] %v2448
        %2477 = vst [vmem:[%s1988 + $0x78] sm:$0xff] %v2449
        %2478 = vst [vmem:[%s1988 + $0x80] sm:$0xff] %v2450
        %2479 = vst [vmem:[%s1988 + $0x88] sm:$0xff] %v2451
        %2480 = vst [vmem:[%s1988 + $0x90] sm:$0xff] %v2452
        %2481 = vst [vmem:[%s1988 + $0x98] sm:$0xff] %v2453
        %2482 = vst [vmem:[%s1988 + $0xa0] sm:$0xff] %v2454
        %2483 = vst [vmem:[%s1988 + $0xa8] sm:$0xff] %v2455
        %2484 = vst [vmem:[%s1988 + $0xb0] sm:$0xff] %v2456
        %2485 = vst [vmem:[%s1988 + $0xb8] sm:$0xff] %v2457
        %2486 = vst [vmem:[%s1988 + $0xc0] sm:$0xff] %v2458
        %2487 = vst [vmem:[%s1988 + $0xc8] sm:$0xff] %v2459
        %2488 = vst [vmem:[%s1988 + $0xd0] sm:$0xff] %v2460
        %2489 = vst [vmem:[%s1988 + $0xd8] sm:$0xff] %v2461
        %s2490 = scalar_lea.vmem [#allocation4], 16
        %v2491 = vld [vmem:[%s2490] sm:$0xff]
        %v2492 = vld [vmem:[%s2490 + $0x8] sm:$0xff]
        %v2493 = vld [vmem:[%s2490 + $0x10] sm:$0xff]
        %v2494 = vld [vmem:[%s2490 + $0x18] sm:$0xff]
        %v2495 = vld [vmem:[%s2490 + $0x20] sm:$0xff]
        %v2496 = vld [vmem:[%s2490 + $0x28] sm:$0xff]
        %v2497 = vld [vmem:[%s2490 + $0x30] sm:$0xff]
        %v2498 = vld [vmem:[%s2490 + $0x38] sm:$0xff]
        %v2499 = vld [vmem:[%s2490 + $0x40] sm:$0xff]
        %v2500 = vld [vmem:[%s2490 + $0x48] sm:$0xff]
        %v2501 = vld [vmem:[%s2490 + $0x50] sm:$0xff]
        %v2502 = vld [vmem:[%s2490 + $0x58] sm:$0xff]
        %v2503 = vld [vmem:[%s2490 + $0x60] sm:$0xff]
        %v2504 = vld [vmem:[%s2490 + $0x68] sm:$0xff]
        %v2505 = vld [vmem:[%s2490 + $0x70] sm:$0xff]
        %v2506 = vld [vmem:[%s2490 + $0x78] sm:$0xff]
        %v2507 = vld [vmem:[%s2490 + $0x80] sm:$0xff]
        %v2508 = vld [vmem:[%s2490 + $0x88] sm:$0xff]
        %v2509 = vld [vmem:[%s2490 + $0x90] sm:$0xff]
        %v2510 = vld [vmem:[%s2490 + $0x98] sm:$0xff]
        %v2511 = vld [vmem:[%s2490 + $0xa0] sm:$0xff]
        %v2512 = vld [vmem:[%s2490 + $0xa8] sm:$0xff]
        %v2513 = vld [vmem:[%s2490 + $0xb0] sm:$0xff]
        %v2514 = vld [vmem:[%s2490 + $0xb8] sm:$0xff]
        %v2515 = vld [vmem:[%s2490 + $0xc0] sm:$0xff]
        %v2516 = vld [vmem:[%s2490 + $0xc8] sm:$0xff]
        %v2517 = vld [vmem:[%s2490 + $0xd0] sm:$0xff]
        %v2518 = vld [vmem:[%s2490 + $0xd8] sm:$0xff]
        %v2519 = vld [vmem:[%s2490 + $0xe0] sm:$0xff]
        %v2520 = vld [vmem:[%s2490 + $0xe8] sm:$0xff]
        %v2521 = vld [vmem:[#allocation3] sm:$0xff]
        %v2522 = vld [vmem:[#allocation3 + $0x8] sm:$0xff]
        %v2523 = vld [vmem:[#allocation3 + $0x10] sm:$0xff]
        %v2524 = vld [vmem:[#allocation3 + $0x18] sm:$0xff]
        %v2525 = vld [vmem:[#allocation3 + $0x20] sm:$0xff]
        %v2526 = vld [vmem:[#allocation3 + $0x28] sm:$0xff]
        %v2527 = vld [vmem:[#allocation3 + $0x30] sm:$0xff]
        %v2528 = vld [vmem:[#allocation3 + $0x38] sm:$0xff]
        %v2529 = vld [vmem:[#allocation3 + $0x40] sm:$0xff]
        %v2530 = vld [vmem:[#allocation3 + $0x48] sm:$0xff]
        %v2531 = vld [vmem:[#allocation3 + $0x50] sm:$0xff]
        %v2532 = vld [vmem:[#allocation3 + $0x58] sm:$0xff]
        %v2533 = vld [vmem:[#allocation3 + $0x60] sm:$0xff]
        %v2534 = vld [vmem:[#allocation3 + $0x68] sm:$0xff]
        %v2535 = vld [vmem:[#allocation3 + $0x70] sm:$0xff]
        %v2536 = vld [vmem:[#allocation3 + $0x78] sm:$0xff]
        %v2537 = vld [vmem:[#allocation3 + $0x80] sm:$0xff]
        %v2538 = vld [vmem:[#allocation3 + $0x88] sm:$0xff]
        %v2539 = vld [vmem:[#allocation3 + $0x90] sm:$0xff]
        %v2540 = vld [vmem:[#allocation3 + $0x98] sm:$0xff]
        %v2541 = vld [vmem:[#allocation3 + $0xa0] sm:$0xff]
        %v2542 = vld [vmem:[#allocation3 + $0xa8] sm:$0xff]
        %v2543 = vld [vmem:[#allocation3 + $0xb0] sm:$0xff]
        %v2544 = vld [vmem:[#allocation3 + $0xb8] sm:$0xff]
        %v2545 = vld [vmem:[#allocation3 + $0xc0] sm:$0xff]
        %v2546 = vld [vmem:[#allocation3 + $0xc8] sm:$0xff]
        %v2547 = vld [vmem:[#allocation3 + $0xd0] sm:$0xff]
        %v2548 = vld [vmem:[#allocation3 + $0xd8] sm:$0xff]
        %v2549 = vld [vmem:[#allocation3 + $0xe0] sm:$0xff]
        %v2550 = vld [vmem:[#allocation3 + $0xe8] sm:$0xff]
        %v2551 = vld [vmem:[%s3 + $0x5] sm:$0x1]
        %v2552 = vlaneseq
        %v2553 = vshrl.u32 %v2552, 7
        %v2554 = vsub.s32 0, %v2553
        %v2555 = vrot.slane %v2551, %v2554
        %v2556 = vmul.f32 %v2521, %v2555
        %v2557 = vmul.f32 %v2522, %v2555
        %v2558 = vmul.f32 %v2523, %v2555
        %v2559 = vmul.f32 %v2524, %v2555
        %v2560 = vmul.f32 %v2525, %v2555
        %v2561 = vmul.f32 %v2526, %v2555
        %v2562 = vmul.f32 %v2527, %v2555
        %v2563 = vmul.f32 %v2528, %v2555
        %v2564 = vmul.f32 %v2529, %v2555
        %v2565 = vmul.f32 %v2530, %v2555
        %v2566 = vmul.f32 %v2531, %v2555
        %v2567 = vmul.f32 %v2532, %v2555
        %v2568 = vmul.f32 %v2533, %v2555
        %v2569 = vmul.f32 %v2534, %v2555
        %v2570 = vmul.f32 %v2535, %v2555
        %v2571 = vmul.f32 %v2536, %v2555
        %v2572 = vmul.f32 %v2537, %v2555
        %v2573 = vmul.f32 %v2538, %v2555
        %v2574 = vmul.f32 %v2539, %v2555
        %v2575 = vmul.f32 %v2540, %v2555
        %v2576 = vmul.f32 %v2541, %v2555
        %v2577 = vmul.f32 %v2542, %v2555
        %v2578 = vmul.f32 %v2543, %v2555
        %v2579 = vmul.f32 %v2544, %v2555
        %v2580 = vmul.f32 %v2545, %v2555
        %v2581 = vmul.f32 %v2546, %v2555
        %v2582 = vmul.f32 %v2547, %v2555
        %v2583 = vmul.f32 %v2548, %v2555
        %v2584 = vmul.f32 %v2549, %v2555
        %v2585 = vmul.f32 %v2550, %v2555
        %v2586 = vld [vmem:[%s1255] sm:$0xff]
        %v2587 = vld [vmem:[%s1255 + $0x8] sm:$0xff]
        %v2588 = vld [vmem:[%s1255 + $0x10] sm:$0xff]
        %v2589 = vld [vmem:[%s1255 + $0x18] sm:$0xff]
        %v2590 = vld [vmem:[%s1255 + $0x20] sm:$0xff]
        %v2591 = vld [vmem:[%s1255 + $0x28] sm:$0xff]
        %v2592 = vld [vmem:[%s1255 + $0x30] sm:$0xff]
        %v2593 = vld [vmem:[%s1255 + $0x38] sm:$0xff]
        %v2594 = vld [vmem:[%s1255 + $0x40] sm:$0xff]
        %v2595 = vld [vmem:[%s1255 + $0x48] sm:$0xff]
        %v2596 = vld [vmem:[%s1255 + $0x50] sm:$0xff]
        %v2597 = vld [vmem:[%s1255 + $0x58] sm:$0xff]
        %v2598 = vld [vmem:[%s1255 + $0x60] sm:$0xff]
        %v2599 = vld [vmem:[%s1255 + $0x68] sm:$0xff]
        %v2600 = vld [vmem:[%s1255 + $0x70] sm:$0xff]
        %v2601 = vld [vmem:[%s1255 + $0x78] sm:$0xff]
        %v2602 = vld [vmem:[%s1255 + $0x80] sm:$0xff]
        %v2603 = vld [vmem:[%s1255 + $0x88] sm:$0xff]
        %v2604 = vld [vmem:[%s1255 + $0x90] sm:$0xff]
        %v2605 = vld [vmem:[%s1255 + $0x98] sm:$0xff]
        %v2606 = vld [vmem:[%s1255 + $0xa0] sm:$0xff]
        %v2607 = vld [vmem:[%s1255 + $0xa8] sm:$0xff]
        %v2608 = vld [vmem:[%s1255 + $0xb0] sm:$0xff]
        %v2609 = vld [vmem:[%s1255 + $0xb8] sm:$0xff]
        %v2610 = vld [vmem:[%s1255 + $0xc0] sm:$0xff]
        %v2611 = vld [vmem:[%s1255 + $0xc8] sm:$0xff]
        %v2612 = vld [vmem:[%s1255 + $0xd0] sm:$0xff]
        %v2613 = vld [vmem:[%s1255 + $0xd8] sm:$0xff]
        %v2614 = vld [vmem:[%s1255 + $0xe0] sm:$0xff]
        %v2615 = vld [vmem:[%s1255 + $0xe8] sm:$0xff]
        %v2616 = vld [vmem:[%s3 + $0x6] sm:$0x1]
        %v2617 = vlaneseq
        %v2618 = vshrl.u32 %v2617, 7
        %v2619 = vsub.s32 0, %v2618
        %v2620 = vrot.slane %v2616, %v2619
        %v2621 = vmul.f32 %v2586, %v2620
        %v2622 = vmul.f32 %v2587, %v2620
        %v2623 = vmul.f32 %v2588, %v2620
        %v2624 = vmul.f32 %v2589, %v2620
        %v2625 = vmul.f32 %v2590, %v2620
        %v2626 = vmul.f32 %v2591, %v2620
        %v2627 = vmul.f32 %v2592, %v2620
        %v2628 = vmul.f32 %v2593, %v2620
        %v2629 = vmul.f32 %v2594, %v2620
        %v2630 = vmul.f32 %v2595, %v2620
        %v2631 = vmul.f32 %v2596, %v2620
        %v2632 = vmul.f32 %v2597, %v2620
        %v2633 = vmul.f32 %v2598, %v2620
        %v2634 = vmul.f32 %v2599, %v2620
        %v2635 = vmul.f32 %v2600, %v2620
        %v2636 = vmul.f32 %v2601, %v2620
        %v2637 = vmul.f32 %v2602, %v2620
        %v2638 = vmul.f32 %v2603, %v2620
        %v2639 = vmul.f32 %v2604, %v2620
        %v2640 = vmul.f32 %v2605, %v2620
        %v2641 = vmul.f32 %v2606, %v2620
        %v2642 = vmul.f32 %v2607, %v2620
        %v2643 = vmul.f32 %v2608, %v2620
        %v2644 = vmul.f32 %v2609, %v2620
        %v2645 = vmul.f32 %v2610, %v2620
        %v2646 = vmul.f32 %v2611, %v2620
        %v2647 = vmul.f32 %v2612, %v2620
        %v2648 = vmul.f32 %v2613, %v2620
        %v2649 = vmul.f32 %v2614, %v2620
        %v2650 = vmul.f32 %v2615, %v2620
        %v2651 = vadd.f32 %v2556, %v2621
        %v2652 = vadd.f32 %v2557, %v2622
        %v2653 = vadd.f32 %v2558, %v2623
        %v2654 = vadd.f32 %v2559, %v2624
        %v2655 = vadd.f32 %v2560, %v2625
        %v2656 = vadd.f32 %v2561, %v2626
        %v2657 = vadd.f32 %v2562, %v2627
        %v2658 = vadd.f32 %v2563, %v2628
        %v2659 = vadd.f32 %v2564, %v2629
        %v2660 = vadd.f32 %v2565, %v2630
        %v2661 = vadd.f32 %v2566, %v2631
        %v2662 = vadd.f32 %v2567, %v2632
        %v2663 = vadd.f32 %v2568, %v2633
        %v2664 = vadd.f32 %v2569, %v2634
        %v2665 = vadd.f32 %v2570, %v2635
        %v2666 = vadd.f32 %v2571, %v2636
        %v2667 = vadd.f32 %v2572, %v2637
        %v2668 = vadd.f32 %v2573, %v2638
        %v2669 = vadd.f32 %v2574, %v2639
        %v2670 = vadd.f32 %v2575, %v2640
        %v2671 = vadd.f32 %v2576, %v2641
        %v2672 = vadd.f32 %v2577, %v2642
        %v2673 = vadd.f32 %v2578, %v2643
        %v2674 = vadd.f32 %v2579, %v2644
        %v2675 = vadd.f32 %v2580, %v2645
        %v2676 = vadd.f32 %v2581, %v2646
        %v2677 = vadd.f32 %v2582, %v2647
        %v2678 = vadd.f32 %v2583, %v2648
        %v2679 = vadd.f32 %v2584, %v2649
        %v2680 = vadd.f32 %v2585, %v2650
        %v2681 = vld [vmem:[%s1320] sm:$0xff]
        %v2682 = vld [vmem:[%s1320 + $0x8] sm:$0xff]
        %v2683 = vld [vmem:[%s1320 + $0x10] sm:$0xff]
        %v2684 = vld [vmem:[%s1320 + $0x18] sm:$0xff]
        %v2685 = vld [vmem:[%s1320 + $0x20] sm:$0xff]
        %v2686 = vld [vmem:[%s1320 + $0x28] sm:$0xff]
        %v2687 = vld [vmem:[%s1320 + $0x30] sm:$0xff]
        %v2688 = vld [vmem:[%s1320 + $0x38] sm:$0xff]
        %v2689 = vld [vmem:[%s1320 + $0x40] sm:$0xff]
        %v2690 = vld [vmem:[%s1320 + $0x48] sm:$0xff]
        %v2691 = vld [vmem:[%s1320 + $0x50] sm:$0xff]
        %v2692 = vld [vmem:[%s1320 + $0x58] sm:$0xff]
        %v2693 = vld [vmem:[%s1320 + $0x60] sm:$0xff]
        %v2694 = vld [vmem:[%s1320 + $0x68] sm:$0xff]
        %v2695 = vld [vmem:[%s1320 + $0x70] sm:$0xff]
        %v2696 = vld [vmem:[%s1320 + $0x78] sm:$0xff]
        %v2697 = vld [vmem:[%s1320 + $0x80] sm:$0xff]
        %v2698 = vld [vmem:[%s1320 + $0x88] sm:$0xff]
        %v2699 = vld [vmem:[%s1320 + $0x90] sm:$0xff]
        %v2700 = vld [vmem:[%s1320 + $0x98] sm:$0xff]
        %v2701 = vld [vmem:[%s1320 + $0xa0] sm:$0xff]
        %v2702 = vld [vmem:[%s1320 + $0xa8] sm:$0xff]
        %v2703 = vld [vmem:[%s1320 + $0xb0] sm:$0xff]
        %v2704 = vld [vmem:[%s1320 + $0xb8] sm:$0xff]
        %v2705 = vld [vmem:[%s1320 + $0xc0] sm:$0xff]
        %v2706 = vld [vmem:[%s1320 + $0xc8] sm:$0xff]
        %v2707 = vld [vmem:[%s1320 + $0xd0] sm:$0xff]
        %v2708 = vld [vmem:[%s1320 + $0xd8] sm:$0xff]
        %v2709 = vld [vmem:[%s1320 + $0xe0] sm:$0xff]
        %v2710 = vld [vmem:[%s1320 + $0xe8] sm:$0xff]
        %v2711 = vld [vmem:[%s3 + $0x7] sm:$0x1]
        %v2712 = vlaneseq
        %v2713 = vshrl.u32 %v2712, 7
        %v2714 = vsub.s32 0, %v2713
        %v2715 = vrot.slane %v2711, %v2714
        %v2716 = vmul.f32 %v2681, %v2715
        %v2717 = vmul.f32 %v2682, %v2715
        %v2718 = vmul.f32 %v2683, %v2715
        %v2719 = vmul.f32 %v2684, %v2715
        %v2720 = vmul.f32 %v2685, %v2715
        %v2721 = vmul.f32 %v2686, %v2715
        %v2722 = vmul.f32 %v2687, %v2715
        %v2723 = vmul.f32 %v2688, %v2715
        %v2724 = vmul.f32 %v2689, %v2715
        %v2725 = vmul.f32 %v2690, %v2715
        %v2726 = vmul.f32 %v2691, %v2715
        %v2727 = vmul.f32 %v2692, %v2715
        %v2728 = vmul.f32 %v2693, %v2715
        %v2729 = vmul.f32 %v2694, %v2715
        %v2730 = vmul.f32 %v2695, %v2715
        %v2731 = vmul.f32 %v2696, %v2715
        %v2732 = vmul.f32 %v2697, %v2715
        %v2733 = vmul.f32 %v2698, %v2715
        %v2734 = vmul.f32 %v2699, %v2715
        %v2735 = vmul.f32 %v2700, %v2715
        %v2736 = vmul.f32 %v2701, %v2715
        %v2737 = vmul.f32 %v2702, %v2715
        %v2738 = vmul.f32 %v2703, %v2715
        %v2739 = vmul.f32 %v2704, %v2715
        %v2740 = vmul.f32 %v2705, %v2715
        %v2741 = vmul.f32 %v2706, %v2715
        %v2742 = vmul.f32 %v2707, %v2715
        %v2743 = vmul.f32 %v2708, %v2715
        %v2744 = vmul.f32 %v2709, %v2715
        %v2745 = vmul.f32 %v2710, %v2715
        %v2746 = vadd.f32 %v2651, %v2716
        %v2747 = vadd.f32 %v2652, %v2717
        %v2748 = vadd.f32 %v2653, %v2718
        %v2749 = vadd.f32 %v2654, %v2719
        %v2750 = vadd.f32 %v2655, %v2720
        %v2751 = vadd.f32 %v2656, %v2721
        %v2752 = vadd.f32 %v2657, %v2722
        %v2753 = vadd.f32 %v2658, %v2723
        %v2754 = vadd.f32 %v2659, %v2724
        %v2755 = vadd.f32 %v2660, %v2725
        %v2756 = vadd.f32 %v2661, %v2726
        %v2757 = vadd.f32 %v2662, %v2727
        %v2758 = vadd.f32 %v2663, %v2728
        %v2759 = vadd.f32 %v2664, %v2729
        %v2760 = vadd.f32 %v2665, %v2730
        %v2761 = vadd.f32 %v2666, %v2731
        %v2762 = vadd.f32 %v2667, %v2732
        %v2763 = vadd.f32 %v2668, %v2733
        %v2764 = vadd.f32 %v2669, %v2734
        %v2765 = vadd.f32 %v2670, %v2735
        %v2766 = vadd.f32 %v2671, %v2736
        %v2767 = vadd.f32 %v2672, %v2737
        %v2768 = vadd.f32 %v2673, %v2738
        %v2769 = vadd.f32 %v2674, %v2739
        %v2770 = vadd.f32 %v2675, %v2740
        %v2771 = vadd.f32 %v2676, %v2741
        %v2772 = vadd.f32 %v2677, %v2742
        %v2773 = vadd.f32 %v2678, %v2743
        %v2774 = vadd.f32 %v2679, %v2744
        %v2775 = vadd.f32 %v2680, %v2745
        %v2776 = vld [vmem:[%s1385] sm:$0xff]
        %v2777 = vld [vmem:[%s1385 + $0x8] sm:$0xff]
        %v2778 = vld [vmem:[%s1385 + $0x10] sm:$0xff]
        %v2779 = vld [vmem:[%s1385 + $0x18] sm:$0xff]
        %v2780 = vld [vmem:[%s1385 + $0x20] sm:$0xff]
        %v2781 = vld [vmem:[%s1385 + $0x28] sm:$0xff]
        %v2782 = vld [vmem:[%s1385 + $0x30] sm:$0xff]
        %v2783 = vld [vmem:[%s1385 + $0x38] sm:$0xff]
        %v2784 = vld [vmem:[%s1385 + $0x40] sm:$0xff]
        %v2785 = vld [vmem:[%s1385 + $0x48] sm:$0xff]
        %v2786 = vld [vmem:[%s1385 + $0x50] sm:$0xff]
        %v2787 = vld [vmem:[%s1385 + $0x58] sm:$0xff]
        %v2788 = vld [vmem:[%s1385 + $0x60] sm:$0xff]
        %v2789 = vld [vmem:[%s1385 + $0x68] sm:$0xff]
        %v2790 = vld [vmem:[%s1385 + $0x70] sm:$0xff]
        %v2791 = vld [vmem:[%s1385 + $0x78] sm:$0xff]
        %v2792 = vld [vmem:[%s1385 + $0x80] sm:$0xff]
        %v2793 = vld [vmem:[%s1385 + $0x88] sm:$0xff]
        %v2794 = vld [vmem:[%s1385 + $0x90] sm:$0xff]
        %v2795 = vld [vmem:[%s1385 + $0x98] sm:$0xff]
        %v2796 = vld [vmem:[%s1385 + $0xa0] sm:$0xff]
        %v2797 = vld [vmem:[%s1385 + $0xa8] sm:$0xff]
        %v2798 = vld [vmem:[%s1385 + $0xb0] sm:$0xff]
        %v2799 = vld [vmem:[%s1385 + $0xb8] sm:$0xff]
        %v2800 = vld [vmem:[%s1385 + $0xc0] sm:$0xff]
        %v2801 = vld [vmem:[%s1385 + $0xc8] sm:$0xff]
        %v2802 = vld [vmem:[%s1385 + $0xd0] sm:$0xff]
        %v2803 = vld [vmem:[%s1385 + $0xd8] sm:$0xff]
        %v2804 = vld [vmem:[%s1385 + $0xe0] sm:$0xff]
        %v2805 = vld [vmem:[%s1385 + $0xe8] sm:$0xff]
        %v2806 = vld [vmem:[%s3 + $0x8] sm:$0x1]
        %v2807 = vlaneseq
        %v2808 = vshrl.u32 %v2807, 7
        %v2809 = vsub.s32 0, %v2808
        %v2810 = vrot.slane %v2806, %v2809
        %v2811 = vmul.f32 %v2776, %v2810
        %v2812 = vmul.f32 %v2777, %v2810
        %v2813 = vmul.f32 %v2778, %v2810
        %v2814 = vmul.f32 %v2779, %v2810
        %v2815 = vmul.f32 %v2780, %v2810
        %v2816 = vmul.f32 %v2781, %v2810
        %v2817 = vmul.f32 %v2782, %v2810
        %v2818 = vmul.f32 %v2783, %v2810
        %v2819 = vmul.f32 %v2784, %v2810
        %v2820 = vmul.f32 %v2785, %v2810
        %v2821 = vmul.f32 %v2786, %v2810
        %v2822 = vmul.f32 %v2787, %v2810
        %v2823 = vmul.f32 %v2788, %v2810
        %v2824 = vmul.f32 %v2789, %v2810
        %v2825 = vmul.f32 %v2790, %v2810
        %v2826 = vmul.f32 %v2791, %v2810
        %v2827 = vmul.f32 %v2792, %v2810
        %v2828 = vmul.f32 %v2793, %v2810
        %v2829 = vmul.f32 %v2794, %v2810
        %v2830 = vmul.f32 %v2795, %v2810
        %v2831 = vmul.f32 %v2796, %v2810
        %v2832 = vmul.f32 %v2797, %v2810
        %v2833 = vmul.f32 %v2798, %v2810
        %v2834 = vmul.f32 %v2799, %v2810
        %v2835 = vmul.f32 %v2800, %v2810
        %v2836 = vmul.f32 %v2801, %v2810
        %v2837 = vmul.f32 %v2802, %v2810
        %v2838 = vmul.f32 %v2803, %v2810
        %v2839 = vmul.f32 %v2804, %v2810
        %v2840 = vmul.f32 %v2805, %v2810
        %v2841 = vadd.f32 %v2746, %v2811
        %v2842 = vadd.f32 %v2747, %v2812
        %v2843 = vadd.f32 %v2748, %v2813
        %v2844 = vadd.f32 %v2749, %v2814
        %v2845 = vadd.f32 %v2750, %v2815
        %v2846 = vadd.f32 %v2751, %v2816
        %v2847 = vadd.f32 %v2752, %v2817
        %v2848 = vadd.f32 %v2753, %v2818
        %v2849 = vadd.f32 %v2754, %v2819
        %v2850 = vadd.f32 %v2755, %v2820
        %v2851 = vadd.f32 %v2756, %v2821
        %v2852 = vadd.f32 %v2757, %v2822
        %v2853 = vadd.f32 %v2758, %v2823
        %v2854 = vadd.f32 %v2759, %v2824
        %v2855 = vadd.f32 %v2760, %v2825
        %v2856 = vadd.f32 %v2761, %v2826
        %v2857 = vadd.f32 %v2762, %v2827
        %v2858 = vadd.f32 %v2763, %v2828
        %v2859 = vadd.f32 %v2764, %v2829
        %v2860 = vadd.f32 %v2765, %v2830
        %v2861 = vadd.f32 %v2766, %v2831
        %v2862 = vadd.f32 %v2767, %v2832
        %v2863 = vadd.f32 %v2768, %v2833
        %v2864 = vadd.f32 %v2769, %v2834
        %v2865 = vadd.f32 %v2770, %v2835
        %v2866 = vadd.f32 %v2771, %v2836
        %v2867 = vadd.f32 %v2772, %v2837
        %v2868 = vadd.f32 %v2773, %v2838
        %v2869 = vadd.f32 %v2774, %v2839
        %v2870 = vadd.f32 %v2775, %v2840
        %v2871 = vld [vmem:[%s1450] sm:$0xff]
        %v2872 = vld [vmem:[%s1450 + $0x8] sm:$0xff]
        %v2873 = vld [vmem:[%s1450 + $0x10] sm:$0xff]
        %v2874 = vld [vmem:[%s1450 + $0x18] sm:$0xff]
        %v2875 = vld [vmem:[%s1450 + $0x20] sm:$0xff]
        %v2876 = vld [vmem:[%s1450 + $0x28] sm:$0xff]
        %v2877 = vld [vmem:[%s1450 + $0x30] sm:$0xff]
        %v2878 = vld [vmem:[%s1450 + $0x38] sm:$0xff]
        %v2879 = vld [vmem:[%s1450 + $0x40] sm:$0xff]
        %v2880 = vld [vmem:[%s1450 + $0x48] sm:$0xff]
        %v2881 = vld [vmem:[%s1450 + $0x50] sm:$0xff]
        %v2882 = vld [vmem:[%s1450 + $0x58] sm:$0xff]
        %v2883 = vld [vmem:[%s1450 + $0x60] sm:$0xff]
        %v2884 = vld [vmem:[%s1450 + $0x68] sm:$0xff]
        %v2885 = vld [vmem:[%s1450 + $0x70] sm:$0xff]
        %v2886 = vld [vmem:[%s1450 + $0x78] sm:$0xff]
        %v2887 = vld [vmem:[%s1450 + $0x80] sm:$0xff]
        %v2888 = vld [vmem:[%s1450 + $0x88] sm:$0xff]
        %v2889 = vld [vmem:[%s1450 + $0x90] sm:$0xff]
        %v2890 = vld [vmem:[%s1450 + $0x98] sm:$0xff]
        %v2891 = vld [vmem:[%s1450 + $0xa0] sm:$0xff]
        %v2892 = vld [vmem:[%s1450 + $0xa8] sm:$0xff]
        %v2893 = vld [vmem:[%s1450 + $0xb0] sm:$0xff]
        %v2894 = vld [vmem:[%s1450 + $0xb8] sm:$0xff]
        %v2895 = vld [vmem:[%s1450 + $0xc0] sm:$0xff]
        %v2896 = vld [vmem:[%s1450 + $0xc8] sm:$0xff]
        %v2897 = vld [vmem:[%s1450 + $0xd0] sm:$0xff]
        %v2898 = vld [vmem:[%s1450 + $0xd8] sm:$0xff]
        %v2899 = vld [vmem:[%s1450 + $0xe0] sm:$0xff]
        %v2900 = vld [vmem:[%s1450 + $0xe8] sm:$0xff]
        %v2901 = vld [vmem:[%s3 + $0x9] sm:$0x1]
        %v2902 = vlaneseq
        %v2903 = vshrl.u32 %v2902, 7
        %v2904 = vsub.s32 0, %v2903
        %v2905 = vrot.slane %v2901, %v2904
        %v2906 = vmul.f32 %v2871, %v2905
        %v2907 = vmul.f32 %v2872, %v2905
        %v2908 = vmul.f32 %v2873, %v2905
        %v2909 = vmul.f32 %v2874, %v2905
        %v2910 = vmul.f32 %v2875, %v2905
        %v2911 = vmul.f32 %v2876, %v2905
        %v2912 = vmul.f32 %v2877, %v2905
        %v2913 = vmul.f32 %v2878, %v2905
        %v2914 = vmul.f32 %v2879, %v2905
        %v2915 = vmul.f32 %v2880, %v2905
        %v2916 = vmul.f32 %v2881, %v2905
        %v2917 = vmul.f32 %v2882, %v2905
        %v2918 = vmul.f32 %v2883, %v2905
        %v2919 = vmul.f32 %v2884, %v2905
        %v2920 = vmul.f32 %v2885, %v2905
        %v2921 = vmul.f32 %v2886, %v2905
        %v2922 = vmul.f32 %v2887, %v2905
        %v2923 = vmul.f32 %v2888, %v2905
        %v2924 = vmul.f32 %v2889, %v2905
        %v2925 = vmul.f32 %v2890, %v2905
        %v2926 = vmul.f32 %v2891, %v2905
        %v2927 = vmul.f32 %v2892, %v2905
        %v2928 = vmul.f32 %v2893, %v2905
        %v2929 = vmul.f32 %v2894, %v2905
        %v2930 = vmul.f32 %v2895, %v2905
        %v2931 = vmul.f32 %v2896, %v2905
        %v2932 = vmul.f32 %v2897, %v2905
        %v2933 = vmul.f32 %v2898, %v2905
        %v2934 = vmul.f32 %v2899, %v2905
        %v2935 = vmul.f32 %v2900, %v2905
        %v2936 = vadd.f32 %v2841, %v2906
        %v2937 = vadd.f32 %v2842, %v2907
        %v2938 = vadd.f32 %v2843, %v2908
        %v2939 = vadd.f32 %v2844, %v2909
        %v2940 = vadd.f32 %v2845, %v2910
        %v2941 = vadd.f32 %v2846, %v2911
        %v2942 = vadd.f32 %v2847, %v2912
        %v2943 = vadd.f32 %v2848, %v2913
        %v2944 = vadd.f32 %v2849, %v2914
        %v2945 = vadd.f32 %v2850, %v2915
        %v2946 = vadd.f32 %v2851, %v2916
        %v2947 = vadd.f32 %v2852, %v2917
        %v2948 = vadd.f32 %v2853, %v2918
        %v2949 = vadd.f32 %v2854, %v2919
        %v2950 = vadd.f32 %v2855, %v2920
        %v2951 = vadd.f32 %v2856, %v2921
        %v2952 = vadd.f32 %v2857, %v2922
        %v2953 = vadd.f32 %v2858, %v2923
        %v2954 = vadd.f32 %v2859, %v2924
        %v2955 = vadd.f32 %v2860, %v2925
        %v2956 = vadd.f32 %v2861, %v2926
        %v2957 = vadd.f32 %v2862, %v2927
        %v2958 = vadd.f32 %v2863, %v2928
        %v2959 = vadd.f32 %v2864, %v2929
        %v2960 = vadd.f32 %v2865, %v2930
        %v2961 = vadd.f32 %v2866, %v2931
        %v2962 = vadd.f32 %v2867, %v2932
        %v2963 = vadd.f32 %v2868, %v2933
        %v2964 = vadd.f32 %v2869, %v2934
        %v2965 = vadd.f32 %v2870, %v2935
        %v2966 = vadd.f32 %v2491, %v2936
        %v2967 = vadd.f32 %v2492, %v2937
        %v2968 = vadd.f32 %v2493, %v2938
        %v2969 = vadd.f32 %v2494, %v2939
        %v2970 = vadd.f32 %v2495, %v2940
        %v2971 = vadd.f32 %v2496, %v2941
        %v2972 = vadd.f32 %v2497, %v2942
        %v2973 = vadd.f32 %v2498, %v2943
        %v2974 = vadd.f32 %v2499, %v2944
        %v2975 = vadd.f32 %v2500, %v2945
        %v2976 = vadd.f32 %v2501, %v2946
        %v2977 = vadd.f32 %v2502, %v2947
        %v2978 = vadd.f32 %v2503, %v2948
        %v2979 = vadd.f32 %v2504, %v2949
        %v2980 = vadd.f32 %v2505, %v2950
        %v2981 = vadd.f32 %v2506, %v2951
        %v2982 = vadd.f32 %v2507, %v2952
        %v2983 = vadd.f32 %v2508, %v2953
        %v2984 = vadd.f32 %v2509, %v2954
        %v2985 = vadd.f32 %v2510, %v2955
        %v2986 = vadd.f32 %v2511, %v2956
        %v2987 = vadd.f32 %v2512, %v2957
        %v2988 = vadd.f32 %v2513, %v2958
        %v2989 = vadd.f32 %v2514, %v2959
        %v2990 = vadd.f32 %v2515, %v2960
        %v2991 = vadd.f32 %v2516, %v2961
        %v2992 = vadd.f32 %v2517, %v2962
        %v2993 = vadd.f32 %v2518, %v2963
        %v2994 = vadd.f32 %v2519, %v2964
        %v2995 = vadd.f32 %v2520, %v2965
        %2996 = vst [vmem:[%s2490] sm:$0xff] %v2966
        %2997 = vst [vmem:[%s2490 + $0x8] sm:$0xff] %v2967
        %2998 = vst [vmem:[%s2490 + $0x10] sm:$0xff] %v2968
        %2999 = vst [vmem:[%s2490 + $0x18] sm:$0xff] %v2969
        %3000 = vst [vmem:[%s2490 + $0x20] sm:$0xff] %v2970
        %3001 = vst [vmem:[%s2490 + $0x28] sm:$0xff] %v2971
        %3002 = vst [vmem:[%s2490 + $0x30] sm:$0xff] %v2972
        %3003 = vst [vmem:[%s2490 + $0x38] sm:$0xff] %v2973
        %3004 = vst [vmem:[%s2490 + $0x40] sm:$0xff] %v2974
        %3005 = vst [vmem:[%s2490 + $0x48] sm:$0xff] %v2975
        %3006 = vst [vmem:[%s2490 + $0x50] sm:$0xff] %v2976
        %3007 = vst [vmem:[%s2490 + $0x58] sm:$0xff] %v2977
        %3008 = vst [vmem:[%s2490 + $0x60] sm:$0xff] %v2978
        %3009 = vst [vmem:[%s2490 + $0x68] sm:$0xff] %v2979
        %3010 = vst [vmem:[%s2490 + $0x70] sm:$0xff] %v2980
        %3011 = vst [vmem:[%s2490 + $0x78] sm:$0xff] %v2981
        %3012 = vst [vmem:[%s2490 + $0x80] sm:$0xff] %v2982
        %3013 = vst [vmem:[%s2490 + $0x88] sm:$0xff] %v2983
        %3014 = vst [vmem:[%s2490 + $0x90] sm:$0xff] %v2984
        %3015 = vst [vmem:[%s2490 + $0x98] sm:$0xff] %v2985
        %3016 = vst [vmem:[%s2490 + $0xa0] sm:$0xff] %v2986
        %3017 = vst [vmem:[%s2490 + $0xa8] sm:$0xff] %v2987
        %3018 = vst [vmem:[%s2490 + $0xb0] sm:$0xff] %v2988
        %3019 = vst [vmem:[%s2490 + $0xb8] sm:$0xff] %v2989
        %3020 = vst [vmem:[%s2490 + $0xc0] sm:$0xff] %v2990
        %3021 = vst [vmem:[%s2490 + $0xc8] sm:$0xff] %v2991
        %3022 = vst [vmem:[%s2490 + $0xd0] sm:$0xff] %v2992
        %3023 = vst [vmem:[%s2490 + $0xd8] sm:$0xff] %v2993
        %3024 = vst [vmem:[%s2490 + $0xe0] sm:$0xff] %v2994
        %3025 = vst [vmem:[%s2490 + $0xe8] sm:$0xff] %v2995
        %v3026 = vld [vmem:[#allocation4] sm:$0xff]
        %v3027 = vld [vmem:[#allocation4 + $0x8] sm:$0xff]
        %v3028 = vld [vmem:[#allocation4 + $0x10] sm:$0xff]
        %v3029 = vld [vmem:[#allocation4 + $0x18] sm:$0xff]
        %v3030 = vld [vmem:[#allocation4 + $0x20] sm:$0xff]
        %v3031 = vld [vmem:[#allocation4 + $0x28] sm:$0xff]
        %v3032 = vld [vmem:[#allocation4 + $0x30] sm:$0xff]
        %v3033 = vld [vmem:[#allocation4 + $0x38] sm:$0xff]
        %v3034 = vld [vmem:[#allocation4 + $0x40] sm:$0xff]
        %v3035 = vld [vmem:[#allocation4 + $0x48] sm:$0xff]
        %v3036 = vld [vmem:[#allocation4 + $0x50] sm:$0xff]
        %v3037 = vld [vmem:[#allocation4 + $0x58] sm:$0xff]
        %v3038 = vld [vmem:[#allocation4 + $0x60] sm:$0xff]
        %v3039 = vld [vmem:[#allocation4 + $0x68] sm:$0xff]
        %v3040 = vld [vmem:[#allocation4 + $0x70] sm:$0xff]
        %v3041 = vld [vmem:[#allocation4 + $0x78] sm:$0xff]
        %v3042 = vld [vmem:[#allocation4 + $0x80] sm:$0xff]
        %v3043 = vld [vmem:[#allocation4 + $0x88] sm:$0xff]
        %v3044 = vld [vmem:[#allocation4 + $0x90] sm:$0xff]
        %v3045 = vld [vmem:[#allocation4 + $0x98] sm:$0xff]
        %v3046 = vld [vmem:[#allocation4 + $0xa0] sm:$0xff]
        %v3047 = vld [vmem:[#allocation4 + $0xa8] sm:$0xff]
        %v3048 = vld [vmem:[#allocation4 + $0xb0] sm:$0xff]
        %v3049 = vld [vmem:[#allocation4 + $0xb8] sm:$0xff]
        %v3050 = vld [vmem:[#allocation4 + $0xc0] sm:$0xff]
        %v3051 = vld [vmem:[#allocation4 + $0xc8] sm:$0xff]
        %v3052 = vld [vmem:[#allocation4 + $0xd0] sm:$0xff]
        %v3053 = vld [vmem:[#allocation4 + $0xd8] sm:$0xff]
        %v3054 = vld [vmem:[#allocation4 + $0xe0] sm:$0xff]
        %v3055 = vld [vmem:[#allocation4 + $0xe8] sm:$0xff]
        %s3056 = scalar_lea.vmem [#allocation3], 16
        %v3057 = vld [vmem:[%s3056] sm:$0xff]
        %v3058 = vld [vmem:[%s3056 + $0x8] sm:$0xff]
        %v3059 = vld [vmem:[%s3056 + $0x10] sm:$0xff]
        %v3060 = vld [vmem:[%s3056 + $0x18] sm:$0xff]
        %v3061 = vld [vmem:[%s3056 + $0x20] sm:$0xff]
        %v3062 = vld [vmem:[%s3056 + $0x28] sm:$0xff]
        %v3063 = vld [vmem:[%s3056 + $0x30] sm:$0xff]
        %v3064 = vld [vmem:[%s3056 + $0x38] sm:$0xff]
        %v3065 = vld [vmem:[%s3056 + $0x40] sm:$0xff]
        %v3066 = vld [vmem:[%s3056 + $0x48] sm:$0xff]
        %v3067 = vld [vmem:[%s3056 + $0x50] sm:$0xff]
        %v3068 = vld [vmem:[%s3056 + $0x58] sm:$0xff]
        %v3069 = vld [vmem:[%s3056 + $0x60] sm:$0xff]
        %v3070 = vld [vmem:[%s3056 + $0x68] sm:$0xff]
        %v3071 = vld [vmem:[%s3056 + $0x70] sm:$0xff]
        %v3072 = vld [vmem:[%s3056 + $0x78] sm:$0xff]
        %v3073 = vld [vmem:[%s3056 + $0x80] sm:$0xff]
        %v3074 = vld [vmem:[%s3056 + $0x88] sm:$0xff]
        %v3075 = vld [vmem:[%s3056 + $0x90] sm:$0xff]
        %v3076 = vld [vmem:[%s3056 + $0x98] sm:$0xff]
        %v3077 = vld [vmem:[%s3056 + $0xa0] sm:$0xff]
        %v3078 = vld [vmem:[%s3056 + $0xa8] sm:$0xff]
        %v3079 = vld [vmem:[%s3056 + $0xb0] sm:$0xff]
        %v3080 = vld [vmem:[%s3056 + $0xb8] sm:$0xff]
        %v3081 = vld [vmem:[%s3056 + $0xc0] sm:$0xff]
        %v3082 = vld [vmem:[%s3056 + $0xc8] sm:$0xff]
        %v3083 = vld [vmem:[%s3056 + $0xd0] sm:$0xff]
        %v3084 = vld [vmem:[%s3056 + $0xd8] sm:$0xff]
        %v3085 = vld [vmem:[%s3056 + $0xe0] sm:$0xff]
        %v3086 = vld [vmem:[%s3056 + $0xe8] sm:$0xff]
        %v3087 = vld [vmem:[%s3 + $0xf] sm:$0x1]
        %v3088 = vlaneseq
        %v3089 = vshrl.u32 %v3088, 7
        %v3090 = vsub.s32 0, %v3089
        %v3091 = vrot.slane %v3087, %v3090
        %v3092 = vmul.f32 %v3057, %v3091
        %v3093 = vmul.f32 %v3058, %v3091
        %v3094 = vmul.f32 %v3059, %v3091
        %v3095 = vmul.f32 %v3060, %v3091
        %v3096 = vmul.f32 %v3061, %v3091
        %v3097 = vmul.f32 %v3062, %v3091
        %v3098 = vmul.f32 %v3063, %v3091
        %v3099 = vmul.f32 %v3064, %v3091
        %v3100 = vmul.f32 %v3065, %v3091
        %v3101 = vmul.f32 %v3066, %v3091
        %v3102 = vmul.f32 %v3067, %v3091
        %v3103 = vmul.f32 %v3068, %v3091
        %v3104 = vmul.f32 %v3069, %v3091
        %v3105 = vmul.f32 %v3070, %v3091
        %v3106 = vmul.f32 %v3071, %v3091
        %v3107 = vmul.f32 %v3072, %v3091
        %v3108 = vmul.f32 %v3073, %v3091
        %v3109 = vmul.f32 %v3074, %v3091
        %v3110 = vmul.f32 %v3075, %v3091
        %v3111 = vmul.f32 %v3076, %v3091
        %v3112 = vmul.f32 %v3077, %v3091
        %v3113 = vmul.f32 %v3078, %v3091
        %v3114 = vmul.f32 %v3079, %v3091
        %v3115 = vmul.f32 %v3080, %v3091
        %v3116 = vmul.f32 %v3081, %v3091
        %v3117 = vmul.f32 %v3082, %v3091
        %v3118 = vmul.f32 %v3083, %v3091
        %v3119 = vmul.f32 %v3084, %v3091
        %v3120 = vmul.f32 %v3085, %v3091
        %v3121 = vmul.f32 %v3086, %v3091
        %s3122 = scalar_lea.vmem [#allocation3], 272
        %v3123 = vld [vmem:[%s3122] sm:$0xff]
        %v3124 = vld [vmem:[%s3122 + $0x8] sm:$0xff]
        %v3125 = vld [vmem:[%s3122 + $0x10] sm:$0xff]
        %v3126 = vld [vmem:[%s3122 + $0x18] sm:$0xff]
        %v3127 = vld [vmem:[%s3122 + $0x20] sm:$0xff]
        %v3128 = vld [vmem:[%s3122 + $0x28] sm:$0xff]
        %v3129 = vld [vmem:[%s3122 + $0x30] sm:$0xff]
        %v3130 = vld [vmem:[%s3122 + $0x38] sm:$0xff]
        %v3131 = vld [vmem:[%s3122 + $0x40] sm:$0xff]
        %v3132 = vld [vmem:[%s3122 + $0x48] sm:$0xff]
        %v3133 = vld [vmem:[%s3122 + $0x50] sm:$0xff]
        %v3134 = vld [vmem:[%s3122 + $0x58] sm:$0xff]
        %v3135 = vld [vmem:[%s3122 + $0x60] sm:$0xff]
        %v3136 = vld [vmem:[%s3122 + $0x68] sm:$0xff]
        %v3137 = vld [vmem:[%s3122 + $0x70] sm:$0xff]
        %v3138 = vld [vmem:[%s3122 + $0x78] sm:$0xff]
        %v3139 = vld [vmem:[%s3122 + $0x80] sm:$0xff]
        %v3140 = vld [vmem:[%s3122 + $0x88] sm:$0xff]
        %v3141 = vld [vmem:[%s3122 + $0x90] sm:$0xff]
        %v3142 = vld [vmem:[%s3122 + $0x98] sm:$0xff]
        %v3143 = vld [vmem:[%s3122 + $0xa0] sm:$0xff]
        %v3144 = vld [vmem:[%s3122 + $0xa8] sm:$0xff]
        %v3145 = vld [vmem:[%s3122 + $0xb0] sm:$0xff]
        %v3146 = vld [vmem:[%s3122 + $0xb8] sm:$0xff]
        %v3147 = vld [vmem:[%s3122 + $0xc0] sm:$0xff]
        %v3148 = vld [vmem:[%s3122 + $0xc8] sm:$0xff]
        %v3149 = vld [vmem:[%s3122 + $0xd0] sm:$0xff]
        %v3150 = vld [vmem:[%s3122 + $0xd8] sm:$0xff]
        %v3151 = vld [vmem:[%s3122 + $0xe0] sm:$0xff]
        %v3152 = vld [vmem:[%s3122 + $0xe8] sm:$0xff]
        %v3153 = vld [vmem:[%s3 + $0x10] sm:$0x1]
        %v3154 = vlaneseq
        %v3155 = vshrl.u32 %v3154, 7
        %v3156 = vsub.s32 0, %v3155
        %v3157 = vrot.slane %v3153, %v3156
        %v3158 = vmul.f32 %v3123, %v3157
        %v3159 = vmul.f32 %v3124, %v3157
        %v3160 = vmul.f32 %v3125, %v3157
        %v3161 = vmul.f32 %v3126, %v3157
        %v3162 = vmul.f32 %v3127, %v3157
        %v3163 = vmul.f32 %v3128, %v3157
        %v3164 = vmul.f32 %v3129, %v3157
        %v3165 = vmul.f32 %v3130, %v3157
        %v3166 = vmul.f32 %v3131, %v3157
        %v3167 = vmul.f32 %v3132, %v3157
        %v3168 = vmul.f32 %v3133, %v3157
        %v3169 = vmul.f32 %v3134, %v3157
        %v3170 = vmul.f32 %v3135, %v3157
        %v3171 = vmul.f32 %v3136, %v3157
        %v3172 = vmul.f32 %v3137, %v3157
        %v3173 = vmul.f32 %v3138, %v3157
        %v3174 = vmul.f32 %v3139, %v3157
        %v3175 = vmul.f32 %v3140, %v3157
        %v3176 = vmul.f32 %v3141, %v3157
        %v3177 = vmul.f32 %v3142, %v3157
        %v3178 = vmul.f32 %v3143, %v3157
        %v3179 = vmul.f32 %v3144, %v3157
        %v3180 = vmul.f32 %v3145, %v3157
        %v3181 = vmul.f32 %v3146, %v3157
        %v3182 = vmul.f32 %v3147, %v3157
        %v3183 = vmul.f32 %v3148, %v3157
        %v3184 = vmul.f32 %v3149, %v3157
        %v3185 = vmul.f32 %v3150, %v3157
        %v3186 = vmul.f32 %v3151, %v3157
        %v3187 = vmul.f32 %v3152, %v3157
        %v3188 = vadd.f32 %v3092, %v3158
        %v3189 = vadd.f32 %v3093, %v3159
        %v3190 = vadd.f32 %v3094, %v3160
        %v3191 = vadd.f32 %v3095, %v3161
        %v3192 = vadd.f32 %v3096, %v3162
        %v3193 = vadd.f32 %v3097, %v3163
        %v3194 = vadd.f32 %v3098, %v3164
        %v3195 = vadd.f32 %v3099, %v3165
        %v3196 = vadd.f32 %v3100, %v3166
        %v3197 = vadd.f32 %v3101, %v3167
        %v3198 = vadd.f32 %v3102, %v3168
        %v3199 = vadd.f32 %v3103, %v3169
        %v3200 = vadd.f32 %v3104, %v3170
        %v3201 = vadd.f32 %v3105, %v3171
        %v3202 = vadd.f32 %v3106, %v3172
        %v3203 = vadd.f32 %v3107, %v3173
        %v3204 = vadd.f32 %v3108, %v3174
        %v3205 = vadd.f32 %v3109, %v3175
        %v3206 = vadd.f32 %v3110, %v3176
        %v3207 = vadd.f32 %v3111, %v3177
        %v3208 = vadd.f32 %v3112, %v3178
        %v3209 = vadd.f32 %v3113, %v3179
        %v3210 = vadd.f32 %v3114, %v3180
        %v3211 = vadd.f32 %v3115, %v3181
        %v3212 = vadd.f32 %v3116, %v3182
        %v3213 = vadd.f32 %v3117, %v3183
        %v3214 = vadd.f32 %v3118, %v3184
        %v3215 = vadd.f32 %v3119, %v3185
        %v3216 = vadd.f32 %v3120, %v3186
        %v3217 = vadd.f32 %v3121, %v3187
        %s3218 = scalar_lea.vmem [#allocation3], 528
        %v3219 = vld [vmem:[%s3218] sm:$0xff]
        %v3220 = vld [vmem:[%s3218 + $0x8] sm:$0xff]
        %v3221 = vld [vmem:[%s3218 + $0x10] sm:$0xff]
        %v3222 = vld [vmem:[%s3218 + $0x18] sm:$0xff]
        %v3223 = vld [vmem:[%s3218 + $0x20] sm:$0xff]
        %v3224 = vld [vmem:[%s3218 + $0x28] sm:$0xff]
        %v3225 = vld [vmem:[%s3218 + $0x30] sm:$0xff]
        %v3226 = vld [vmem:[%s3218 + $0x38] sm:$0xff]
        %v3227 = vld [vmem:[%s3218 + $0x40] sm:$0xff]
        %v3228 = vld [vmem:[%s3218 + $0x48] sm:$0xff]
        %v3229 = vld [vmem:[%s3218 + $0x50] sm:$0xff]
        %v3230 = vld [vmem:[%s3218 + $0x58] sm:$0xff]
        %v3231 = vld [vmem:[%s3218 + $0x60] sm:$0xff]
        %v3232 = vld [vmem:[%s3218 + $0x68] sm:$0xff]
        %v3233 = vld [vmem:[%s3218 + $0x70] sm:$0xff]
        %v3234 = vld [vmem:[%s3218 + $0x78] sm:$0xff]
        %v3235 = vld [vmem:[%s3218 + $0x80] sm:$0xff]
        %v3236 = vld [vmem:[%s3218 + $0x88] sm:$0xff]
        %v3237 = vld [vmem:[%s3218 + $0x90] sm:$0xff]
        %v3238 = vld [vmem:[%s3218 + $0x98] sm:$0xff]
        %v3239 = vld [vmem:[%s3218 + $0xa0] sm:$0xff]
        %v3240 = vld [vmem:[%s3218 + $0xa8] sm:$0xff]
        %v3241 = vld [vmem:[%s3218 + $0xb0] sm:$0xff]
        %v3242 = vld [vmem:[%s3218 + $0xb8] sm:$0xff]
        %v3243 = vld [vmem:[%s3218 + $0xc0] sm:$0xff]
        %v3244 = vld [vmem:[%s3218 + $0xc8] sm:$0xff]
        %v3245 = vld [vmem:[%s3218 + $0xd0] sm:$0xff]
        %v3246 = vld [vmem:[%s3218 + $0xd8] sm:$0xff]
        %v3247 = vld [vmem:[%s3218 + $0xe0] sm:$0xff]
        %v3248 = vld [vmem:[%s3218 + $0xe8] sm:$0xff]
        %v3249 = vld [vmem:[%s3 + $0x11] sm:$0x1]
        %v3250 = vlaneseq
        %v3251 = vshrl.u32 %v3250, 7
        %v3252 = vsub.s32 0, %v3251
        %v3253 = vrot.slane %v3249, %v3252
        %v3254 = vmul.f32 %v3219, %v3253
        %v3255 = vmul.f32 %v3220, %v3253
        %v3256 = vmul.f32 %v3221, %v3253
        %v3257 = vmul.f32 %v3222, %v3253
        %v3258 = vmul.f32 %v3223, %v3253
        %v3259 = vmul.f32 %v3224, %v3253
        %v3260 = vmul.f32 %v3225, %v3253
        %v3261 = vmul.f32 %v3226, %v3253
        %v3262 = vmul.f32 %v3227, %v3253
        %v3263 = vmul.f32 %v3228, %v3253
        %v3264 = vmul.f32 %v3229, %v3253
        %v3265 = vmul.f32 %v3230, %v3253
        %v3266 = vmul.f32 %v3231, %v3253
        %v3267 = vmul.f32 %v3232, %v3253
        %v3268 = vmul.f32 %v3233, %v3253
        %v3269 = vmul.f32 %v3234, %v3253
        %v3270 = vmul.f32 %v3235, %v3253
        %v3271 = vmul.f32 %v3236, %v3253
        %v3272 = vmul.f32 %v3237, %v3253
        %v3273 = vmul.f32 %v3238, %v3253
        %v3274 = vmul.f32 %v3239, %v3253
        %v3275 = vmul.f32 %v3240, %v3253
        %v3276 = vmul.f32 %v3241, %v3253
        %v3277 = vmul.f32 %v3242, %v3253
        %v3278 = vmul.f32 %v3243, %v3253
        %v3279 = vmul.f32 %v3244, %v3253
        %v3280 = vmul.f32 %v3245, %v3253
        %v3281 = vmul.f32 %v3246, %v3253
        %v3282 = vmul.f32 %v3247, %v3253
        %v3283 = vmul.f32 %v3248, %v3253
        %v3284 = vadd.f32 %v3188, %v3254
        %v3285 = vadd.f32 %v3189, %v3255
        %v3286 = vadd.f32 %v3190, %v3256
        %v3287 = vadd.f32 %v3191, %v3257
        %v3288 = vadd.f32 %v3192, %v3258
        %v3289 = vadd.f32 %v3193, %v3259
        %v3290 = vadd.f32 %v3194, %v3260
        %v3291 = vadd.f32 %v3195, %v3261
        %v3292 = vadd.f32 %v3196, %v3262
        %v3293 = vadd.f32 %v3197, %v3263
        %v3294 = vadd.f32 %v3198, %v3264
        %v3295 = vadd.f32 %v3199, %v3265
        %v3296 = vadd.f32 %v3200, %v3266
        %v3297 = vadd.f32 %v3201, %v3267
        %v3298 = vadd.f32 %v3202, %v3268
        %v3299 = vadd.f32 %v3203, %v3269
        %v3300 = vadd.f32 %v3204, %v3270
        %v3301 = vadd.f32 %v3205, %v3271
        %v3302 = vadd.f32 %v3206, %v3272
        %v3303 = vadd.f32 %v3207, %v3273
        %v3304 = vadd.f32 %v3208, %v3274
        %v3305 = vadd.f32 %v3209, %v3275
        %v3306 = vadd.f32 %v3210, %v3276
        %v3307 = vadd.f32 %v3211, %v3277
        %v3308 = vadd.f32 %v3212, %v3278
        %v3309 = vadd.f32 %v3213, %v3279
        %v3310 = vadd.f32 %v3214, %v3280
        %v3311 = vadd.f32 %v3215, %v3281
        %v3312 = vadd.f32 %v3216, %v3282
        %v3313 = vadd.f32 %v3217, %v3283
        %s3314 = scalar_lea.vmem [#allocation3], 784
        %v3315 = vld [vmem:[%s3314] sm:$0xff]
        %v3316 = vld [vmem:[%s3314 + $0x8] sm:$0xff]
        %v3317 = vld [vmem:[%s3314 + $0x10] sm:$0xff]
        %v3318 = vld [vmem:[%s3314 + $0x18] sm:$0xff]
        %v3319 = vld [vmem:[%s3314 + $0x20] sm:$0xff]
        %v3320 = vld [vmem:[%s3314 + $0x28] sm:$0xff]
        %v3321 = vld [vmem:[%s3314 + $0x30] sm:$0xff]
        %v3322 = vld [vmem:[%s3314 + $0x38] sm:$0xff]
        %v3323 = vld [vmem:[%s3314 + $0x40] sm:$0xff]
        %v3324 = vld [vmem:[%s3314 + $0x48] sm:$0xff]
        %v3325 = vld [vmem:[%s3314 + $0x50] sm:$0xff]
        %v3326 = vld [vmem:[%s3314 + $0x58] sm:$0xff]
        %v3327 = vld [vmem:[%s3314 + $0x60] sm:$0xff]
        %v3328 = vld [vmem:[%s3314 + $0x68] sm:$0xff]
        %v3329 = vld [vmem:[%s3314 + $0x70] sm:$0xff]
        %v3330 = vld [vmem:[%s3314 + $0x78] sm:$0xff]
        %v3331 = vld [vmem:[%s3314 + $0x80] sm:$0xff]
        %v3332 = vld [vmem:[%s3314 + $0x88] sm:$0xff]
        %v3333 = vld [vmem:[%s3314 + $0x90] sm:$0xff]
        %v3334 = vld [vmem:[%s3314 + $0x98] sm:$0xff]
        %v3335 = vld [vmem:[%s3314 + $0xa0] sm:$0xff]
        %v3336 = vld [vmem:[%s3314 + $0xa8] sm:$0xff]
        %v3337 = vld [vmem:[%s3314 + $0xb0] sm:$0xff]
        %v3338 = vld [vmem:[%s3314 + $0xb8] sm:$0xff]
        %v3339 = vld [vmem:[%s3314 + $0xc0] sm:$0xff]
        %v3340 = vld [vmem:[%s3314 + $0xc8] sm:$0xff]
        %v3341 = vld [vmem:[%s3314 + $0xd0] sm:$0xff]
        %v3342 = vld [vmem:[%s3314 + $0xd8] sm:$0xff]
        %v3343 = vld [vmem:[%s3314 + $0xe0] sm:$0xff]
        %v3344 = vld [vmem:[%s3314 + $0xe8] sm:$0xff]
        %v3345 = vld [vmem:[%s3 + $0x12] sm:$0x1]
        %v3346 = vlaneseq
        %v3347 = vshrl.u32 %v3346, 7
        %v3348 = vsub.s32 0, %v3347
        %v3349 = vrot.slane %v3345, %v3348
        %v3350 = vmul.f32 %v3315, %v3349
        %v3351 = vmul.f32 %v3316, %v3349
        %v3352 = vmul.f32 %v3317, %v3349
        %v3353 = vmul.f32 %v3318, %v3349
        %v3354 = vmul.f32 %v3319, %v3349
        %v3355 = vmul.f32 %v3320, %v3349
        %v3356 = vmul.f32 %v3321, %v3349
        %v3357 = vmul.f32 %v3322, %v3349
        %v3358 = vmul.f32 %v3323, %v3349
        %v3359 = vmul.f32 %v3324, %v3349
        %v3360 = vmul.f32 %v3325, %v3349
        %v3361 = vmul.f32 %v3326, %v3349
        %v3362 = vmul.f32 %v3327, %v3349
        %v3363 = vmul.f32 %v3328, %v3349
        %v3364 = vmul.f32 %v3329, %v3349
        %v3365 = vmul.f32 %v3330, %v3349
        %v3366 = vmul.f32 %v3331, %v3349
        %v3367 = vmul.f32 %v3332, %v3349
        %v3368 = vmul.f32 %v3333, %v3349
        %v3369 = vmul.f32 %v3334, %v3349
        %v3370 = vmul.f32 %v3335, %v3349
        %v3371 = vmul.f32 %v3336, %v3349
        %v3372 = vmul.f32 %v3337, %v3349
        %v3373 = vmul.f32 %v3338, %v3349
        %v3374 = vmul.f32 %v3339, %v3349
        %v3375 = vmul.f32 %v3340, %v3349
        %v3376 = vmul.f32 %v3341, %v3349
        %v3377 = vmul.f32 %v3342, %v3349
        %v3378 = vmul.f32 %v3343, %v3349
        %v3379 = vmul.f32 %v3344, %v3349
        %v3380 = vadd.f32 %v3284, %v3350
        %v3381 = vadd.f32 %v3285, %v3351
        %v3382 = vadd.f32 %v3286, %v3352
        %v3383 = vadd.f32 %v3287, %v3353
        %v3384 = vadd.f32 %v3288, %v3354
        %v3385 = vadd.f32 %v3289, %v3355
        %v3386 = vadd.f32 %v3290, %v3356
        %v3387 = vadd.f32 %v3291, %v3357
        %v3388 = vadd.f32 %v3292, %v3358
        %v3389 = vadd.f32 %v3293, %v3359
        %v3390 = vadd.f32 %v3294, %v3360
        %v3391 = vadd.f32 %v3295, %v3361
        %v3392 = vadd.f32 %v3296, %v3362
        %v3393 = vadd.f32 %v3297, %v3363
        %v3394 = vadd.f32 %v3298, %v3364
        %v3395 = vadd.f32 %v3299, %v3365
        %v3396 = vadd.f32 %v3300, %v3366
        %v3397 = vadd.f32 %v3301, %v3367
        %v3398 = vadd.f32 %v3302, %v3368
        %v3399 = vadd.f32 %v3303, %v3369
        %v3400 = vadd.f32 %v3304, %v3370
        %v3401 = vadd.f32 %v3305, %v3371
        %v3402 = vadd.f32 %v3306, %v3372
        %v3403 = vadd.f32 %v3307, %v3373
        %v3404 = vadd.f32 %v3308, %v3374
        %v3405 = vadd.f32 %v3309, %v3375
        %v3406 = vadd.f32 %v3310, %v3376
        %v3407 = vadd.f32 %v3311, %v3377
        %v3408 = vadd.f32 %v3312, %v3378
        %v3409 = vadd.f32 %v3313, %v3379
        %s3410 = scalar_lea.vmem [#allocation3], 1040
        %v3411 = vld [vmem:[%s3410] sm:$0xff]
        %v3412 = vld [vmem:[%s3410 + $0x8] sm:$0xff]
        %v3413 = vld [vmem:[%s3410 + $0x10] sm:$0xff]
        %v3414 = vld [vmem:[%s3410 + $0x18] sm:$0xff]
        %v3415 = vld [vmem:[%s3410 + $0x20] sm:$0xff]
        %v3416 = vld [vmem:[%s3410 + $0x28] sm:$0xff]
        %v3417 = vld [vmem:[%s3410 + $0x30] sm:$0xff]
        %v3418 = vld [vmem:[%s3410 + $0x38] sm:$0xff]
        %v3419 = vld [vmem:[%s3410 + $0x40] sm:$0xff]
        %v3420 = vld [vmem:[%s3410 + $0x48] sm:$0xff]
        %v3421 = vld [vmem:[%s3410 + $0x50] sm:$0xff]
        %v3422 = vld [vmem:[%s3410 + $0x58] sm:$0xff]
        %v3423 = vld [vmem:[%s3410 + $0x60] sm:$0xff]
        %v3424 = vld [vmem:[%s3410 + $0x68] sm:$0xff]
        %v3425 = vld [vmem:[%s3410 + $0x70] sm:$0xff]
        %v3426 = vld [vmem:[%s3410 + $0x78] sm:$0xff]
        %v3427 = vld [vmem:[%s3410 + $0x80] sm:$0xff]
        %v3428 = vld [vmem:[%s3410 + $0x88] sm:$0xff]
        %v3429 = vld [vmem:[%s3410 + $0x90] sm:$0xff]
        %v3430 = vld [vmem:[%s3410 + $0x98] sm:$0xff]
        %v3431 = vld [vmem:[%s3410 + $0xa0] sm:$0xff]
        %v3432 = vld [vmem:[%s3410 + $0xa8] sm:$0xff]
        %v3433 = vld [vmem:[%s3410 + $0xb0] sm:$0xff]
        %v3434 = vld [vmem:[%s3410 + $0xb8] sm:$0xff]
        %v3435 = vld [vmem:[%s3410 + $0xc0] sm:$0xff]
        %v3436 = vld [vmem:[%s3410 + $0xc8] sm:$0xff]
        %v3437 = vld [vmem:[%s3410 + $0xd0] sm:$0xff]
        %v3438 = vld [vmem:[%s3410 + $0xd8] sm:$0xff]
        %v3439 = vld [vmem:[%s3410 + $0xe0] sm:$0xff]
        %v3440 = vld [vmem:[%s3410 + $0xe8] sm:$0xff]
        %v3441 = vld [vmem:[%s3 + $0x13] sm:$0x1]
        %v3442 = vlaneseq
        %v3443 = vshrl.u32 %v3442, 7
        %v3444 = vsub.s32 0, %v3443
        %v3445 = vrot.slane %v3441, %v3444
        %v3446 = vmul.f32 %v3411, %v3445
        %v3447 = vmul.f32 %v3412, %v3445
        %v3448 = vmul.f32 %v3413, %v3445
        %v3449 = vmul.f32 %v3414, %v3445
        %v3450 = vmul.f32 %v3415, %v3445
        %v3451 = vmul.f32 %v3416, %v3445
        %v3452 = vmul.f32 %v3417, %v3445
        %v3453 = vmul.f32 %v3418, %v3445
        %v3454 = vmul.f32 %v3419, %v3445
        %v3455 = vmul.f32 %v3420, %v3445
        %v3456 = vmul.f32 %v3421, %v3445
        %v3457 = vmul.f32 %v3422, %v3445
        %v3458 = vmul.f32 %v3423, %v3445
        %v3459 = vmul.f32 %v3424, %v3445
        %v3460 = vmul.f32 %v3425, %v3445
        %v3461 = vmul.f32 %v3426, %v3445
        %v3462 = vmul.f32 %v3427, %v3445
        %v3463 = vmul.f32 %v3428, %v3445
        %v3464 = vmul.f32 %v3429, %v3445
        %v3465 = vmul.f32 %v3430, %v3445
        %v3466 = vmul.f32 %v3431, %v3445
        %v3467 = vmul.f32 %v3432, %v3445
        %v3468 = vmul.f32 %v3433, %v3445
        %v3469 = vmul.f32 %v3434, %v3445
        %v3470 = vmul.f32 %v3435, %v3445
        %v3471 = vmul.f32 %v3436, %v3445
        %v3472 = vmul.f32 %v3437, %v3445
        %v3473 = vmul.f32 %v3438, %v3445
        %v3474 = vmul.f32 %v3439, %v3445
        %v3475 = vmul.f32 %v3440, %v3445
        %v3476 = vadd.f32 %v3380, %v3446
        %v3477 = vadd.f32 %v3381, %v3447
        %v3478 = vadd.f32 %v3382, %v3448
        %v3479 = vadd.f32 %v3383, %v3449
        %v3480 = vadd.f32 %v3384, %v3450
        %v3481 = vadd.f32 %v3385, %v3451
        %v3482 = vadd.f32 %v3386, %v3452
        %v3483 = vadd.f32 %v3387, %v3453
        %v3484 = vadd.f32 %v3388, %v3454
        %v3485 = vadd.f32 %v3389, %v3455
        %v3486 = vadd.f32 %v3390, %v3456
        %v3487 = vadd.f32 %v3391, %v3457
        %v3488 = vadd.f32 %v3392, %v3458
        %v3489 = vadd.f32 %v3393, %v3459
        %v3490 = vadd.f32 %v3394, %v3460
        %v3491 = vadd.f32 %v3395, %v3461
        %v3492 = vadd.f32 %v3396, %v3462
        %v3493 = vadd.f32 %v3397, %v3463
        %v3494 = vadd.f32 %v3398, %v3464
        %v3495 = vadd.f32 %v3399, %v3465
        %v3496 = vadd.f32 %v3400, %v3466
        %v3497 = vadd.f32 %v3401, %v3467
        %v3498 = vadd.f32 %v3402, %v3468
        %v3499 = vadd.f32 %v3403, %v3469
        %v3500 = vadd.f32 %v3404, %v3470
        %v3501 = vadd.f32 %v3405, %v3471
        %v3502 = vadd.f32 %v3406, %v3472
        %v3503 = vadd.f32 %v3407, %v3473
        %v3504 = vadd.f32 %v3408, %v3474
        %v3505 = vadd.f32 %v3409, %v3475
        %v3506 = vadd.f32 %v3026, %v3476
        %v3507 = vadd.f32 %v3027, %v3477
        %v3508 = vadd.f32 %v3028, %v3478
        %v3509 = vadd.f32 %v3029, %v3479
        %v3510 = vadd.f32 %v3030, %v3480
        %v3511 = vadd.f32 %v3031, %v3481
        %v3512 = vadd.f32 %v3032, %v3482
        %v3513 = vadd.f32 %v3033, %v3483
        %v3514 = vadd.f32 %v3034, %v3484
        %v3515 = vadd.f32 %v3035, %v3485
        %v3516 = vadd.f32 %v3036, %v3486
        %v3517 = vadd.f32 %v3037, %v3487
        %v3518 = vadd.f32 %v3038, %v3488
        %v3519 = vadd.f32 %v3039, %v3489
        %v3520 = vadd.f32 %v3040, %v3490
        %v3521 = vadd.f32 %v3041, %v3491
        %v3522 = vadd.f32 %v3042, %v3492
        %v3523 = vadd.f32 %v3043, %v3493
        %v3524 = vadd.f32 %v3044, %v3494
        %v3525 = vadd.f32 %v3045, %v3495
        %v3526 = vadd.f32 %v3046, %v3496
        %v3527 = vadd.f32 %v3047, %v3497
        %v3528 = vadd.f32 %v3048, %v3498
        %v3529 = vadd.f32 %v3049, %v3499
        %v3530 = vadd.f32 %v3050, %v3500
        %v3531 = vadd.f32 %v3051, %v3501
        %v3532 = vadd.f32 %v3052, %v3502
        %v3533 = vadd.f32 %v3053, %v3503
        %v3534 = vadd.f32 %v3054, %v3504
        %v3535 = vadd.f32 %v3055, %v3505
        %3536 = vst [vmem:[#allocation4] sm:$0xff] %v3506
        %3537 = vst [vmem:[#allocation4 + $0x8] sm:$0xff] %v3507
        %3538 = vst [vmem:[#allocation4 + $0x10] sm:$0xff] %v3508
        %3539 = vst [vmem:[#allocation4 + $0x18] sm:$0xff] %v3509
        %3540 = vst [vmem:[#allocation4 + $0x20] sm:$0xff] %v3510
        %3541 = vst [vmem:[#allocation4 + $0x28] sm:$0xff] %v3511
        %3542 = vst [vmem:[#allocation4 + $0x30] sm:$0xff] %v3512
        %3543 = vst [vmem:[#allocation4 + $0x38] sm:$0xff] %v3513
        %3544 = vst [vmem:[#allocation4 + $0x40] sm:$0xff] %v3514
        %3545 = vst [vmem:[#allocation4 + $0x48] sm:$0xff] %v3515
        %3546 = vst [vmem:[#allocation4 + $0x50] sm:$0xff] %v3516
        %3547 = vst [vmem:[#allocation4 + $0x58] sm:$0xff] %v3517
        %3548 = vst [vmem:[#allocation4 + $0x60] sm:$0xff] %v3518
        %3549 = vst [vmem:[#allocation4 + $0x68] sm:$0xff] %v3519
        %3550 = vst [vmem:[#allocation4 + $0x70] sm:$0xff] %v3520
        %3551 = vst [vmem:[#allocation4 + $0x78] sm:$0xff] %v3521
        %3552 = vst [vmem:[#allocation4 + $0x80] sm:$0xff] %v3522
        %3553 = vst [vmem:[#allocation4 + $0x88] sm:$0xff] %v3523
        %3554 = vst [vmem:[#allocation4 + $0x90] sm:$0xff] %v3524
        %3555 = vst [vmem:[#allocation4 + $0x98] sm:$0xff] %v3525
        %3556 = vst [vmem:[#allocation4 + $0xa0] sm:$0xff] %v3526
        %3557 = vst [vmem:[#allocation4 + $0xa8] sm:$0xff] %v3527
        %3558 = vst [vmem:[#allocation4 + $0xb0] sm:$0xff] %v3528
        %3559 = vst [vmem:[#allocation4 + $0xb8] sm:$0xff] %v3529
        %3560 = vst [vmem:[#allocation4 + $0xc0] sm:$0xff] %v3530
        %3561 = vst [vmem:[#allocation4 + $0xc8] sm:$0xff] %v3531
        %3562 = vst [vmem:[#allocation4 + $0xd0] sm:$0xff] %v3532
        %3563 = vst [vmem:[#allocation4 + $0xd8] sm:$0xff] %v3533
        %3564 = vst [vmem:[#allocation4 + $0xe0] sm:$0xff] %v3534
        %3565 = vst [vmem:[#allocation4 + $0xe8] sm:$0xff] %v3535
        %v3566 = vld [vmem:[#allocation4] sm:$0xff]
        %v3567 = vld [vmem:[#allocation4 + $0x8] sm:$0xff]
        %v3568 = vld [vmem:[#allocation4 + $0x10] sm:$0xff]
        %v3569 = vld [vmem:[#allocation4 + $0x18] sm:$0xff]
        %v3570 = vld [vmem:[#allocation4 + $0x20] sm:$0xff]
        %v3571 = vld [vmem:[#allocation4 + $0x28] sm:$0xff]
        %v3572 = vld [vmem:[#allocation4 + $0x30] sm:$0xff]
        %v3573 = vld [vmem:[#allocation4 + $0x38] sm:$0xff]
        %v3574 = vld [vmem:[#allocation4 + $0x40] sm:$0xff]
        %v3575 = vld [vmem:[#allocation4 + $0x48] sm:$0xff]
        %v3576 = vld [vmem:[#allocation4 + $0x50] sm:$0xff]
        %v3577 = vld [vmem:[#allocation4 + $0x58] sm:$0xff]
        %v3578 = vld [vmem:[#allocation4 + $0x60] sm:$0xff]
        %v3579 = vld [vmem:[#allocation4 + $0x68] sm:$0xff]
        %v3580 = vld [vmem:[#allocation4 + $0x70] sm:$0xff]
        %v3581 = vld [vmem:[#allocation4 + $0x78] sm:$0xff]
        %v3582 = vld [vmem:[#allocation4 + $0x80] sm:$0xff]
        %v3583 = vld [vmem:[#allocation4 + $0x88] sm:$0xff]
        %v3584 = vld [vmem:[#allocation4 + $0x90] sm:$0xff]
        %v3585 = vld [vmem:[#allocation4 + $0x98] sm:$0xff]
        %v3586 = vld [vmem:[#allocation4 + $0xa0] sm:$0xff]
        %v3587 = vld [vmem:[#allocation4 + $0xa8] sm:$0xff]
        %v3588 = vld [vmem:[#allocation4 + $0xb0] sm:$0xff]
        %v3589 = vld [vmem:[#allocation4 + $0xb8] sm:$0xff]
        %v3590 = vld [vmem:[#allocation4 + $0xc0] sm:$0xff]
        %v3591 = vld [vmem:[#allocation4 + $0xc8] sm:$0xff]
        %v3592 = vld [vmem:[#allocation4 + $0xd0] sm:$0xff]
        %v3593 = vld [vmem:[#allocation4 + $0xd8] sm:$0xff]
        %s3594 = scalar_lea.vmem [#allocation3], 32
        %v3595 = vld [vmem:[%s3594] sm:$0xff]
        %v3596 = vld [vmem:[%s3594 + $0x8] sm:$0xff]
        %v3597 = vld [vmem:[%s3594 + $0x10] sm:$0xff]
        %v3598 = vld [vmem:[%s3594 + $0x18] sm:$0xff]
        %v3599 = vld [vmem:[%s3594 + $0x20] sm:$0xff]
        %v3600 = vld [vmem:[%s3594 + $0x28] sm:$0xff]
        %v3601 = vld [vmem:[%s3594 + $0x30] sm:$0xff]
        %v3602 = vld [vmem:[%s3594 + $0x38] sm:$0xff]
        %v3603 = vld [vmem:[%s3594 + $0x40] sm:$0xff]
        %v3604 = vld [vmem:[%s3594 + $0x48] sm:$0xff]
        %v3605 = vld [vmem:[%s3594 + $0x50] sm:$0xff]
        %v3606 = vld [vmem:[%s3594 + $0x58] sm:$0xff]
        %v3607 = vld [vmem:[%s3594 + $0x60] sm:$0xff]
        %v3608 = vld [vmem:[%s3594 + $0x68] sm:$0xff]
        %v3609 = vld [vmem:[%s3594 + $0x70] sm:$0xff]
        %v3610 = vld [vmem:[%s3594 + $0x78] sm:$0xff]
        %v3611 = vld [vmem:[%s3594 + $0x80] sm:$0xff]
        %v3612 = vld [vmem:[%s3594 + $0x88] sm:$0xff]
        %v3613 = vld [vmem:[%s3594 + $0x90] sm:$0xff]
        %v3614 = vld [vmem:[%s3594 + $0x98] sm:$0xff]
        %v3615 = vld [vmem:[%s3594 + $0xa0] sm:$0xff]
        %v3616 = vld [vmem:[%s3594 + $0xa8] sm:$0xff]
        %v3617 = vld [vmem:[%s3594 + $0xb0] sm:$0xff]
        %v3618 = vld [vmem:[%s3594 + $0xb8] sm:$0xff]
        %v3619 = vld [vmem:[%s3594 + $0xc0] sm:$0xff]
        %v3620 = vld [vmem:[%s3594 + $0xc8] sm:$0xff]
        %v3621 = vld [vmem:[%s3594 + $0xd0] sm:$0xff]
        %v3622 = vld [vmem:[%s3594 + $0xd8] sm:$0xff]
        %v3623 = vld [vmem:[%s3 + $0x14] sm:$0x1]
        %v3624 = vlaneseq
        %v3625 = vshrl.u32 %v3624, 7
        %v3626 = vsub.s32 0, %v3625
        %v3627 = vrot.slane %v3623, %v3626
        %v3628 = vmul.f32 %v3595, %v3627
        %v3629 = vmul.f32 %v3596, %v3627
        %v3630 = vmul.f32 %v3597, %v3627
        %v3631 = vmul.f32 %v3598, %v3627
        %v3632 = vmul.f32 %v3599, %v3627
        %v3633 = vmul.f32 %v3600, %v3627
        %v3634 = vmul.f32 %v3601, %v3627
        %v3635 = vmul.f32 %v3602, %v3627
        %v3636 = vmul.f32 %v3603, %v3627
        %v3637 = vmul.f32 %v3604, %v3627
        %v3638 = vmul.f32 %v3605, %v3627
        %v3639 = vmul.f32 %v3606, %v3627
        %v3640 = vmul.f32 %v3607, %v3627
        %v3641 = vmul.f32 %v3608, %v3627
        %v3642 = vmul.f32 %v3609, %v3627
        %v3643 = vmul.f32 %v3610, %v3627
        %v3644 = vmul.f32 %v3611, %v3627
        %v3645 = vmul.f32 %v3612, %v3627
        %v3646 = vmul.f32 %v3613, %v3627
        %v3647 = vmul.f32 %v3614, %v3627
        %v3648 = vmul.f32 %v3615, %v3627
        %v3649 = vmul.f32 %v3616, %v3627
        %v3650 = vmul.f32 %v3617, %v3627
        %v3651 = vmul.f32 %v3618, %v3627
        %v3652 = vmul.f32 %v3619, %v3627
        %v3653 = vmul.f32 %v3620, %v3627
        %v3654 = vmul.f32 %v3621, %v3627
        %v3655 = vmul.f32 %v3622, %v3627
        %s3656 = scalar_lea.vmem [#allocation3], 288
        %v3657 = vld [vmem:[%s3656] sm:$0xff]
        %v3658 = vld [vmem:[%s3656 + $0x8] sm:$0xff]
        %v3659 = vld [vmem:[%s3656 + $0x10] sm:$0xff]
        %v3660 = vld [vmem:[%s3656 + $0x18] sm:$0xff]
        %v3661 = vld [vmem:[%s3656 + $0x20] sm:$0xff]
        %v3662 = vld [vmem:[%s3656 + $0x28] sm:$0xff]
        %v3663 = vld [vmem:[%s3656 + $0x30] sm:$0xff]
        %v3664 = vld [vmem:[%s3656 + $0x38] sm:$0xff]
        %v3665 = vld [vmem:[%s3656 + $0x40] sm:$0xff]
        %v3666 = vld [vmem:[%s3656 + $0x48] sm:$0xff]
        %v3667 = vld [vmem:[%s3656 + $0x50] sm:$0xff]
        %v3668 = vld [vmem:[%s3656 + $0x58] sm:$0xff]
        %v3669 = vld [vmem:[%s3656 + $0x60] sm:$0xff]
        %v3670 = vld [vmem:[%s3656 + $0x68] sm:$0xff]
        %v3671 = vld [vmem:[%s3656 + $0x70] sm:$0xff]
        %v3672 = vld [vmem:[%s3656 + $0x78] sm:$0xff]
        %v3673 = vld [vmem:[%s3656 + $0x80] sm:$0xff]
        %v3674 = vld [vmem:[%s3656 + $0x88] sm:$0xff]
        %v3675 = vld [vmem:[%s3656 + $0x90] sm:$0xff]
        %v3676 = vld [vmem:[%s3656 + $0x98] sm:$0xff]
        %v3677 = vld [vmem:[%s3656 + $0xa0] sm:$0xff]
        %v3678 = vld [vmem:[%s3656 + $0xa8] sm:$0xff]
        %v3679 = vld [vmem:[%s3656 + $0xb0] sm:$0xff]
        %v3680 = vld [vmem:[%s3656 + $0xb8] sm:$0xff]
        %v3681 = vld [vmem:[%s3656 + $0xc0] sm:$0xff]
        %v3682 = vld [vmem:[%s3656 + $0xc8] sm:$0xff]
        %v3683 = vld [vmem:[%s3656 + $0xd0] sm:$0xff]
        %v3684 = vld [vmem:[%s3656 + $0xd8] sm:$0xff]
        %v3685 = vld [vmem:[%s3 + $0x15] sm:$0x1]
        %v3686 = vlaneseq
        %v3687 = vshrl.u32 %v3686, 7
        %v3688 = vsub.s32 0, %v3687
        %v3689 = vrot.slane %v3685, %v3688
        %v3690 = vmul.f32 %v3657, %v3689
        %v3691 = vmul.f32 %v3658, %v3689
        %v3692 = vmul.f32 %v3659, %v3689
        %v3693 = vmul.f32 %v3660, %v3689
        %v3694 = vmul.f32 %v3661, %v3689
        %v3695 = vmul.f32 %v3662, %v3689
        %v3696 = vmul.f32 %v3663, %v3689
        %v3697 = vmul.f32 %v3664, %v3689
        %v3698 = vmul.f32 %v3665, %v3689
        %v3699 = vmul.f32 %v3666, %v3689
        %v3700 = vmul.f32 %v3667, %v3689
        %v3701 = vmul.f32 %v3668, %v3689
        %v3702 = vmul.f32 %v3669, %v3689
        %v3703 = vmul.f32 %v3670, %v3689
        %v3704 = vmul.f32 %v3671, %v3689
        %v3705 = vmul.f32 %v3672, %v3689
        %v3706 = vmul.f32 %v3673, %v3689
        %v3707 = vmul.f32 %v3674, %v3689
        %v3708 = vmul.f32 %v3675, %v3689
        %v3709 = vmul.f32 %v3676, %v3689
        %v3710 = vmul.f32 %v3677, %v3689
        %v3711 = vmul.f32 %v3678, %v3689
        %v3712 = vmul.f32 %v3679, %v3689
        %v3713 = vmul.f32 %v3680, %v3689
        %v3714 = vmul.f32 %v3681, %v3689
        %v3715 = vmul.f32 %v3682, %v3689
        %v3716 = vmul.f32 %v3683, %v3689
        %v3717 = vmul.f32 %v3684, %v3689
        %v3718 = vadd.f32 %v3628, %v3690
        %v3719 = vadd.f32 %v3629, %v3691
        %v3720 = vadd.f32 %v3630, %v3692
        %v3721 = vadd.f32 %v3631, %v3693
        %v3722 = vadd.f32 %v3632, %v3694
        %v3723 = vadd.f32 %v3633, %v3695
        %v3724 = vadd.f32 %v3634, %v3696
        %v3725 = vadd.f32 %v3635, %v3697
        %v3726 = vadd.f32 %v3636, %v3698
        %v3727 = vadd.f32 %v3637, %v3699
        %v3728 = vadd.f32 %v3638, %v3700
        %v3729 = vadd.f32 %v3639, %v3701
        %v3730 = vadd.f32 %v3640, %v3702
        %v3731 = vadd.f32 %v3641, %v3703
        %v3732 = vadd.f32 %v3642, %v3704
        %v3733 = vadd.f32 %v3643, %v3705
        %v3734 = vadd.f32 %v3644, %v3706
        %v3735 = vadd.f32 %v3645, %v3707
        %v3736 = vadd.f32 %v3646, %v3708
        %v3737 = vadd.f32 %v3647, %v3709
        %v3738 = vadd.f32 %v3648, %v3710
        %v3739 = vadd.f32 %v3649, %v3711
        %v3740 = vadd.f32 %v3650, %v3712
        %v3741 = vadd.f32 %v3651, %v3713
        %v3742 = vadd.f32 %v3652, %v3714
        %v3743 = vadd.f32 %v3653, %v3715
        %v3744 = vadd.f32 %v3654, %v3716
        %v3745 = vadd.f32 %v3655, %v3717
        %s3746 = scalar_lea.vmem [#allocation3], 544
        %v3747 = vld [vmem:[%s3746] sm:$0xff]
        %v3748 = vld [vmem:[%s3746 + $0x8] sm:$0xff]
        %v3749 = vld [vmem:[%s3746 + $0x10] sm:$0xff]
        %v3750 = vld [vmem:[%s3746 + $0x18] sm:$0xff]
        %v3751 = vld [vmem:[%s3746 + $0x20] sm:$0xff]
        %v3752 = vld [vmem:[%s3746 + $0x28] sm:$0xff]
        %v3753 = vld [vmem:[%s3746 + $0x30] sm:$0xff]
        %v3754 = vld [vmem:[%s3746 + $0x38] sm:$0xff]
        %v3755 = vld [vmem:[%s3746 + $0x40] sm:$0xff]
        %v3756 = vld [vmem:[%s3746 + $0x48] sm:$0xff]
        %v3757 = vld [vmem:[%s3746 + $0x50] sm:$0xff]
        %v3758 = vld [vmem:[%s3746 + $0x58] sm:$0xff]
        %v3759 = vld [vmem:[%s3746 + $0x60] sm:$0xff]
        %v3760 = vld [vmem:[%s3746 + $0x68] sm:$0xff]
        %v3761 = vld [vmem:[%s3746 + $0x70] sm:$0xff]
        %v3762 = vld [vmem:[%s3746 + $0x78] sm:$0xff]
        %v3763 = vld [vmem:[%s3746 + $0x80] sm:$0xff]
        %v3764 = vld [vmem:[%s3746 + $0x88] sm:$0xff]
        %v3765 = vld [vmem:[%s3746 + $0x90] sm:$0xff]
        %v3766 = vld [vmem:[%s3746 + $0x98] sm:$0xff]
        %v3767 = vld [vmem:[%s3746 + $0xa0] sm:$0xff]
        %v3768 = vld [vmem:[%s3746 + $0xa8] sm:$0xff]
        %v3769 = vld [vmem:[%s3746 + $0xb0] sm:$0xff]
        %v3770 = vld [vmem:[%s3746 + $0xb8] sm:$0xff]
        %v3771 = vld [vmem:[%s3746 + $0xc0] sm:$0xff]
        %v3772 = vld [vmem:[%s3746 + $0xc8] sm:$0xff]
        %v3773 = vld [vmem:[%s3746 + $0xd0] sm:$0xff]
        %v3774 = vld [vmem:[%s3746 + $0xd8] sm:$0xff]
        %v3775 = vld [vmem:[%s3 + $0x16] sm:$0x1]
        %v3776 = vlaneseq
        %v3777 = vshrl.u32 %v3776, 7
        %v3778 = vsub.s32 0, %v3777
        %v3779 = vrot.slane %v3775, %v3778
        %v3780 = vmul.f32 %v3747, %v3779
        %v3781 = vmul.f32 %v3748, %v3779
        %v3782 = vmul.f32 %v3749, %v3779
        %v3783 = vmul.f32 %v3750, %v3779
        %v3784 = vmul.f32 %v3751, %v3779
        %v3785 = vmul.f32 %v3752, %v3779
        %v3786 = vmul.f32 %v3753, %v3779
        %v3787 = vmul.f32 %v3754, %v3779
        %v3788 = vmul.f32 %v3755, %v3779
        %v3789 = vmul.f32 %v3756, %v3779
        %v3790 = vmul.f32 %v3757, %v3779
        %v3791 = vmul.f32 %v3758, %v3779
        %v3792 = vmul.f32 %v3759, %v3779
        %v3793 = vmul.f32 %v3760, %v3779
        %v3794 = vmul.f32 %v3761, %v3779
        %v3795 = vmul.f32 %v3762, %v3779
        %v3796 = vmul.f32 %v3763, %v3779
        %v3797 = vmul.f32 %v3764, %v3779
        %v3798 = vmul.f32 %v3765, %v3779
        %v3799 = vmul.f32 %v3766, %v3779
        %v3800 = vmul.f32 %v3767, %v3779
        %v3801 = vmul.f32 %v3768, %v3779
        %v3802 = vmul.f32 %v3769, %v3779
        %v3803 = vmul.f32 %v3770, %v3779
        %v3804 = vmul.f32 %v3771, %v3779
        %v3805 = vmul.f32 %v3772, %v3779
        %v3806 = vmul.f32 %v3773, %v3779
        %v3807 = vmul.f32 %v3774, %v3779
        %v3808 = vadd.f32 %v3718, %v3780
        %v3809 = vadd.f32 %v3719, %v3781
        %v3810 = vadd.f32 %v3720, %v3782
        %v3811 = vadd.f32 %v3721, %v3783
        %v3812 = vadd.f32 %v3722, %v3784
        %v3813 = vadd.f32 %v3723, %v3785
        %v3814 = vadd.f32 %v3724, %v3786
        %v3815 = vadd.f32 %v3725, %v3787
        %v3816 = vadd.f32 %v3726, %v3788
        %v3817 = vadd.f32 %v3727, %v3789
        %v3818 = vadd.f32 %v3728, %v3790
        %v3819 = vadd.f32 %v3729, %v3791
        %v3820 = vadd.f32 %v3730, %v3792
        %v3821 = vadd.f32 %v3731, %v3793
        %v3822 = vadd.f32 %v3732, %v3794
        %v3823 = vadd.f32 %v3733, %v3795
        %v3824 = vadd.f32 %v3734, %v3796
        %v3825 = vadd.f32 %v3735, %v3797
        %v3826 = vadd.f32 %v3736, %v3798
        %v3827 = vadd.f32 %v3737, %v3799
        %v3828 = vadd.f32 %v3738, %v3800
        %v3829 = vadd.f32 %v3739, %v3801
        %v3830 = vadd.f32 %v3740, %v3802
        %v3831 = vadd.f32 %v3741, %v3803
        %v3832 = vadd.f32 %v3742, %v3804
        %v3833 = vadd.f32 %v3743, %v3805
        %v3834 = vadd.f32 %v3744, %v3806
        %v3835 = vadd.f32 %v3745, %v3807
        %s3836 = scalar_lea.vmem [#allocation3], 800
        %v3837 = vld [vmem:[%s3836] sm:$0xff]
        %v3838 = vld [vmem:[%s3836 + $0x8] sm:$0xff]
        %v3839 = vld [vmem:[%s3836 + $0x10] sm:$0xff]
        %v3840 = vld [vmem:[%s3836 + $0x18] sm:$0xff]
        %v3841 = vld [vmem:[%s3836 + $0x20] sm:$0xff]
        %v3842 = vld [vmem:[%s3836 + $0x28] sm:$0xff]
        %v3843 = vld [vmem:[%s3836 + $0x30] sm:$0xff]
        %v3844 = vld [vmem:[%s3836 + $0x38] sm:$0xff]
        %v3845 = vld [vmem:[%s3836 + $0x40] sm:$0xff]
        %v3846 = vld [vmem:[%s3836 + $0x48] sm:$0xff]
        %v3847 = vld [vmem:[%s3836 + $0x50] sm:$0xff]
        %v3848 = vld [vmem:[%s3836 + $0x58] sm:$0xff]
        %v3849 = vld [vmem:[%s3836 + $0x60] sm:$0xff]
        %v3850 = vld [vmem:[%s3836 + $0x68] sm:$0xff]
        %v3851 = vld [vmem:[%s3836 + $0x70] sm:$0xff]
        %v3852 = vld [vmem:[%s3836 + $0x78] sm:$0xff]
        %v3853 = vld [vmem:[%s3836 + $0x80] sm:$0xff]
        %v3854 = vld [vmem:[%s3836 + $0x88] sm:$0xff]
        %v3855 = vld [vmem:[%s3836 + $0x90] sm:$0xff]
        %v3856 = vld [vmem:[%s3836 + $0x98] sm:$0xff]
        %v3857 = vld [vmem:[%s3836 + $0xa0] sm:$0xff]
        %v3858 = vld [vmem:[%s3836 + $0xa8] sm:$0xff]
        %v3859 = vld [vmem:[%s3836 + $0xb0] sm:$0xff]
        %v3860 = vld [vmem:[%s3836 + $0xb8] sm:$0xff]
        %v3861 = vld [vmem:[%s3836 + $0xc0] sm:$0xff]
        %v3862 = vld [vmem:[%s3836 + $0xc8] sm:$0xff]
        %v3863 = vld [vmem:[%s3836 + $0xd0] sm:$0xff]
        %v3864 = vld [vmem:[%s3836 + $0xd8] sm:$0xff]
        %v3865 = vld [vmem:[%s3 + $0x17] sm:$0x1]
        %v3866 = vlaneseq
        %v3867 = vshrl.u32 %v3866, 7
        %v3868 = vsub.s32 0, %v3867
        %v3869 = vrot.slane %v3865, %v3868
        %v3870 = vmul.f32 %v3837, %v3869
        %v3871 = vmul.f32 %v3838, %v3869
        %v3872 = vmul.f32 %v3839, %v3869
        %v3873 = vmul.f32 %v3840, %v3869
        %v3874 = vmul.f32 %v3841, %v3869
        %v3875 = vmul.f32 %v3842, %v3869
        %v3876 = vmul.f32 %v3843, %v3869
        %v3877 = vmul.f32 %v3844, %v3869
        %v3878 = vmul.f32 %v3845, %v3869
        %v3879 = vmul.f32 %v3846, %v3869
        %v3880 = vmul.f32 %v3847, %v3869
        %v3881 = vmul.f32 %v3848, %v3869
        %v3882 = vmul.f32 %v3849, %v3869
        %v3883 = vmul.f32 %v3850, %v3869
        %v3884 = vmul.f32 %v3851, %v3869
        %v3885 = vmul.f32 %v3852, %v3869
        %v3886 = vmul.f32 %v3853, %v3869
        %v3887 = vmul.f32 %v3854, %v3869
        %v3888 = vmul.f32 %v3855, %v3869
        %v3889 = vmul.f32 %v3856, %v3869
        %v3890 = vmul.f32 %v3857, %v3869
        %v3891 = vmul.f32 %v3858, %v3869
        %v3892 = vmul.f32 %v3859, %v3869
        %v3893 = vmul.f32 %v3860, %v3869
        %v3894 = vmul.f32 %v3861, %v3869
        %v3895 = vmul.f32 %v3862, %v3869
        %v3896 = vmul.f32 %v3863, %v3869
        %v3897 = vmul.f32 %v3864, %v3869
        %v3898 = vadd.f32 %v3808, %v3870
        %v3899 = vadd.f32 %v3809, %v3871
        %v3900 = vadd.f32 %v3810, %v3872
        %v3901 = vadd.f32 %v3811, %v3873
        %v3902 = vadd.f32 %v3812, %v3874
        %v3903 = vadd.f32 %v3813, %v3875
        %v3904 = vadd.f32 %v3814, %v3876
        %v3905 = vadd.f32 %v3815, %v3877
        %v3906 = vadd.f32 %v3816, %v3878
        %v3907 = vadd.f32 %v3817, %v3879
        %v3908 = vadd.f32 %v3818, %v3880
        %v3909 = vadd.f32 %v3819, %v3881
        %v3910 = vadd.f32 %v3820, %v3882
        %v3911 = vadd.f32 %v3821, %v3883
        %v3912 = vadd.f32 %v3822, %v3884
        %v3913 = vadd.f32 %v3823, %v3885
        %v3914 = vadd.f32 %v3824, %v3886
        %v3915 = vadd.f32 %v3825, %v3887
        %v3916 = vadd.f32 %v3826, %v3888
        %v3917 = vadd.f32 %v3827, %v3889
        %v3918 = vadd.f32 %v3828, %v3890
        %v3919 = vadd.f32 %v3829, %v3891
        %v3920 = vadd.f32 %v3830, %v3892
        %v3921 = vadd.f32 %v3831, %v3893
        %v3922 = vadd.f32 %v3832, %v3894
        %v3923 = vadd.f32 %v3833, %v3895
        %v3924 = vadd.f32 %v3834, %v3896
        %v3925 = vadd.f32 %v3835, %v3897
        %s3926 = scalar_lea.vmem [#allocation3], 1056
        %v3927 = vld [vmem:[%s3926] sm:$0xff]
        %v3928 = vld [vmem:[%s3926 + $0x8] sm:$0xff]
        %v3929 = vld [vmem:[%s3926 + $0x10] sm:$0xff]
        %v3930 = vld [vmem:[%s3926 + $0x18] sm:$0xff]
        %v3931 = vld [vmem:[%s3926 + $0x20] sm:$0xff]
        %v3932 = vld [vmem:[%s3926 + $0x28] sm:$0xff]
        %v3933 = vld [vmem:[%s3926 + $0x30] sm:$0xff]
        %v3934 = vld [vmem:[%s3926 + $0x38] sm:$0xff]
        %v3935 = vld [vmem:[%s3926 + $0x40] sm:$0xff]
        %v3936 = vld [vmem:[%s3926 + $0x48] sm:$0xff]
        %v3937 = vld [vmem:[%s3926 + $0x50] sm:$0xff]
        %v3938 = vld [vmem:[%s3926 + $0x58] sm:$0xff]
        %v3939 = vld [vmem:[%s3926 + $0x60] sm:$0xff]
        %v3940 = vld [vmem:[%s3926 + $0x68] sm:$0xff]
        %v3941 = vld [vmem:[%s3926 + $0x70] sm:$0xff]
        %v3942 = vld [vmem:[%s3926 + $0x78] sm:$0xff]
        %v3943 = vld [vmem:[%s3926 + $0x80] sm:$0xff]
        %v3944 = vld [vmem:[%s3926 + $0x88] sm:$0xff]
        %v3945 = vld [vmem:[%s3926 + $0x90] sm:$0xff]
        %v3946 = vld [vmem:[%s3926 + $0x98] sm:$0xff]
        %v3947 = vld [vmem:[%s3926 + $0xa0] sm:$0xff]
        %v3948 = vld [vmem:[%s3926 + $0xa8] sm:$0xff]
        %v3949 = vld [vmem:[%s3926 + $0xb0] sm:$0xff]
        %v3950 = vld [vmem:[%s3926 + $0xb8] sm:$0xff]
        %v3951 = vld [vmem:[%s3926 + $0xc0] sm:$0xff]
        %v3952 = vld [vmem:[%s3926 + $0xc8] sm:$0xff]
        %v3953 = vld [vmem:[%s3926 + $0xd0] sm:$0xff]
        %v3954 = vld [vmem:[%s3926 + $0xd8] sm:$0xff]
        %v3955 = vld [vmem:[%s3 + $0x18] sm:$0x1]
        %v3956 = vlaneseq
        %v3957 = vshrl.u32 %v3956, 7
        %v3958 = vsub.s32 0, %v3957
        %v3959 = vrot.slane %v3955, %v3958
        %v3960 = vmul.f32 %v3927, %v3959
        %v3961 = vmul.f32 %v3928, %v3959
        %v3962 = vmul.f32 %v3929, %v3959
        %v3963 = vmul.f32 %v3930, %v3959
        %v3964 = vmul.f32 %v3931, %v3959
        %v3965 = vmul.f32 %v3932, %v3959
        %v3966 = vmul.f32 %v3933, %v3959
        %v3967 = vmul.f32 %v3934, %v3959
        %v3968 = vmul.f32 %v3935, %v3959
        %v3969 = vmul.f32 %v3936, %v3959
        %v3970 = vmul.f32 %v3937, %v3959
        %v3971 = vmul.f32 %v3938, %v3959
        %v3972 = vmul.f32 %v3939, %v3959
        %v3973 = vmul.f32 %v3940, %v3959
        %v3974 = vmul.f32 %v3941, %v3959
        %v3975 = vmul.f32 %v3942, %v3959
        %v3976 = vmul.f32 %v3943, %v3959
        %v3977 = vmul.f32 %v3944, %v3959
        %v3978 = vmul.f32 %v3945, %v3959
        %v3979 = vmul.f32 %v3946, %v3959
        %v3980 = vmul.f32 %v3947, %v3959
        %v3981 = vmul.f32 %v3948, %v3959
        %v3982 = vmul.f32 %v3949, %v3959
        %v3983 = vmul.f32 %v3950, %v3959
        %v3984 = vmul.f32 %v3951, %v3959
        %v3985 = vmul.f32 %v3952, %v3959
        %v3986 = vmul.f32 %v3953, %v3959
        %v3987 = vmul.f32 %v3954, %v3959
        %v3988 = vadd.f32 %v3898, %v3960
        %v3989 = vadd.f32 %v3899, %v3961
        %v3990 = vadd.f32 %v3900, %v3962
        %v3991 = vadd.f32 %v3901, %v3963
        %v3992 = vadd.f32 %v3902, %v3964
        %v3993 = vadd.f32 %v3903, %v3965
        %v3994 = vadd.f32 %v3904, %v3966
        %v3995 = vadd.f32 %v3905, %v3967
        %v3996 = vadd.f32 %v3906, %v3968
        %v3997 = vadd.f32 %v3907, %v3969
        %v3998 = vadd.f32 %v3908, %v3970
        %v3999 = vadd.f32 %v3909, %v3971
        %v4000 = vadd.f32 %v3910, %v3972
        %v4001 = vadd.f32 %v3911, %v3973
        %v4002 = vadd.f32 %v3912, %v3974
        %v4003 = vadd.f32 %v3913, %v3975
        %v4004 = vadd.f32 %v3914, %v3976
        %v4005 = vadd.f32 %v3915, %v3977
        %v4006 = vadd.f32 %v3916, %v3978
        %v4007 = vadd.f32 %v3917, %v3979
        %v4008 = vadd.f32 %v3918, %v3980
        %v4009 = vadd.f32 %v3919, %v3981
        %v4010 = vadd.f32 %v3920, %v3982
        %v4011 = vadd.f32 %v3921, %v3983
        %v4012 = vadd.f32 %v3922, %v3984
        %v4013 = vadd.f32 %v3923, %v3985
        %v4014 = vadd.f32 %v3924, %v3986
        %v4015 = vadd.f32 %v3925, %v3987
        %v4016 = vadd.f32 %v3566, %v3988
        %v4017 = vadd.f32 %v3567, %v3989
        %v4018 = vadd.f32 %v3568, %v3990
        %v4019 = vadd.f32 %v3569, %v3991
        %v4020 = vadd.f32 %v3570, %v3992
        %v4021 = vadd.f32 %v3571, %v3993
        %v4022 = vadd.f32 %v3572, %v3994
        %v4023 = vadd.f32 %v3573, %v3995
        %v4024 = vadd.f32 %v3574, %v3996
        %v4025 = vadd.f32 %v3575, %v3997
        %v4026 = vadd.f32 %v3576, %v3998
        %v4027 = vadd.f32 %v3577, %v3999
        %v4028 = vadd.f32 %v3578, %v4000
        %v4029 = vadd.f32 %v3579, %v4001
        %v4030 = vadd.f32 %v3580, %v4002
        %v4031 = vadd.f32 %v3581, %v4003
        %v4032 = vadd.f32 %v3582, %v4004
        %v4033 = vadd.f32 %v3583, %v4005
        %v4034 = vadd.f32 %v3584, %v4006
        %v4035 = vadd.f32 %v3585, %v4007
        %v4036 = vadd.f32 %v3586, %v4008
        %v4037 = vadd.f32 %v3587, %v4009
        %v4038 = vadd.f32 %v3588, %v4010
        %v4039 = vadd.f32 %v3589, %v4011
        %v4040 = vadd.f32 %v3590, %v4012
        %v4041 = vadd.f32 %v3591, %v4013
        %v4042 = vadd.f32 %v3592, %v4014
        %v4043 = vadd.f32 %v3593, %v4015
        %4044 = vst [vmem:[#allocation4] sm:$0xff] %v4016
        %4045 = vst [vmem:[#allocation4 + $0x8] sm:$0xff] %v4017
        %4046 = vst [vmem:[#allocation4 + $0x10] sm:$0xff] %v4018
        %4047 = vst [vmem:[#allocation4 + $0x18] sm:$0xff] %v4019
        %4048 = vst [vmem:[#allocation4 + $0x20] sm:$0xff] %v4020
        %4049 = vst [vmem:[#allocation4 + $0x28] sm:$0xff] %v4021
        %4050 = vst [vmem:[#allocation4 + $0x30] sm:$0xff] %v4022
        %4051 = vst [vmem:[#allocation4 + $0x38] sm:$0xff] %v4023
        %4052 = vst [vmem:[#allocation4 + $0x40] sm:$0xff] %v4024
        %4053 = vst [vmem:[#allocation4 + $0x48] sm:$0xff] %v4025
        %4054 = vst [vmem:[#allocation4 + $0x50] sm:$0xff] %v4026
        %4055 = vst [vmem:[#allocation4 + $0x58] sm:$0xff] %v4027
        %4056 = vst [vmem:[#allocation4 + $0x60] sm:$0xff] %v4028
        %4057 = vst [vmem:[#allocation4 + $0x68] sm:$0xff] %v4029
        %4058 = vst [vmem:[#allocation4 + $0x70] sm:$0xff] %v4030
        %4059 = vst [vmem:[#allocation4 + $0x78] sm:$0xff] %v4031
        %4060 = vst [vmem:[#allocation4 + $0x80] sm:$0xff] %v4032
        %4061 = vst [vmem:[#allocation4 + $0x88] sm:$0xff] %v4033
        %4062 = vst [vmem:[#allocation4 + $0x90] sm:$0xff] %v4034
        %4063 = vst [vmem:[#allocation4 + $0x98] sm:$0xff] %v4035
        %4064 = vst [vmem:[#allocation4 + $0xa0] sm:$0xff] %v4036
        %4065 = vst [vmem:[#allocation4 + $0xa8] sm:$0xff] %v4037
        %4066 = vst [vmem:[#allocation4 + $0xb0] sm:$0xff] %v4038
        %4067 = vst [vmem:[#allocation4 + $0xb8] sm:$0xff] %v4039
        %4068 = vst [vmem:[#allocation4 + $0xc0] sm:$0xff] %v4040
        %4069 = vst [vmem:[#allocation4 + $0xc8] sm:$0xff] %v4041
        %4070 = vst [vmem:[#allocation4 + $0xd0] sm:$0xff] %v4042
        %4071 = vst [vmem:[#allocation4 + $0xd8] sm:$0xff] %v4043
        %v4072 = vld [vmem:[#allocation4] sm:$0xff]
        %v4073 = vld [vmem:[#allocation4 + $0x8] sm:$0xff]
        %v4074 = vld [vmem:[#allocation4 + $0x10] sm:$0xff]
        %v4075 = vld [vmem:[#allocation4 + $0x18] sm:$0xff]
        %v4076 = vld [vmem:[#allocation4 + $0x20] sm:$0xff]
        %v4077 = vld [vmem:[#allocation4 + $0x28] sm:$0xff]
        %v4078 = vld [vmem:[#allocation4 + $0x30] sm:$0xff]
        %v4079 = vld [vmem:[#allocation4 + $0x38] sm:$0xff]
        %v4080 = vld [vmem:[#allocation4 + $0x40] sm:$0xff]
        %v4081 = vld [vmem:[#allocation4 + $0x48] sm:$0xff]
        %v4082 = vld [vmem:[#allocation4 + $0x50] sm:$0xff]
        %v4083 = vld [vmem:[#allocation4 + $0x58] sm:$0xff]
        %v4084 = vld [vmem:[#allocation4 + $0x60] sm:$0xff]
        %v4085 = vld [vmem:[#allocation4 + $0x68] sm:$0xff]
        %v4086 = vld [vmem:[#allocation4 + $0x70] sm:$0xff]
        %v4087 = vld [vmem:[#allocation4 + $0x78] sm:$0xff]
        %v4088 = vld [vmem:[#allocation4 + $0x80] sm:$0xff]
        %v4089 = vld [vmem:[#allocation4 + $0x88] sm:$0xff]
        %v4090 = vld [vmem:[#allocation4 + $0x90] sm:$0xff]
        %v4091 = vld [vmem:[#allocation4 + $0x98] sm:$0xff]
        %v4092 = vld [vmem:[#allocation4 + $0xa0] sm:$0xff]
        %v4093 = vld [vmem:[#allocation4 + $0xa8] sm:$0xff]
        %v4094 = vld [vmem:[#allocation4 + $0xb0] sm:$0xff]
        %v4095 = vld [vmem:[#allocation4 + $0xb8] sm:$0xff]
        %v4096 = vld [vmem:[#allocation4 + $0xc0] sm:$0xff]
        %v4097 = vld [vmem:[#allocation4 + $0xc8] sm:$0xff]
        %v4098 = vld [vmem:[#allocation4 + $0xd0] sm:$0xff]
        %v4099 = vld [vmem:[#allocation4 + $0xd8] sm:$0xff]
        %v4100 = vld [vmem:[#allocation4 + $0xe0] sm:$0xff]
        %v4101 = vld [vmem:[#allocation4 + $0xe8] sm:$0xff]
        %v4102 = vld [vmem:[#allocation4 + $0xf0] sm:$0xff]
        %v4103 = vld [vmem:[#allocation4 + $0xf8] sm:$0xff]
        %4104 = vst [vmem:[%s404] sm:$0xff] %v4072
        %4105 = vst [vmem:[%s404 + $0x8] sm:$0xff] %v4073
        %4106 = vst [vmem:[%s404 + $0x10] sm:$0xff] %v4074
        %4107 = vst [vmem:[%s404 + $0x18] sm:$0xff] %v4075
        %4108 = vst [vmem:[%s404 + $0x20] sm:$0xff] %v4076
        %4109 = vst [vmem:[%s404 + $0x28] sm:$0xff] %v4077
        %4110 = vst [vmem:[%s404 + $0x30] sm:$0xff] %v4078
        %4111 = vst [vmem:[%s404 + $0x38] sm:$0xff] %v4079
        %4112 = vst [vmem:[%s404 + $0x40] sm:$0xff] %v4080
        %4113 = vst [vmem:[%s404 + $0x48] sm:$0xff] %v4081
        %4114 = vst [vmem:[%s404 + $0x50] sm:$0xff] %v4082
        %4115 = vst [vmem:[%s404 + $0x58] sm:$0xff] %v4083
        %4116 = vst [vmem:[%s404 + $0x60] sm:$0xff] %v4084
        %4117 = vst [vmem:[%s404 + $0x68] sm:$0xff] %v4085
        %4118 = vst [vmem:[%s404 + $0x70] sm:$0xff] %v4086
        %4119 = vst [vmem:[%s404 + $0x78] sm:$0xff] %v4087
        %4120 = vst [vmem:[%s404 + $0x80] sm:$0xff] %v4088
        %4121 = vst [vmem:[%s404 + $0x88] sm:$0xff] %v4089
        %4122 = vst [vmem:[%s404 + $0x90] sm:$0xff] %v4090
        %4123 = vst [vmem:[%s404 + $0x98] sm:$0xff] %v4091
        %4124 = vst [vmem:[%s404 + $0xa0] sm:$0xff] %v4092
        %4125 = vst [vmem:[%s404 + $0xa8] sm:$0xff] %v4093
        %4126 = vst [vmem:[%s404 + $0xb0] sm:$0xff] %v4094
        %4127 = vst [vmem:[%s404 + $0xb8] sm:$0xff] %v4095
        %4128 = vst [vmem:[%s404 + $0xc0] sm:$0xff] %v4096
        %4129 = vst [vmem:[%s404 + $0xc8] sm:$0xff] %v4097
        %4130 = vst [vmem:[%s404 + $0xd0] sm:$0xff] %v4098
        %4131 = vst [vmem:[%s404 + $0xd8] sm:$0xff] %v4099
        %4132 = vst [vmem:[%s404 + $0xe0] sm:$0xff] %v4100
        %4133 = vst [vmem:[%s404 + $0xe8] sm:$0xff] %v4101
        %4134 = vst [vmem:[%s404 + $0xf0] sm:$0xff] %v4102
        %4135 = vst [vmem:[%s404 + $0xf8] sm:$0xff] %v4103
        %s4136 = sand.u32 %s156, 1
        %s4137 = sand.u32 %s156, 1
        %s4138 = smul.addr %s4137, 256
        %s4139 = scalar_lea.vmem [#allocation6], %s4138
        // Predicated region
        $region83: #{gn_act_dwconv2d.1} parent=77 // pred_check
          %p4140 = pneg %p166
        $region84: #{gn_act_dwconv2d.1} parent=77 // pred_check_branch
          %4142 = sbr.rel (%p4140) target = $region86
        $region85: #{gn_act_dwconv2d.1} parent=77 // pred_region
          %s4143 = smul.addr %s17, 8
          %s4144 = scalar_lea.vmem %s6, %s4143
          // Predicated region
          $region87: #{gn_act_dwconv2d.1} parent=85 // pred_check
            _
          $region88: #{gn_act_dwconv2d.1} parent=85 // pred_check_branch
            %4146 = sbr.rel (0) target = $region90
          $region89: #{gn_act_dwconv2d.1} parent=85 // pred_region
            // Predicated region
            $region91: #{gn_act_dwconv2d.1} parent=89 // pred_check
              _
            $region92: #{gn_act_dwconv2d.1} parent=89 // pred_check_branch
              %4148 = sbr.rel (0) target = $region94
            $region93: #{gn_act_dwconv2d.1} parent=89 // pred_region
              // Predicated region
              $region106: #{gn_act_dwconv2d.1} parent=93 // pred_check
                _
              $region107: #{gn_act_dwconv2d.1} parent=93 // pred_check_branch
                %4226 = sbr.rel (0) target = $region109
              $region108: #{gn_act_dwconv2d.1} parent=93 // pred_region
                loop: start=0, step=1, limit=1
                $region110: #{gn_act_dwconv2d.1} parent=108 // loop_pre_header
                  _
                $region111: #{gn_act_dwconv2d.1} parent=108 // loop_header
                  %s4228 = sphi 0, %s4232
                  %p4229 = scmp.ge.s32.totalorder %s4228, 1
                  %s4233 = sphi %s4139, %s4139
                  %s4234 = sphi %s4144, %s4144
                $region112: #{gn_act_dwconv2d.1} parent=108 // loop_header_branch
                  %4231 = sbr.rel (%p4229) target = $region116
                $region113: #{gn_act_dwconv2d.1} parent=108 // loop_body
                  %v4235 = vld [vmem:[%s4233] sm:$0xff]
                  %4236 = vst [vmem:[%s4234] sm:$0xff] %v4235
                  %v4237 = vld [vmem:[%s4233 + $0x8] sm:$0xff]
                  %4238 = vst [vmem:[%s4234 + $0x10] sm:$0xff] %v4237
                  %v4239 = vld [vmem:[%s4233 + $0x10] sm:$0xff]
                  %4240 = vst [vmem:[%s4234 + $0x20] sm:$0xff] %v4239
                  %v4241 = vld [vmem:[%s4233 + $0x18] sm:$0xff]
                  %4242 = vst [vmem:[%s4234 + $0x30] sm:$0xff] %v4241
                  %v4243 = vld [vmem:[%s4233 + $0x20] sm:$0xff]
                  %4244 = vst [vmem:[%s4234 + $0x40] sm:$0xff] %v4243
                  %v4245 = vld [vmem:[%s4233 + $0x28] sm:$0xff]
                  %4246 = vst [vmem:[%s4234 + $0x50] sm:$0xff] %v4245
                  %v4247 = vld [vmem:[%s4233 + $0x30] sm:$0xff]
                  %4248 = vst [vmem:[%s4234 + $0x60] sm:$0xff] %v4247
                  %v4249 = vld [vmem:[%s4233 + $0x38] sm:$0xff]
                  %4250 = vst [vmem:[%s4234 + $0x70] sm:$0xff] %v4249
                  %v4251 = vld [vmem:[%s4233 + $0x40] sm:$0xff]
                  %4252 = vst [vmem:[%s4234 + $0x80] sm:$0xff] %v4251
                  %v4253 = vld [vmem:[%s4233 + $0x48] sm:$0xff]
                  %4254 = vst [vmem:[%s4234 + $0x90] sm:$0xff] %v4253
                  %v4255 = vld [vmem:[%s4233 + $0x50] sm:$0xff]
                  %4256 = vst [vmem:[%s4234 + $0xa0] sm:$0xff] %v4255
                  %v4257 = vld [vmem:[%s4233 + $0x58] sm:$0xff]
                  %4258 = vst [vmem:[%s4234 + $0xb0] sm:$0xff] %v4257
                  %v4259 = vld [vmem:[%s4233 + $0x60] sm:$0xff]
                  %4260 = vst [vmem:[%s4234 + $0xc0] sm:$0xff] %v4259
                  %v4261 = vld [vmem:[%s4233 + $0x68] sm:$0xff]
                  %4262 = vst [vmem:[%s4234 + $0xd0] sm:$0xff] %v4261
                  %v4263 = vld [vmem:[%s4233 + $0x70] sm:$0xff]
                  %4264 = vst [vmem:[%s4234 + $0xe0] sm:$0xff] %v4263
                  %v4265 = vld [vmem:[%s4233 + $0x78] sm:$0xff]
                  %4266 = vst [vmem:[%s4234 + $0xf0] sm:$0xff] %v4265
                  %v4267 = vld [vmem:[%s4233 + $0x80] sm:$0xff]
                  %4268 = vst [vmem:[%s4234 + $0x100] sm:$0xff] %v4267
                  %v4269 = vld [vmem:[%s4233 + $0x88] sm:$0xff]
                  %4270 = vst [vmem:[%s4234 + $0x110] sm:$0xff] %v4269
                  %v4271 = vld [vmem:[%s4233 + $0x90] sm:$0xff]
                  %4272 = vst [vmem:[%s4234 + $0x120] sm:$0xff] %v4271
                  %v4273 = vld [vmem:[%s4233 + $0x98] sm:$0xff]
                  %4274 = vst [vmem:[%s4234 + $0x130] sm:$0xff] %v4273
                  %v4275 = vld [vmem:[%s4233 + $0xa0] sm:$0xff]
                  %4276 = vst [vmem:[%s4234 + $0x140] sm:$0xff] %v4275
                  %v4277 = vld [vmem:[%s4233 + $0xa8] sm:$0xff]
                  %4278 = vst [vmem:[%s4234 + $0x150] sm:$0xff] %v4277
                  %v4279 = vld [vmem:[%s4233 + $0xb0] sm:$0xff]
                  %4280 = vst [vmem:[%s4234 + $0x160] sm:$0xff] %v4279
                  %v4281 = vld [vmem:[%s4233 + $0xb8] sm:$0xff]
                  %4282 = vst [vmem:[%s4234 + $0x170] sm:$0xff] %v4281
                  %v4283 = vld [vmem:[%s4233 + $0xc0] sm:$0xff]
                  %4284 = vst [vmem:[%s4234 + $0x180] sm:$0xff] %v4283
                  %v4285 = vld [vmem:[%s4233 + $0xc8] sm:$0xff]
                  %4286 = vst [vmem:[%s4234 + $0x190] sm:$0xff] %v4285
                  %v4287 = vld [vmem:[%s4233 + $0xd0] sm:$0xff]
                  %4288 = vst [vmem:[%s4234 + $0x1a0] sm:$0xff] %v4287
                  %v4289 = vld [vmem:[%s4233 + $0xd8] sm:$0xff]
                  %4290 = vst [vmem:[%s4234 + $0x1b0] sm:$0xff] %v4289
                  %v4291 = vld [vmem:[%s4233 + $0xe0] sm:$0xff]
                  %4292 = vst [vmem:[%s4234 + $0x1c0] sm:$0xff] %v4291
                  %v4293 = vld [vmem:[%s4233 + $0xe8] sm:$0xff]
                  %4294 = vst [vmem:[%s4234 + $0x1d0] sm:$0xff] %v4293
                  %v4295 = vld [vmem:[%s4233 + $0xf0] sm:$0xff]
                  %4296 = vst [vmem:[%s4234 + $0x1e0] sm:$0xff] %v4295
                  %v4297 = vld [vmem:[%s4233 + $0xf8] sm:$0xff]
                  %4298 = vst [vmem:[%s4234 + $0x1f0] sm:$0xff] %v4297
                $region114: #{gn_act_dwconv2d.1} parent=108 // loop_footer
                  %s4232 = sadd.s32 1, %s4228
                $region115: #{gn_act_dwconv2d.1} parent=108 // loop_footer_branch
                  %4227 = sbr.rel target = $region111
                $region116: #{gn_act_dwconv2d.1} parent=108 // loop_exit
                  _
              $region109: #{gn_act_dwconv2d.1} parent=93 // pred_fallthru
                _
              // Predicated region
              $region117: #{gn_act_dwconv2d.1} parent=93 // pred_check
                _
              $region118: #{gn_act_dwconv2d.1} parent=93 // pred_check_branch
                %4300 = sbr.rel target = $region120
              $region119: #{gn_act_dwconv2d.1} parent=93 // pred_region
                _
              $region120: #{gn_act_dwconv2d.1} parent=93 // pred_fallthru
                _
            $region94: #{gn_act_dwconv2d.1} parent=89 // pred_fallthru
              _
            // Predicated region
            $region95: #{gn_act_dwconv2d.1} parent=89 // pred_check
              _
            $region96: #{gn_act_dwconv2d.1} parent=89 // pred_check_branch
              %4150 = sbr.rel target = $region98
            $region97: #{gn_act_dwconv2d.1} parent=89 // pred_region
              %s4152 = ssub.s32 256, 1
              loop: start=0, step=1, limit=1
              $region99: #{gn_act_dwconv2d.1} parent=97 // loop_pre_header
                _
              $region100: #{gn_act_dwconv2d.1} parent=97 // loop_header
                %s4154 = sphi 0, %s4158
                %p4155 = scmp.ge.s32.totalorder %s4154, 1
                %s4159 = sphi %s4139, %s4139
                %s4160 = sphi %s4144, %s4144
              $region101: #{gn_act_dwconv2d.1} parent=97 // loop_header_branch
                %4157 = sbr.rel (%p4155) target = $region105
              $region102: #{gn_act_dwconv2d.1} parent=97 // loop_body
                %v4161 = vld [vmem:[%s4159] sm:%s4152]
                %4162 = vst [vmem:[%s4160] sm:%s4152] %v4161
                %v4163 = vld [vmem:[%s4159 + $0x8] sm:%s4152]
                %4164 = vst [vmem:[%s4160 + $0x10] sm:%s4152] %v4163
                %v4165 = vld [vmem:[%s4159 + $0x10] sm:%s4152]
                %4166 = vst [vmem:[%s4160 + $0x20] sm:%s4152] %v4165
                %v4167 = vld [vmem:[%s4159 + $0x18] sm:%s4152]
                %4168 = vst [vmem:[%s4160 + $0x30] sm:%s4152] %v4167
                %v4169 = vld [vmem:[%s4159 + $0x20] sm:%s4152]
                %4170 = vst [vmem:[%s4160 + $0x40] sm:%s4152] %v4169
                %v4171 = vld [vmem:[%s4159 + $0x28] sm:%s4152]
                %4172 = vst [vmem:[%s4160 + $0x50] sm:%s4152] %v4171
                %v4173 = vld [vmem:[%s4159 + $0x30] sm:%s4152]
                %4174 = vst [vmem:[%s4160 + $0x60] sm:%s4152] %v4173
                %v4175 = vld [vmem:[%s4159 + $0x38] sm:%s4152]
                %4176 = vst [vmem:[%s4160 + $0x70] sm:%s4152] %v4175
                %v4177 = vld [vmem:[%s4159 + $0x40] sm:%s4152]
                %4178 = vst [vmem:[%s4160 + $0x80] sm:%s4152] %v4177
                %v4179 = vld [vmem:[%s4159 + $0x48] sm:%s4152]
                %4180 = vst [vmem:[%s4160 + $0x90] sm:%s4152] %v4179
                %v4181 = vld [vmem:[%s4159 + $0x50] sm:%s4152]
                %4182 = vst [vmem:[%s4160 + $0xa0] sm:%s4152] %v4181
                %v4183 = vld [vmem:[%s4159 + $0x58] sm:%s4152]
                %4184 = vst [vmem:[%s4160 + $0xb0] sm:%s4152] %v4183
                %v4185 = vld [vmem:[%s4159 + $0x60] sm:%s4152]
                %4186 = vst [vmem:[%s4160 + $0xc0] sm:%s4152] %v4185
                %v4187 = vld [vmem:[%s4159 + $0x68] sm:%s4152]
                %4188 = vst [vmem:[%s4160 + $0xd0] sm:%s4152] %v4187
                %v4189 = vld [vmem:[%s4159 + $0x70] sm:%s4152]
                %4190 = vst [vmem:[%s4160 + $0xe0] sm:%s4152] %v4189
                %v4191 = vld [vmem:[%s4159 + $0x78] sm:%s4152]
                %4192 = vst [vmem:[%s4160 + $0xf0] sm:%s4152] %v4191
                %v4193 = vld [vmem:[%s4159 + $0x80] sm:%s4152]
                %4194 = vst [vmem:[%s4160 + $0x100] sm:%s4152] %v4193
                %v4195 = vld [vmem:[%s4159 + $0x88] sm:%s4152]
                %4196 = vst [vmem:[%s4160 + $0x110] sm:%s4152] %v4195
                %v4197 = vld [vmem:[%s4159 + $0x90] sm:%s4152]
                %4198 = vst [vmem:[%s4160 + $0x120] sm:%s4152] %v4197
                %v4199 = vld [vmem:[%s4159 + $0x98] sm:%s4152]
                %4200 = vst [vmem:[%s4160 + $0x130] sm:%s4152] %v4199
                %v4201 = vld [vmem:[%s4159 + $0xa0] sm:%s4152]
                %4202 = vst [vmem:[%s4160 + $0x140] sm:%s4152] %v4201
                %v4203 = vld [vmem:[%s4159 + $0xa8] sm:%s4152]
                %4204 = vst [vmem:[%s4160 + $0x150] sm:%s4152] %v4203
                %v4205 = vld [vmem:[%s4159 + $0xb0] sm:%s4152]
                %4206 = vst [vmem:[%s4160 + $0x160] sm:%s4152] %v4205
                %v4207 = vld [vmem:[%s4159 + $0xb8] sm:%s4152]
                %4208 = vst [vmem:[%s4160 + $0x170] sm:%s4152] %v4207
                %v4209 = vld [vmem:[%s4159 + $0xc0] sm:%s4152]
                %4210 = vst [vmem:[%s4160 + $0x180] sm:%s4152] %v4209
                %v4211 = vld [vmem:[%s4159 + $0xc8] sm:%s4152]
                %4212 = vst [vmem:[%s4160 + $0x190] sm:%s4152] %v4211
                %v4213 = vld [vmem:[%s4159 + $0xd0] sm:%s4152]
                %4214 = vst [vmem:[%s4160 + $0x1a0] sm:%s4152] %v4213
                %v4215 = vld [vmem:[%s4159 + $0xd8] sm:%s4152]
                %4216 = vst [vmem:[%s4160 + $0x1b0] sm:%s4152] %v4215
                %v4217 = vld [vmem:[%s4159 + $0xe0] sm:%s4152]
                %4218 = vst [vmem:[%s4160 + $0x1c0] sm:%s4152] %v4217
                %v4219 = vld [vmem:[%s4159 + $0xe8] sm:%s4152]
                %4220 = vst [vmem:[%s4160 + $0x1d0] sm:%s4152] %v4219
                %v4221 = vld [vmem:[%s4159 + $0xf0] sm:%s4152]
                %4222 = vst [vmem:[%s4160 + $0x1e0] sm:%s4152] %v4221
                %v4223 = vld [vmem:[%s4159 + $0xf8] sm:%s4152]
                %4224 = vst [vmem:[%s4160 + $0x1f0] sm:%s4152] %v4223
              $region103: #{gn_act_dwconv2d.1} parent=97 // loop_footer
                %s4158 = sadd.s32 1, %s4154
              $region104: #{gn_act_dwconv2d.1} parent=97 // loop_footer_branch
                %4153 = sbr.rel target = $region100
              $region105: #{gn_act_dwconv2d.1} parent=97 // loop_exit
                _
            $region98: #{gn_act_dwconv2d.1} parent=89 // pred_fallthru
              _
          $region90: #{gn_act_dwconv2d.1} parent=85 // pred_fallthru
            _
          %4301 = vnop
        $region86: #{gn_act_dwconv2d.1} parent=77 // pred_fallthru
          _
      $region78: #{gn_act_dwconv2d.1} parent=5 // pred_fallthru
        _
      %p4302 = scmp.le.s32.totalorder 2, %s12
      // Predicated region
      $region121: #{gn_act_dwconv2d.1} parent=5 // pred_check
        %p4303 = pneg %p4302
      $region122: #{gn_act_dwconv2d.1} parent=5 // pred_check_branch
        %4305 = sbr.rel (%p4303) target = $region124
      $region123: #{gn_act_dwconv2d.1} parent=5 // pred_region
        %s4306 = ssub.s32 %s12, 2
        // Predicated region
        $region125: #{gn_act_dwconv2d.1} parent=123 // pred_check
          %p4307 = pneg %p172
        $region126: #{gn_act_dwconv2d.1} parent=123 // pred_check_branch
          %4309 = sbr.rel (%p4307) target = $region128
        $region127: #{gn_act_dwconv2d.1} parent=123 // pred_region
          %s4310 = sand.u32 %s157, 1
          %s4311 = sand.u32 %s157, 1
          %s4312 = smul.addr %s4311, 256
          %s4313 = scalar_lea.vmem [#allocation6], %s4312
        $region128: #{gn_act_dwconv2d.1} parent=123 // pred_fallthru
          _
      $region124: #{gn_act_dwconv2d.1} parent=5 // pred_fallthru
        _
    $region6: #{gn_act_dwconv2d.1} parent=1 // loop_footer
      %s16 = sadd.s32 1, %s12
    $region7: #{gn_act_dwconv2d.1} parent=1 // loop_footer_branch
      %11 = sbr.rel target = $region3
    $region8: #{gn_act_dwconv2d.1} parent=1 // loop_exit
      _

</llo_original>
